<compile_context>
chip_gen: v6e
topology: v6e:2x2x1
jax: 0.10.0
libtpu: 0.0.40
codegen_flags: <defaults>
</compile_context>

<pallas_src>
import jax
import jax.numpy as jnp
from jax.experimental import pallas as pl
from jax.experimental.pallas import tpu as pltpu

LEAKY_SLOPE = 0.01  # torch.nn.LeakyReLU() default negative_slope


def _round_up(x, m):
    return ((x + m - 1) // m) * m


def _hca_kernel(x_ref, wq_ref, wr_ref, o_ref):
    # x_ref : [W, tn, D]  one node-tile of every window (bf16, VMEM)
    # wq_ref: [D, D]      (bf16)
    # wr_ref: [1, D]      (f32; weight_r pre-transposed to a row in the wrapper)
    # o_ref : [tn, D]     (bf16)
    W = x_ref.shape[0]

    wq = wq_ref[...]
    wr = wr_ref[...]

    # Pass 1: per-window attention scores.  bf16 operands feed the MXU
    # directly; accumulation and all VPU math stay in float32.
    e = []
    for w in range(W):
        h = jnp.dot(x_ref[w], wq, preferred_element_type=jnp.float32)   # [tn, D] f32
        h = jnp.where(h > 0, h, LEAKY_SLOPE * h)                        # LeakyReLU (VPU)
        # score e_w = sum_d h[., d] * wr[d]: VPU broadcast-multiply + lane reduce
        # (avoids a [., D] x [D, 1] single-column MXU matmul).
        e.append(jnp.sum(h * wr, axis=-1, keepdims=True))               # [tn, 1] f32

    # Numerically-stable softmax over the window axis (elementwise across the
    # W per-window score columns; no cross-lane data movement needed).
    m = e[0]
    for w in range(1, W):
        m = jnp.maximum(m, e[w])
    p = [jnp.exp(e[w] - m) for w in range(W)]
    denom = p[0]
    for w in range(1, W):
        denom = denom + p[w]

    # Pass 2: weighted sum of windows.  f32 accumulate, upcasting one window
    # tile at a time; normalize once after the W-sum with an exact reciprocal.
    acc = p[0] * x_ref[0].astype(jnp.float32)
    for w in range(1, W):
        acc = acc + p[w] * x_ref[w].astype(jnp.float32)

    o_ref[...] = (acc * pl.reciprocal(denom, approx=False)).astype(o_ref.dtype)


def _choose_tile_n(n, w, d, x_itemsize, out_itemsize,
                   vmem_budget_bytes=24 * 1024 * 1024, max_tile=1024):
    """Largest node tile whose VMEM footprint fits the budget.

    Per-row footprint: double-buffered x block + double-buffered out block +
    conservative in-kernel f32 temporaries (per-window h worst case, acc,
    upcast window tile).  Budget is kept below the 32 MiB scoped VMEM limit we
    request, which itself is safe on v5e/v6e (128 MiB) and v7x (64 MiB).
    """
    bytes_per_row = (2 * w * d * x_itemsize      # x block, double-buffered
                     + 2 * d * out_itemsize      # out block, double-buffered
                     + (w + 2) * d * 4)          # f32 temporaries (worst case)
    tile = min(max(vmem_budget_bytes // bytes_per_row, 8), max_tile)
    # Keep at least 2 grid steps when N allows it so both v7x TensorCores get work.
    if n > 256:
        tile = min(tile, _round_up((n + 1) // 2, 128))
    # Sublane-friendly always; lane-friendly (multiple of 128) when large.
    tile = (tile // 128) * 128 if tile >= 128 else _round_up(tile, 8)
    return max(tile, 8)


def hca_forward(x_stacked, weight_q, weight_r, *, tile_n=None,
                compute_dtype=jnp.bfloat16):
    """x_stacked: [W, N, D]; weight_q: [D, D]; weight_r: [D, 1] -> [N, D].

    Inputs are cast to `compute_dtype` (bfloat16 by default) before the kernel
    to halve HBM traffic; all in-kernel accumulation is float32.  The result is
    returned in `compute_dtype`.
    """
    W, N, D = x_stacked.shape

    x = x_stacked.astype(compute_dtype)
    wq = weight_q.astype(compute_dtype)
    wr_row = weight_r.reshape(1, D).astype(jnp.float32)  # row layout for VPU broadcast

    x_isz = jnp.dtype(compute_dtype).itemsize
    if tile_n is None:
        tile_n = _choose_tile_n(N, W, D, x_isz, x_isz)
    tile_n = min(tile_n, _round_up(N, 8))
    n_pad = _round_up(N, tile_n)
    if n_pad != N:
        # Zero rows are harmless: zero scores -> uniform softmax -> zero output,
        # and the padded rows are sliced off below.
        x = jnp.pad(x, ((0, 0), (0, n_pad - N), (0, 0)))

    cost = pl.CostEstimate(
        flops=2 * W * n_pad * D * D + 6 * W * n_pad * D,
        transcendentals=W * n_pad,
        bytes_accessed=(W * n_pad * D + n_pad * D) * x_isz + D * D * x_isz + D * 4,
    )

    out = pl.pallas_call(
        _hca_kernel,
        out_shape=jax.ShapeDtypeStruct((n_pad, D), compute_dtype),
        grid_spec=pltpu.PrefetchScalarGridSpec(
            num_scalar_prefetch=0,
            grid=(n_pad // tile_n,),
            in_specs=[
                # one node-tile of every window
                pl.BlockSpec((W, tile_n, D), lambda i: (0, i, 0)),
                # small weights: whole arrays, constant index (resident)
                pl.BlockSpec((D, D), lambda i: (0, 0)),
                pl.BlockSpec((1, D), lambda i: (0, 0)),
            ],
            out_specs=pl.BlockSpec((tile_n, D), lambda i: (i, 0)),
        ),
        compiler_params=pltpu.CompilerParams(
            # TODO(synk): on v7x, pltpu.CORE_PARALLEL (or pl.core_map over a
            # tensorcore mesh) on the node axis would guarantee the grid splits
            # across both TensorCores; "parallel" is kept for portability.
            dimension_semantics=("parallel",),
            vmem_limit_bytes=32 * 1024 * 1024,
        ),
        cost_estimate=cost,
    )(x, wq, wr_row)

    return out[:N] if n_pad != N else out


def init_glorot(key, shape):
    fan_in, fan_out = shape[0], shape[1]
    limit = jnp.sqrt(6.0 / (fan_in + fan_out))
    return jax.random.uniform(key, shape, jnp.float32, -limit, limit)


def hca_reference(x_stacked, weight_q, weight_r):
    """Pure-JAX reference matching the PyTorch forward."""
    W = x_stacked.shape[0]
    ce = []
    for w in range(W):
        h = x_stacked[w] @ weight_q
        h = jnp.where(h > 0, h, LEAKY_SLOPE * h)
        ce.append(h @ weight_r)                       # [N, 1]
    e = jnp.concatenate(ce, axis=-1)                  # [N, W]
    a = jax.nn.softmax(e, axis=-1)
    return sum(x_stacked[w] * a[:, w:w + 1] for w in range(W))


if __name__ == "__main__":
    # Small, deterministic configuration.
    input_dim = 32   # D
    nb_window = 4    # W
    n_nodes = 300    # N (not a tile multiple -> exercises padding + a 2-step grid)

    key = jax.random.PRNGKey(0)
    k_x, k_q, k_r = jax.random.split(key, 3)

    # inputs: nb_window tensors of shape [N, D], stacked -> [W, N, D]
    x_stacked = jax.random.normal(
        k_x, (nb_window, n_nodes, input_dim), jnp.float32)
    weight_q = init_glorot(k_q, (input_dim, input_dim))
    weight_r = init_glorot(k_r, (input_dim, 1))

    out = hca_forward(x_stacked, weight_q, weight_r)
    out = jax.block_until_ready(out)

    assert out.shape == (n_nodes, input_dim)
    assert out.dtype == jnp.bfloat16

    # Reference computed on bf16-quantized inputs (the kernel's compute dtype)
    # with all math in f32: this isolates real semantic bugs from the expected
    # bf16 input/output rounding.  Dominant remaining error is the final bf16
    # store (~1e-2 abs for |out| ~ 4).
    xq = x_stacked.astype(jnp.bfloat16).astype(jnp.float32)
    wqq = weight_q.astype(jnp.bfloat16).astype(jnp.float32)
    ref = hca_reference(xq, wqq, weight_r)
    err = float(jnp.max(jnp.abs(out.astype(jnp.float32) - ref)))
    assert err < 5e-2, f"mismatch vs reference, max abs err = {err}"

    print("KERNEL_OK")
</pallas_src>

<mosaic_0001>
module attributes {stable_mosaic.version = 11 : i64} {
  func.func @_hca_kernel(%arg0: i32, %arg1: memref<4x256x32xbf16, #tpu.memory_space<vmem>>, %arg2: memref<32x32xbf16, #tpu.memory_space<vmem>>, %arg3: memref<1x32xf32, #tpu.memory_space<vmem>>, %arg4: memref<256x32xbf16, #tpu.memory_space<vmem>>) attributes {dimension_semantics = [#tpu.dimension_semantics<parallel>], iteration_bounds = array<i64: 2>, scalar_prefetch = 0 : i64, scratch_operands = 0 : i64, tpu.core_type = #tpu.core_type<tc>, window_params = [{transform_indices = @transform_0, window_bounds = array<i64: 4, 256, 32>}, {pipeline_mode = #tpu.pipeline_mode<synchronous>, transform_indices = @transform_1, window_bounds = array<i64: 32, 32>}, {pipeline_mode = #tpu.pipeline_mode<synchronous>, transform_indices = @transform_2, window_bounds = array<i64: 1, 32>}, {transform_indices = @transform_3, window_bounds = array<i64: 256, 32>}]} {
    %c0 = arith.constant 0 : index
    %c0_0 = arith.constant 0 : index
    %0 = vector.load %arg2[%c0, %c0_0] : memref<32x32xbf16, #tpu.memory_space<vmem>>, vector<32x32xbf16>
    %c0_1 = arith.constant 0 : index
    %c0_2 = arith.constant 0 : index
    %1 = vector.load %arg3[%c0_1, %c0_2] : memref<1x32xf32, #tpu.memory_space<vmem>>, vector<1x32xf32>
    %c0_3 = arith.constant 0 : index
    %c0_4 = arith.constant 0 : index
    %c0_5 = arith.constant 0 : index
    %2 = vector.load %arg1[%c0_3, %c0_4, %c0_5] : memref<4x256x32xbf16, #tpu.memory_space<vmem>>, vector<1x256x32xbf16>
    %3 = vector.shape_cast %2 : vector<1x256x32xbf16> to vector<256x32xbf16>
    %cst = arith.constant dense<0.000000e+00> : vector<256x32xf32>
    %4 = tpu.matmul %3, %0, %cst {dimension_numbers = #tpu.dot_dimension_numbers<[1], [0], [0], [1], [0, 0, 1, 1], [], []>} : vector<256x32xbf16>, vector<32x32xbf16>, vector<256x32xf32> -> vector<256x32xf32>
    %cst_6 = arith.constant 0.000000e+00 : f32
    %5 = vector.broadcast %cst_6 : f32 to vector<256x32xf32>
    %6 = arith.cmpf ogt, %4, %5 : vector<256x32xf32>
    %cst_7 = arith.constant 0.00999999977 : f32
    %7 = vector.broadcast %cst_7 : f32 to vector<256x32xf32>
    %8 = arith.mulf %7, %4 : vector<256x32xf32>
    %9 = arith.select %6, %4, %8 : vector<256x32xi1>, vector<256x32xf32>
    %10 = vector.broadcast %1 : vector<1x32xf32> to vector<256x32xf32>
    %11 = arith.mulf %9, %10 : vector<256x32xf32>
    %cst_8 = arith.constant dense<0.000000e+00> : vector<256xf32>
    %12 = vector.multi_reduction <add>, %11, %cst_8 [1] : vector<256x32xf32> to vector<256xf32>
    %13 = vector.shape_cast %12 : vector<256xf32> to vector<256x1xf32>
    %c1 = arith.constant 1 : index
    %c0_9 = arith.constant 0 : index
    %c0_10 = arith.constant 0 : index
    %14 = vector.load %arg1[%c1, %c0_9, %c0_10] : memref<4x256x32xbf16, #tpu.memory_space<vmem>>, vector<1x256x32xbf16>
    %15 = vector.shape_cast %14 : vector<1x256x32xbf16> to vector<256x32xbf16>
    %cst_11 = arith.constant dense<0.000000e+00> : vector<256x32xf32>
    %16 = tpu.matmul %15, %0, %cst_11 {dimension_numbers = #tpu.dot_dimension_numbers<[1], [0], [0], [1], [0, 0, 1, 1], [], []>} : vector<256x32xbf16>, vector<32x32xbf16>, vector<256x32xf32> -> vector<256x32xf32>
    %cst_12 = arith.constant 0.000000e+00 : f32
    %17 = vector.broadcast %cst_12 : f32 to vector<256x32xf32>
    %18 = arith.cmpf ogt, %16, %17 : vector<256x32xf32>
    %cst_13 = arith.constant 0.00999999977 : f32
    %19 = vector.broadcast %cst_13 : f32 to vector<256x32xf32>
    %20 = arith.mulf %19, %16 : vector<256x32xf32>
    %21 = arith.select %18, %16, %20 : vector<256x32xi1>, vector<256x32xf32>
    %22 = vector.broadcast %1 : vector<1x32xf32> to vector<256x32xf32>
    %23 = arith.mulf %21, %22 : vector<256x32xf32>
    %cst_14 = arith.constant dense<0.000000e+00> : vector<256xf32>
    %24 = vector.multi_reduction <add>, %23, %cst_14 [1] : vector<256x32xf32> to vector<256xf32>
    %25 = vector.shape_cast %24 : vector<256xf32> to vector<256x1xf32>
    %c2 = arith.constant 2 : index
    %c0_15 = arith.constant 0 : index
    %c0_16 = arith.constant 0 : index
    %26 = vector.load %arg1[%c2, %c0_15, %c0_16] : memref<4x256x32xbf16, #tpu.memory_space<vmem>>, vector<1x256x32xbf16>
    %27 = vector.shape_cast %26 : vector<1x256x32xbf16> to vector<256x32xbf16>
    %cst_17 = arith.constant dense<0.000000e+00> : vector<256x32xf32>
    %28 = tpu.matmul %27, %0, %cst_17 {dimension_numbers = #tpu.dot_dimension_numbers<[1], [0], [0], [1], [0, 0, 1, 1], [], []>} : vector<256x32xbf16>, vector<32x32xbf16>, vector<256x32xf32> -> vector<256x32xf32>
    %cst_18 = arith.constant 0.000000e+00 : f32
    %29 = vector.broadcast %cst_18 : f32 to vector<256x32xf32>
    %30 = arith.cmpf ogt, %28, %29 : vector<256x32xf32>
    %cst_19 = arith.constant 0.00999999977 : f32
    %31 = vector.broadcast %cst_19 : f32 to vector<256x32xf32>
    %32 = arith.mulf %31, %28 : vector<256x32xf32>
    %33 = arith.select %30, %28, %32 : vector<256x32xi1>, vector<256x32xf32>
    %34 = vector.broadcast %1 : vector<1x32xf32> to vector<256x32xf32>
    %35 = arith.mulf %33, %34 : vector<256x32xf32>
    %cst_20 = arith.constant dense<0.000000e+00> : vector<256xf32>
    %36 = vector.multi_reduction <add>, %35, %cst_20 [1] : vector<256x32xf32> to vector<256xf32>
    %37 = vector.shape_cast %36 : vector<256xf32> to vector<256x1xf32>
    %c3 = arith.constant 3 : index
    %c0_21 = arith.constant 0 : index
    %c0_22 = arith.constant 0 : index
    %38 = vector.load %arg1[%c3, %c0_21, %c0_22] : memref<4x256x32xbf16, #tpu.memory_space<vmem>>, vector<1x256x32xbf16>
    %39 = vector.shape_cast %38 : vector<1x256x32xbf16> to vector<256x32xbf16>
    %cst_23 = arith.constant dense<0.000000e+00> : vector<256x32xf32>
    %40 = tpu.matmul %39, %0, %cst_23 {dimension_numbers = #tpu.dot_dimension_numbers<[1], [0], [0], [1], [0, 0, 1, 1], [], []>} : vector<256x32xbf16>, vector<32x32xbf16>, vector<256x32xf32> -> vector<256x32xf32>
    %cst_24 = arith.constant 0.000000e+00 : f32
    %41 = vector.broadcast %cst_24 : f32 to vector<256x32xf32>
    %42 = arith.cmpf ogt, %40, %41 : vector<256x32xf32>
    %cst_25 = arith.constant 0.00999999977 : f32
    %43 = vector.broadcast %cst_25 : f32 to vector<256x32xf32>
    %44 = arith.mulf %43, %40 : vector<256x32xf32>
    %45 = arith.select %42, %40, %44 : vector<256x32xi1>, vector<256x32xf32>
    %46 = vector.broadcast %1 : vector<1x32xf32> to vector<256x32xf32>
    %47 = arith.mulf %45, %46 : vector<256x32xf32>
    %cst_26 = arith.constant dense<0.000000e+00> : vector<256xf32>
    %48 = vector.multi_reduction <add>, %47, %cst_26 [1] : vector<256x32xf32> to vector<256xf32>
    %49 = vector.shape_cast %48 : vector<256xf32> to vector<256x1xf32>
    %50 = arith.maximumf %13, %25 : vector<256x1xf32>
    %51 = arith.maximumf %50, %37 : vector<256x1xf32>
    %52 = arith.maximumf %51, %49 : vector<256x1xf32>
    %53 = arith.subf %13, %52 : vector<256x1xf32>
    %54 = math.exp %53 : vector<256x1xf32>
    %55 = arith.subf %25, %52 : vector<256x1xf32>
    %56 = math.exp %55 : vector<256x1xf32>
    %57 = arith.subf %37, %52 : vector<256x1xf32>
    %58 = math.exp %57 : vector<256x1xf32>
    %59 = arith.subf %49, %52 : vector<256x1xf32>
    %60 = math.exp %59 : vector<256x1xf32>
    %61 = arith.addf %54, %56 : vector<256x1xf32>
    %62 = arith.addf %61, %58 : vector<256x1xf32>
    %63 = arith.addf %62, %60 : vector<256x1xf32>
    %c0_27 = arith.constant 0 : index
    %c0_28 = arith.constant 0 : index
    %c0_29 = arith.constant 0 : index
    %64 = vector.load %arg1[%c0_27, %c0_28, %c0_29] : memref<4x256x32xbf16, #tpu.memory_space<vmem>>, vector<1x256x32xbf16>
    %65 = vector.shape_cast %64 : vector<1x256x32xbf16> to vector<256x32xbf16>
    %66 = arith.extf %65 : vector<256x32xbf16> to vector<256x32xf32>
    %67 = vector.broadcast %54 : vector<256x1xf32> to vector<256x32xf32>
    %68 = arith.mulf %67, %66 : vector<256x32xf32>
    %c1_30 = arith.constant 1 : index
    %c0_31 = arith.constant 0 : index
    %c0_32 = arith.constant 0 : index
    %69 = vector.load %arg1[%c1_30, %c0_31, %c0_32] : memref<4x256x32xbf16, #tpu.memory_space<vmem>>, vector<1x256x32xbf16>
    %70 = vector.shape_cast %69 : vector<1x256x32xbf16> to vector<256x32xbf16>
    %71 = arith.extf %70 : vector<256x32xbf16> to vector<256x32xf32>
    %72 = vector.broadcast %56 : vector<256x1xf32> to vector<256x32xf32>
    %73 = arith.mulf %72, %71 : vector<256x32xf32>
    %74 = arith.addf %68, %73 : vector<256x32xf32>
    %c2_33 = arith.constant 2 : index
    %c0_34 = arith.constant 0 : index
    %c0_35 = arith.constant 0 : index
    %75 = vector.load %arg1[%c2_33, %c0_34, %c0_35] : memref<4x256x32xbf16, #tpu.memory_space<vmem>>, vector<1x256x32xbf16>
    %76 = vector.shape_cast %75 : vector<1x256x32xbf16> to vector<256x32xbf16>
    %77 = arith.extf %76 : vector<256x32xbf16> to vector<256x32xf32>
    %78 = vector.broadcast %58 : vector<256x1xf32> to vector<256x32xf32>
    %79 = arith.mulf %78, %77 : vector<256x32xf32>
    %80 = arith.addf %74, %79 : vector<256x32xf32>
    %c3_36 = arith.constant 3 : index
    %c0_37 = arith.constant 0 : index
    %c0_38 = arith.constant 0 : index
    %81 = vector.load %arg1[%c3_36, %c0_37, %c0_38] : memref<4x256x32xbf16, #tpu.memory_space<vmem>>, vector<1x256x32xbf16>
    %82 = vector.shape_cast %81 : vector<1x256x32xbf16> to vector<256x32xbf16>
    %83 = arith.extf %82 : vector<256x32xbf16> to vector<256x32xf32>
    %84 = vector.broadcast %60 : vector<256x1xf32> to vector<256x32xf32>
    %85 = arith.mulf %84, %83 : vector<256x32xf32>
    %86 = arith.addf %80, %85 : vector<256x32xf32>
    %87 = tpu.reciprocal %63 : vector<256x1xf32> -> vector<256x1xf32>
    %88 = vector.broadcast %87 : vector<256x1xf32> to vector<256x32xf32>
    %89 = arith.mulf %86, %88 : vector<256x32xf32>
    %90 = arith.truncf %89 : vector<256x32xf32> to vector<256x32xbf16>
    %c0_39 = arith.constant 0 : index
    %c0_40 = arith.constant 0 : index
    %91 = vector.load %arg4[%c0_39, %c0_40] : memref<256x32xbf16, #tpu.memory_space<vmem>>, vector<256x32xbf16>
    tpu.vector_store %arg4[%c0_39, %c0_40], %90 {strides = array<i32>} : memref<256x32xbf16, #tpu.memory_space<vmem>>, vector<256x32xbf16>,
    return
  }
  func.func @transform_0(%arg0: i32) -> (i32, i32, i32) {
    %c0_i32 = arith.constant 0 : i32
    %c0_i32_0 = arith.constant 0 : i32
    %c0_i32_1 = arith.constant 0 : i32
    return %c0_i32, %arg0, %c0_i32_0 : i32, i32, i32
  }
  func.func @transform_1(%arg0: i32) -> (i32, i32) {
    %c0_i32 = arith.constant 0 : i32
    %c0_i32_0 = arith.constant 0 : i32
    %c0_i32_1 = arith.constant 0 : i32
    return %c0_i32, %c0_i32_0 : i32, i32
  }
  func.func @transform_2(%arg0: i32) -> (i32, i32) {
    %c0_i32 = arith.constant 0 : i32
    %c0_i32_0 = arith.constant 0 : i32
    %c0_i32_1 = arith.constant 0 : i32
    return %c0_i32, %c0_i32_0 : i32, i32
  }
  func.func @transform_3(%arg0: i32) -> (i32, i32) {
    %c0_i32 = arith.constant 0 : i32
    %c0_i32_0 = arith.constant 0 : i32
    return %arg0, %c0_i32 : i32, i32
  }
}

</mosaic_0001>

<llo_original>
// kernel: tpu_custom_call.1
$region0: #{tpu_custom_call.1}
  #allocation0 [shape = 'u32[]', space=smem, size = 0x4, offset = 0x4, fixed_abs, tag = 'smem constant byte address 0x4 - core index']
  #allocation1 [shape = 'u32[144,128]{1,0:T(1,128)}', space=vmem, size = 0x12000, scoped, tag = 'internal scratch']
  %s0 = inlined_call_operand.vmem [shape: bf16[4,512,32], index: 0, kind: input, shape index: {}]
  %s1 = inlined_call_operand.vmem [shape: bf16[32,32], index: 1, kind: input, shape index: {}]
  %s2 = inlined_call_operand.vmem [shape: f32[1,32], index: 2, kind: input, shape index: {}]
  %s3 = inlined_call_operand.vmem [shape: bf16[512,32], index: 3, kind: output, shape index: {}]
  %s4 = sld [smem:[#allocation0]]
  $region86: #{tpu_custom_call.1} parent=0
    _
  %s6 = ssub.s32 1, %s4
  %s7 = scalar_select 0, %s6, %s4
  $region1: #{tpu_custom_call.1} parent=0
    #allocation2 [shape = 'u8[524288]{0}', space=vmem, size = 0x80000, scoped, tag = 'input window, operand 0']
    loop: start=0, step=1, limit=4
    $region2: #{tpu_custom_call.1} parent=1 // loop_pre_header
      _
    $region3: #{tpu_custom_call.1} parent=1 // loop_header
      %s9 = sphi 0, %s13
      %p10 = scmp.ge.s32.totalorder %s9, 4
      %s19 = sphi 0, %s21
      %s22 = sphi 0, %s19
      %s23 = sphi 0, %s22
      %s39 = sphi 0, %s23
      %s43 = sphi 0, %s43
      %s45 = sphi 0, %s43
      %s46 = sphi 0, %s45
      %s60 = sphi 0, %s46
      %s64 = sphi 0, %s64
      %s66 = sphi 0, %s64
      %s67 = sphi 0, %s66
      %s81 = sphi 0, %s67
      %s87 = sphi 0, %s89
      %s90 = sphi 0, %s87
      %s91 = sphi 0, %s90
      %s107 = sphi 0, %s91
    $region4: #{tpu_custom_call.1} parent=1 // loop_header_branch
      %12 = sbr.rel (%p10) target = $region8
    $region5: #{tpu_custom_call.1} parent=1 // loop_body
      %s14 = ssub.s32 %s9, 1
      %s15 = ssub.s32 %s9, 2
      %s16 = sadd.s32 %s9, 1
      %s17 = ssub.s32 %s9, %s16
      %p18 = scmp.eq.s32.totalorder %s17, 0
      %s20 = sadd.s32 %s19, 1
      %s21 = scalar_select %p18, %s19, %s20
      %p24 = pneg %p18
      %p25 = scmp.eq.s32.totalorder %s9, 1
      %p26 = por %p24, %p25
      %p27 = scmp.ne.s32.totalorder %s19, %s22
      %p28 = scmp.eq.s32.totalorder %s9, 0
      %p29 = por %p27, %p28
      %p30 = scmp.ne.s32.totalorder %s19, %s22
      %p31 = scmp.eq.s32.totalorder %s14, 1
      %p32 = por %p30, %p31
      %p33 = scmp.ne.s32.totalorder %s22, %s23
      %p34 = scmp.eq.s32.totalorder %s14, 0
      %p35 = por %p33, %p34
      %p36 = scmp.ne.s32.totalorder %s22, %s23
      %p37 = scmp.eq.s32.totalorder %s15, 1
      %p38 = por %p36, %p37
      %p40 = scmp.ne.s32.totalorder %s23, %s39
      %p41 = scmp.eq.s32.totalorder %s15, 0
      %p42 = por %p40, %p41
      %s44 = sadd.s32 %s43, 1
      %p47 = scmp.eq.s32.totalorder %s9, 1
      %p48 = scmp.ne.s32.totalorder %s43, %s45
      %p49 = scmp.eq.s32.totalorder %s9, 0
      %p50 = por %p48, %p49
      %p51 = scmp.ne.s32.totalorder %s43, %s45
      %p52 = scmp.eq.s32.totalorder %s14, 1
      %p53 = por %p51, %p52
      %p54 = scmp.ne.s32.totalorder %s45, %s46
      %p55 = scmp.eq.s32.totalorder %s14, 0
      %p56 = por %p54, %p55
      %p57 = scmp.ne.s32.totalorder %s45, %s46
      %p58 = scmp.eq.s32.totalorder %s15, 1
      %p59 = por %p57, %p58
      %p61 = scmp.ne.s32.totalorder %s46, %s60
      %p62 = scmp.eq.s32.totalorder %s15, 0
      %p63 = por %p61, %p62
      %s65 = sadd.s32 %s64, 1
      %p68 = scmp.eq.s32.totalorder %s9, 1
      %p69 = scmp.ne.s32.totalorder %s64, %s66
      %p70 = scmp.eq.s32.totalorder %s9, 0
      %p71 = por %p69, %p70
      %p72 = scmp.ne.s32.totalorder %s64, %s66
      %p73 = scmp.eq.s32.totalorder %s14, 1
      %p74 = por %p72, %p73
      %p75 = scmp.ne.s32.totalorder %s66, %s67
      %p76 = scmp.eq.s32.totalorder %s14, 0
      %p77 = por %p75, %p76
      %p78 = scmp.ne.s32.totalorder %s66, %s67
      %p79 = scmp.eq.s32.totalorder %s15, 1
      %p80 = por %p78, %p79
      %p82 = scmp.ne.s32.totalorder %s67, %s81
      %p83 = scmp.eq.s32.totalorder %s15, 0
      %p84 = por %p82, %p83
      %s85 = ssub.s32 %s9, %s16
      %p86 = scmp.eq.s32.totalorder %s85, 0
      %s88 = sadd.s32 %s87, 1
      %s89 = scalar_select %p86, %s87, %s88
      %p92 = pneg %p86
      %p93 = scmp.eq.s32.totalorder %s9, 1
      %p94 = por %p92, %p93
      %p95 = scmp.ne.s32.totalorder %s87, %s90
      %p96 = scmp.eq.s32.totalorder %s9, 0
      %p97 = por %p95, %p96
      %p98 = scmp.ne.s32.totalorder %s87, %s90
      %p99 = scmp.eq.s32.totalorder %s14, 1
      %p100 = por %p98, %p99
      %p101 = scmp.ne.s32.totalorder %s90, %s91
      %p102 = scmp.eq.s32.totalorder %s14, 0
      %p103 = por %p101, %p102
      %p104 = scmp.ne.s32.totalorder %s90, %s91
      %p105 = scmp.eq.s32.totalorder %s15, 1
      %p106 = por %p104, %p105
      %p108 = scmp.ne.s32.totalorder %s91, %s107
      %p109 = scmp.eq.s32.totalorder %s15, 0
      %p110 = por %p108, %p109
      %p111 = scmp.le.s32.totalorder 1, %s9
      %p112 = scmp.lt.s32.totalorder %s9, 3
      %p113 = pnand %p111, %p112
      %p114 = pneg %p113
      // Predicated region
      $region9: #{tpu_custom_call.1} parent=5 // pred_check
        _
      $region10: #{tpu_custom_call.1} parent=5 // pred_check_branch
        %116 = sbr.rel (%p113) target = $region12
      $region11: #{tpu_custom_call.1} parent=5 // pred_region
        %s117 = ssub.s32 %s9, 1
        // Predicated region
        $region13: #{tpu_custom_call.1} parent=11 // pred_check
          %p118 = pneg %p56
        $region14: #{tpu_custom_call.1} parent=11 // pred_check_branch
          %120 = sbr.rel (%p118) target = $region16
        $region15: #{tpu_custom_call.1} parent=11 // pred_region
          _
        $region16: #{tpu_custom_call.1} parent=11 // pred_fallthru
          _
        // Predicated region
        $region17: #{tpu_custom_call.1} parent=11 // pred_check
          %p121 = pneg %p77
        $region18: #{tpu_custom_call.1} parent=11 // pred_check_branch
          %123 = sbr.rel (%p121) target = $region20
        $region19: #{tpu_custom_call.1} parent=11 // pred_region
          _
        $region20: #{tpu_custom_call.1} parent=11 // pred_fallthru
          _
      $region12: #{tpu_custom_call.1} parent=5 // pred_fallthru
        _
      %p124 = scmp.lt.s32.totalorder %s9, 2
      // Predicated region
      $region21: #{tpu_custom_call.1} parent=5 // pred_check
        %p125 = pneg %p124
      $region22: #{tpu_custom_call.1} parent=5 // pred_check_branch
        %127 = sbr.rel (%p125) target = $region24
      $region23: #{tpu_custom_call.1} parent=5 // pred_region
        // Predicated region
        $region25: #{tpu_custom_call.1} parent=23 // pred_check
          %p128 = pneg %p29
        $region26: #{tpu_custom_call.1} parent=23 // pred_check_branch
          %130 = sbr.rel (%p128) target = $region28
        $region27: #{tpu_custom_call.1} parent=23 // pred_region
          %s131 = sand.u32 %s19, 1
          %s132 = sand.u32 %s19, 1
          %s133 = smul.addr %s132, 512
          %s134 = scalar_lea.vmem [#allocation2], %s133
          %s135 = smul.u32 32, %s9
          %s136 = smul.addr %s135, 4
          %s137 = scalar_lea.vmem %s0, %s136
          // Predicated region
          $region29: #{tpu_custom_call.1} parent=27 // pred_check
            _
          $region30: #{tpu_custom_call.1} parent=27 // pred_check_branch
            %139 = sbr.rel (0) target = $region32
          $region31: #{tpu_custom_call.1} parent=27 // pred_region
            // Predicated region
            $region33: #{tpu_custom_call.1} parent=31 // pred_check
              _
            $region34: #{tpu_custom_call.1} parent=31 // pred_check_branch
              %141 = sbr.rel target = $region36
            $region35: #{tpu_custom_call.1} parent=31 // pred_region
              // Predicated region
              $region48: #{tpu_custom_call.1} parent=35 // pred_check
                _
              $region49: #{tpu_custom_call.1} parent=35 // pred_check_branch
                %411 = sbr.rel (0) target = $region51
              $region50: #{tpu_custom_call.1} parent=35 // pred_region
                loop: start=0, step=1, limit=1
                $region52: #{tpu_custom_call.1} parent=50 // loop_pre_header
                  _
                $region53: #{tpu_custom_call.1} parent=50 // loop_header
                  %s413 = sphi 0, %s417
                  %p414 = scmp.ge.s32.totalorder %s413, 1
                  %s418 = sphi %s137, %s137
                  %s419 = sphi %s134, %s134
                $region54: #{tpu_custom_call.1} parent=50 // loop_header_branch
                  %416 = sbr.rel (%p414) target = $region58
                $region55: #{tpu_custom_call.1} parent=50 // loop_body
                  _
                $region56: #{tpu_custom_call.1} parent=50 // loop_footer
                  %s417 = sadd.s32 1, %s413
                $region57: #{tpu_custom_call.1} parent=50 // loop_footer_branch
                  %412 = sbr.rel target = $region53
                $region58: #{tpu_custom_call.1} parent=50 // loop_exit
                  _
                %s421 = ssub.s32 16, 1
                loop: start=0, step=1, limit=1
                $region59: #{tpu_custom_call.1} parent=50 // loop_pre_header
                  _
                $region60: #{tpu_custom_call.1} parent=50 // loop_header
                  %s423 = sphi 0, %s427
                  %p424 = scmp.ge.s32.totalorder %s423, 1
                  %s428 = sphi %s137, %s137
                  %s429 = sphi %s134, %s134
                $region61: #{tpu_custom_call.1} parent=50 // loop_header_branch
                  %426 = sbr.rel (%p424) target = $region65
                $region62: #{tpu_custom_call.1} parent=50 // loop_body
                  %v430 = vld [vmem:[%s428] sm:%s421]
                  %431 = vst [vmem:[%s429] sm:%s421] %v430
                  %v432 = vld [vmem:[%s428 + $0x4] sm:%s421]
                  %433 = vst [vmem:[%s429 + $0x4] sm:%s421] %v432
                  %v434 = vld [vmem:[%s428 + $0x8] sm:%s421]
                  %435 = vst [vmem:[%s429 + $0x8] sm:%s421] %v434
                  %v436 = vld [vmem:[%s428 + $0xc] sm:%s421]
                  %437 = vst [vmem:[%s429 + $0xc] sm:%s421] %v436
                  %v438 = vld [vmem:[%s428 + $0x10] sm:%s421]
                  %439 = vst [vmem:[%s429 + $0x10] sm:%s421] %v438
                  %v440 = vld [vmem:[%s428 + $0x14] sm:%s421]
                  %441 = vst [vmem:[%s429 + $0x14] sm:%s421] %v440
                  %v442 = vld [vmem:[%s428 + $0x18] sm:%s421]
                  %443 = vst [vmem:[%s429 + $0x18] sm:%s421] %v442
                  %v444 = vld [vmem:[%s428 + $0x1c] sm:%s421]
                  %445 = vst [vmem:[%s429 + $0x1c] sm:%s421] %v444
                  %v446 = vld [vmem:[%s428 + $0x20] sm:%s421]
                  %447 = vst [vmem:[%s429 + $0x20] sm:%s421] %v446
                  %v448 = vld [vmem:[%s428 + $0x24] sm:%s421]
                  %449 = vst [vmem:[%s429 + $0x24] sm:%s421] %v448
                  %v450 = vld [vmem:[%s428 + $0x28] sm:%s421]
                  %451 = vst [vmem:[%s429 + $0x28] sm:%s421] %v450
                  %v452 = vld [vmem:[%s428 + $0x2c] sm:%s421]
                  %453 = vst [vmem:[%s429 + $0x2c] sm:%s421] %v452
                  %v454 = vld [vmem:[%s428 + $0x30] sm:%s421]
                  %455 = vst [vmem:[%s429 + $0x30] sm:%s421] %v454
                  %v456 = vld [vmem:[%s428 + $0x34] sm:%s421]
                  %457 = vst [vmem:[%s429 + $0x34] sm:%s421] %v456
                  %v458 = vld [vmem:[%s428 + $0x38] sm:%s421]
                  %459 = vst [vmem:[%s429 + $0x38] sm:%s421] %v458
                  %v460 = vld [vmem:[%s428 + $0x3c] sm:%s421]
                  %461 = vst [vmem:[%s429 + $0x3c] sm:%s421] %v460
                  %v462 = vld [vmem:[%s428 + $0x40] sm:%s421]
                  %463 = vst [vmem:[%s429 + $0x40] sm:%s421] %v462
                  %v464 = vld [vmem:[%s428 + $0x44] sm:%s421]
                  %465 = vst [vmem:[%s429 + $0x44] sm:%s421] %v464
                  %v466 = vld [vmem:[%s428 + $0x48] sm:%s421]
                  %467 = vst [vmem:[%s429 + $0x48] sm:%s421] %v466
                  %v468 = vld [vmem:[%s428 + $0x4c] sm:%s421]
                  %469 = vst [vmem:[%s429 + $0x4c] sm:%s421] %v468
                  %v470 = vld [vmem:[%s428 + $0x50] sm:%s421]
                  %471 = vst [vmem:[%s429 + $0x50] sm:%s421] %v470
                  %v472 = vld [vmem:[%s428 + $0x54] sm:%s421]
                  %473 = vst [vmem:[%s429 + $0x54] sm:%s421] %v472
                  %v474 = vld [vmem:[%s428 + $0x58] sm:%s421]
                  %475 = vst [vmem:[%s429 + $0x58] sm:%s421] %v474
                  %v476 = vld [vmem:[%s428 + $0x5c] sm:%s421]
                  %477 = vst [vmem:[%s429 + $0x5c] sm:%s421] %v476
                  %v478 = vld [vmem:[%s428 + $0x60] sm:%s421]
                  %479 = vst [vmem:[%s429 + $0x60] sm:%s421] %v478
                  %v480 = vld [vmem:[%s428 + $0x64] sm:%s421]
                  %481 = vst [vmem:[%s429 + $0x64] sm:%s421] %v480
                  %v482 = vld [vmem:[%s428 + $0x68] sm:%s421]
                  %483 = vst [vmem:[%s429 + $0x68] sm:%s421] %v482
                  %v484 = vld [vmem:[%s428 + $0x6c] sm:%s421]
                  %485 = vst [vmem:[%s429 + $0x6c] sm:%s421] %v484
                  %v486 = vld [vmem:[%s428 + $0x70] sm:%s421]
                  %487 = vst [vmem:[%s429 + $0x70] sm:%s421] %v486
                  %v488 = vld [vmem:[%s428 + $0x74] sm:%s421]
                  %489 = vst [vmem:[%s429 + $0x74] sm:%s421] %v488
                  %v490 = vld [vmem:[%s428 + $0x78] sm:%s421]
                  %491 = vst [vmem:[%s429 + $0x78] sm:%s421] %v490
                  %v492 = vld [vmem:[%s428 + $0x7c] sm:%s421]
                  %493 = vst [vmem:[%s429 + $0x7c] sm:%s421] %v492
                  %v494 = vld [vmem:[%s428 + $0x100] sm:%s421]
                  %495 = vst [vmem:[%s429 + $0x80] sm:%s421] %v494
                  %v496 = vld [vmem:[%s428 + $0x104] sm:%s421]
                  %497 = vst [vmem:[%s429 + $0x84] sm:%s421] %v496
                  %v498 = vld [vmem:[%s428 + $0x108] sm:%s421]
                  %499 = vst [vmem:[%s429 + $0x88] sm:%s421] %v498
                  %v500 = vld [vmem:[%s428 + $0x10c] sm:%s421]
                  %501 = vst [vmem:[%s429 + $0x8c] sm:%s421] %v500
                  %v502 = vld [vmem:[%s428 + $0x110] sm:%s421]
                  %503 = vst [vmem:[%s429 + $0x90] sm:%s421] %v502
                  %v504 = vld [vmem:[%s428 + $0x114] sm:%s421]
                  %505 = vst [vmem:[%s429 + $0x94] sm:%s421] %v504
                  %v506 = vld [vmem:[%s428 + $0x118] sm:%s421]
                  %507 = vst [vmem:[%s429 + $0x98] sm:%s421] %v506
                  %v508 = vld [vmem:[%s428 + $0x11c] sm:%s421]
                  %509 = vst [vmem:[%s429 + $0x9c] sm:%s421] %v508
                  %v510 = vld [vmem:[%s428 + $0x120] sm:%s421]
                  %511 = vst [vmem:[%s429 + $0xa0] sm:%s421] %v510
                  %v512 = vld [vmem:[%s428 + $0x124] sm:%s421]
                  %513 = vst [vmem:[%s429 + $0xa4] sm:%s421] %v512
                  %v514 = vld [vmem:[%s428 + $0x128] sm:%s421]
                  %515 = vst [vmem:[%s429 + $0xa8] sm:%s421] %v514
                  %v516 = vld [vmem:[%s428 + $0x12c] sm:%s421]
                  %517 = vst [vmem:[%s429 + $0xac] sm:%s421] %v516
                  %v518 = vld [vmem:[%s428 + $0x130] sm:%s421]
                  %519 = vst [vmem:[%s429 + $0xb0] sm:%s421] %v518
                  %v520 = vld [vmem:[%s428 + $0x134] sm:%s421]
                  %521 = vst [vmem:[%s429 + $0xb4] sm:%s421] %v520
                  %v522 = vld [vmem:[%s428 + $0x138] sm:%s421]
                  %523 = vst [vmem:[%s429 + $0xb8] sm:%s421] %v522
                  %v524 = vld [vmem:[%s428 + $0x13c] sm:%s421]
                  %525 = vst [vmem:[%s429 + $0xbc] sm:%s421] %v524
                  %v526 = vld [vmem:[%s428 + $0x140] sm:%s421]
                  %527 = vst [vmem:[%s429 + $0xc0] sm:%s421] %v526
                  %v528 = vld [vmem:[%s428 + $0x144] sm:%s421]
                  %529 = vst [vmem:[%s429 + $0xc4] sm:%s421] %v528
                  %v530 = vld [vmem:[%s428 + $0x148] sm:%s421]
                  %531 = vst [vmem:[%s429 + $0xc8] sm:%s421] %v530
                  %v532 = vld [vmem:[%s428 + $0x14c] sm:%s421]
                  %533 = vst [vmem:[%s429 + $0xcc] sm:%s421] %v532
                  %v534 = vld [vmem:[%s428 + $0x150] sm:%s421]
                  %535 = vst [vmem:[%s429 + $0xd0] sm:%s421] %v534
                  %v536 = vld [vmem:[%s428 + $0x154] sm:%s421]
                  %537 = vst [vmem:[%s429 + $0xd4] sm:%s421] %v536
                  %v538 = vld [vmem:[%s428 + $0x158] sm:%s421]
                  %539 = vst [vmem:[%s429 + $0xd8] sm:%s421] %v538
                  %v540 = vld [vmem:[%s428 + $0x15c] sm:%s421]
                  %541 = vst [vmem:[%s429 + $0xdc] sm:%s421] %v540
                  %v542 = vld [vmem:[%s428 + $0x160] sm:%s421]
                  %543 = vst [vmem:[%s429 + $0xe0] sm:%s421] %v542
                  %v544 = vld [vmem:[%s428 + $0x164] sm:%s421]
                  %545 = vst [vmem:[%s429 + $0xe4] sm:%s421] %v544
                  %v546 = vld [vmem:[%s428 + $0x168] sm:%s421]
                  %547 = vst [vmem:[%s429 + $0xe8] sm:%s421] %v546
                  %v548 = vld [vmem:[%s428 + $0x16c] sm:%s421]
                  %549 = vst [vmem:[%s429 + $0xec] sm:%s421] %v548
                  %v550 = vld [vmem:[%s428 + $0x170] sm:%s421]
                  %551 = vst [vmem:[%s429 + $0xf0] sm:%s421] %v550
                  %v552 = vld [vmem:[%s428 + $0x174] sm:%s421]
                  %553 = vst [vmem:[%s429 + $0xf4] sm:%s421] %v552
                  %v554 = vld [vmem:[%s428 + $0x178] sm:%s421]
                  %555 = vst [vmem:[%s429 + $0xf8] sm:%s421] %v554
                  %v556 = vld [vmem:[%s428 + $0x17c] sm:%s421]
                  %557 = vst [vmem:[%s429 + $0xfc] sm:%s421] %v556
                  %v558 = vld [vmem:[%s428 + $0x200] sm:%s421]
                  %559 = vst [vmem:[%s429 + $0x100] sm:%s421] %v558
                  %v560 = vld [vmem:[%s428 + $0x204] sm:%s421]
                  %561 = vst [vmem:[%s429 + $0x104] sm:%s421] %v560
                  %v562 = vld [vmem:[%s428 + $0x208] sm:%s421]
                  %563 = vst [vmem:[%s429 + $0x108] sm:%s421] %v562
                  %v564 = vld [vmem:[%s428 + $0x20c] sm:%s421]
                  %565 = vst [vmem:[%s429 + $0x10c] sm:%s421] %v564
                  %v566 = vld [vmem:[%s428 + $0x210] sm:%s421]
                  %567 = vst [vmem:[%s429 + $0x110] sm:%s421] %v566
                  %v568 = vld [vmem:[%s428 + $0x214] sm:%s421]
                  %569 = vst [vmem:[%s429 + $0x114] sm:%s421] %v568
                  %v570 = vld [vmem:[%s428 + $0x218] sm:%s421]
                  %571 = vst [vmem:[%s429 + $0x118] sm:%s421] %v570
                  %v572 = vld [vmem:[%s428 + $0x21c] sm:%s421]
                  %573 = vst [vmem:[%s429 + $0x11c] sm:%s421] %v572
                  %v574 = vld [vmem:[%s428 + $0x220] sm:%s421]
                  %575 = vst [vmem:[%s429 + $0x120] sm:%s421] %v574
                  %v576 = vld [vmem:[%s428 + $0x224] sm:%s421]
                  %577 = vst [vmem:[%s429 + $0x124] sm:%s421] %v576
                  %v578 = vld [vmem:[%s428 + $0x228] sm:%s421]
                  %579 = vst [vmem:[%s429 + $0x128] sm:%s421] %v578
                  %v580 = vld [vmem:[%s428 + $0x22c] sm:%s421]
                  %581 = vst [vmem:[%s429 + $0x12c] sm:%s421] %v580
                  %v582 = vld [vmem:[%s428 + $0x230] sm:%s421]
                  %583 = vst [vmem:[%s429 + $0x130] sm:%s421] %v582
                  %v584 = vld [vmem:[%s428 + $0x234] sm:%s421]
                  %585 = vst [vmem:[%s429 + $0x134] sm:%s421] %v584
                  %v586 = vld [vmem:[%s428 + $0x238] sm:%s421]
                  %587 = vst [vmem:[%s429 + $0x138] sm:%s421] %v586
                  %v588 = vld [vmem:[%s428 + $0x23c] sm:%s421]
                  %589 = vst [vmem:[%s429 + $0x13c] sm:%s421] %v588
                  %v590 = vld [vmem:[%s428 + $0x240] sm:%s421]
                  %591 = vst [vmem:[%s429 + $0x140] sm:%s421] %v590
                  %v592 = vld [vmem:[%s428 + $0x244] sm:%s421]
                  %593 = vst [vmem:[%s429 + $0x144] sm:%s421] %v592
                  %v594 = vld [vmem:[%s428 + $0x248] sm:%s421]
                  %595 = vst [vmem:[%s429 + $0x148] sm:%s421] %v594
                  %v596 = vld [vmem:[%s428 + $0x24c] sm:%s421]
                  %597 = vst [vmem:[%s429 + $0x14c] sm:%s421] %v596
                  %v598 = vld [vmem:[%s428 + $0x250] sm:%s421]
                  %599 = vst [vmem:[%s429 + $0x150] sm:%s421] %v598
                  %v600 = vld [vmem:[%s428 + $0x254] sm:%s421]
                  %601 = vst [vmem:[%s429 + $0x154] sm:%s421] %v600
                  %v602 = vld [vmem:[%s428 + $0x258] sm:%s421]
                  %603 = vst [vmem:[%s429 + $0x158] sm:%s421] %v602
                  %v604 = vld [vmem:[%s428 + $0x25c] sm:%s421]
                  %605 = vst [vmem:[%s429 + $0x15c] sm:%s421] %v604
                  %v606 = vld [vmem:[%s428 + $0x260] sm:%s421]
                  %607 = vst [vmem:[%s429 + $0x160] sm:%s421] %v606
                  %v608 = vld [vmem:[%s428 + $0x264] sm:%s421]
                  %609 = vst [vmem:[%s429 + $0x164] sm:%s421] %v608
                  %v610 = vld [vmem:[%s428 + $0x268] sm:%s421]
                  %611 = vst [vmem:[%s429 + $0x168] sm:%s421] %v610
                  %v612 = vld [vmem:[%s428 + $0x26c] sm:%s421]
                  %613 = vst [vmem:[%s429 + $0x16c] sm:%s421] %v612
                  %v614 = vld [vmem:[%s428 + $0x270] sm:%s421]
                  %615 = vst [vmem:[%s429 + $0x170] sm:%s421] %v614
                  %v616 = vld [vmem:[%s428 + $0x274] sm:%s421]
                  %617 = vst [vmem:[%s429 + $0x174] sm:%s421] %v616
                  %v618 = vld [vmem:[%s428 + $0x278] sm:%s421]
                  %619 = vst [vmem:[%s429 + $0x178] sm:%s421] %v618
                  %v620 = vld [vmem:[%s428 + $0x27c] sm:%s421]
                  %621 = vst [vmem:[%s429 + $0x17c] sm:%s421] %v620
                  %v622 = vld [vmem:[%s428 + $0x300] sm:%s421]
                  %623 = vst [vmem:[%s429 + $0x180] sm:%s421] %v622
                  %v624 = vld [vmem:[%s428 + $0x304] sm:%s421]
                  %625 = vst [vmem:[%s429 + $0x184] sm:%s421] %v624
                  %v626 = vld [vmem:[%s428 + $0x308] sm:%s421]
                  %627 = vst [vmem:[%s429 + $0x188] sm:%s421] %v626
                  %v628 = vld [vmem:[%s428 + $0x30c] sm:%s421]
                  %629 = vst [vmem:[%s429 + $0x18c] sm:%s421] %v628
                  %v630 = vld [vmem:[%s428 + $0x310] sm:%s421]
                  %631 = vst [vmem:[%s429 + $0x190] sm:%s421] %v630
                  %v632 = vld [vmem:[%s428 + $0x314] sm:%s421]
                  %633 = vst [vmem:[%s429 + $0x194] sm:%s421] %v632
                  %v634 = vld [vmem:[%s428 + $0x318] sm:%s421]
                  %635 = vst [vmem:[%s429 + $0x198] sm:%s421] %v634
                  %v636 = vld [vmem:[%s428 + $0x31c] sm:%s421]
                  %637 = vst [vmem:[%s429 + $0x19c] sm:%s421] %v636
                  %v638 = vld [vmem:[%s428 + $0x320] sm:%s421]
                  %639 = vst [vmem:[%s429 + $0x1a0] sm:%s421] %v638
                  %v640 = vld [vmem:[%s428 + $0x324] sm:%s421]
                  %641 = vst [vmem:[%s429 + $0x1a4] sm:%s421] %v640
                  %v642 = vld [vmem:[%s428 + $0x328] sm:%s421]
                  %643 = vst [vmem:[%s429 + $0x1a8] sm:%s421] %v642
                  %v644 = vld [vmem:[%s428 + $0x32c] sm:%s421]
                  %645 = vst [vmem:[%s429 + $0x1ac] sm:%s421] %v644
                  %v646 = vld [vmem:[%s428 + $0x330] sm:%s421]
                  %647 = vst [vmem:[%s429 + $0x1b0] sm:%s421] %v646
                  %v648 = vld [vmem:[%s428 + $0x334] sm:%s421]
                  %649 = vst [vmem:[%s429 + $0x1b4] sm:%s421] %v648
                  %v650 = vld [vmem:[%s428 + $0x338] sm:%s421]
                  %651 = vst [vmem:[%s429 + $0x1b8] sm:%s421] %v650
                  %v652 = vld [vmem:[%s428 + $0x33c] sm:%s421]
                  %653 = vst [vmem:[%s429 + $0x1bc] sm:%s421] %v652
                  %v654 = vld [vmem:[%s428 + $0x340] sm:%s421]
                  %655 = vst [vmem:[%s429 + $0x1c0] sm:%s421] %v654
                  %v656 = vld [vmem:[%s428 + $0x344] sm:%s421]
                  %657 = vst [vmem:[%s429 + $0x1c4] sm:%s421] %v656
                  %v658 = vld [vmem:[%s428 + $0x348] sm:%s421]
                  %659 = vst [vmem:[%s429 + $0x1c8] sm:%s421] %v658
                  %v660 = vld [vmem:[%s428 + $0x34c] sm:%s421]
                  %661 = vst [vmem:[%s429 + $0x1cc] sm:%s421] %v660
                  %v662 = vld [vmem:[%s428 + $0x350] sm:%s421]
                  %663 = vst [vmem:[%s429 + $0x1d0] sm:%s421] %v662
                  %v664 = vld [vmem:[%s428 + $0x354] sm:%s421]
                  %665 = vst [vmem:[%s429 + $0x1d4] sm:%s421] %v664
                  %v666 = vld [vmem:[%s428 + $0x358] sm:%s421]
                  %667 = vst [vmem:[%s429 + $0x1d8] sm:%s421] %v666
                  %v668 = vld [vmem:[%s428 + $0x35c] sm:%s421]
                  %669 = vst [vmem:[%s429 + $0x1dc] sm:%s421] %v668
                  %v670 = vld [vmem:[%s428 + $0x360] sm:%s421]
                  %671 = vst [vmem:[%s429 + $0x1e0] sm:%s421] %v670
                  %v672 = vld [vmem:[%s428 + $0x364] sm:%s421]
                  %673 = vst [vmem:[%s429 + $0x1e4] sm:%s421] %v672
                  %v674 = vld [vmem:[%s428 + $0x368] sm:%s421]
                  %675 = vst [vmem:[%s429 + $0x1e8] sm:%s421] %v674
                  %v676 = vld [vmem:[%s428 + $0x36c] sm:%s421]
                  %677 = vst [vmem:[%s429 + $0x1ec] sm:%s421] %v676
                  %v678 = vld [vmem:[%s428 + $0x370] sm:%s421]
                  %679 = vst [vmem:[%s429 + $0x1f0] sm:%s421] %v678
                  %v680 = vld [vmem:[%s428 + $0x374] sm:%s421]
                  %681 = vst [vmem:[%s429 + $0x1f4] sm:%s421] %v680
                  %v682 = vld [vmem:[%s428 + $0x378] sm:%s421]
                  %683 = vst [vmem:[%s429 + $0x1f8] sm:%s421] %v682
                  %v684 = vld [vmem:[%s428 + $0x37c] sm:%s421]
                  %685 = vst [vmem:[%s429 + $0x1fc] sm:%s421] %v684
                $region63: #{tpu_custom_call.1} parent=50 // loop_footer
                  %s427 = sadd.s32 1, %s423
                $region64: #{tpu_custom_call.1} parent=50 // loop_footer_branch
                  %422 = sbr.rel target = $region60
                $region65: #{tpu_custom_call.1} parent=50 // loop_exit
                  _
              $region51: #{tpu_custom_call.1} parent=35 // pred_fallthru
                _
            $region36: #{tpu_custom_call.1} parent=31 // pred_fallthru
              _
            // Predicated region
            $region37: #{tpu_custom_call.1} parent=31 // pred_check
              _
            $region38: #{tpu_custom_call.1} parent=31 // pred_check_branch
              %143 = sbr.rel (0) target = $region40
            $region39: #{tpu_custom_call.1} parent=31 // pred_region
              %s145 = ssub.s32 16, 1
              loop: start=0, step=1, limit=1
              $region41: #{tpu_custom_call.1} parent=39 // loop_pre_header
                _
              $region42: #{tpu_custom_call.1} parent=39 // loop_header
                %s147 = sphi 0, %s151
                %p148 = scmp.ge.s32.totalorder %s147, 1
                %s152 = sphi %s137, %s137
                %s153 = sphi %s134, %s134
              $region43: #{tpu_custom_call.1} parent=39 // loop_header_branch
                %150 = sbr.rel (%p148) target = $region47
              $region44: #{tpu_custom_call.1} parent=39 // loop_body
                %v154 = vld [vmem:[%s152] sm:%s145]
                %155 = vst [vmem:[%s153] sm:%s145] %v154
                %v156 = vld [vmem:[%s152 + $0x4] sm:%s145]
                %157 = vst [vmem:[%s153 + $0x4] sm:%s145] %v156
                %v158 = vld [vmem:[%s152 + $0x8] sm:%s145]
                %159 = vst [vmem:[%s153 + $0x8] sm:%s145] %v158
                %v160 = vld [vmem:[%s152 + $0xc] sm:%s145]
                %161 = vst [vmem:[%s153 + $0xc] sm:%s145] %v160
                %v162 = vld [vmem:[%s152 + $0x10] sm:%s145]
                %163 = vst [vmem:[%s153 + $0x10] sm:%s145] %v162
                %v164 = vld [vmem:[%s152 + $0x14] sm:%s145]
                %165 = vst [vmem:[%s153 + $0x14] sm:%s145] %v164
                %v166 = vld [vmem:[%s152 + $0x18] sm:%s145]
                %167 = vst [vmem:[%s153 + $0x18] sm:%s145] %v166
                %v168 = vld [vmem:[%s152 + $0x1c] sm:%s145]
                %169 = vst [vmem:[%s153 + $0x1c] sm:%s145] %v168
                %v170 = vld [vmem:[%s152 + $0x20] sm:%s145]
                %171 = vst [vmem:[%s153 + $0x20] sm:%s145] %v170
                %v172 = vld [vmem:[%s152 + $0x24] sm:%s145]
                %173 = vst [vmem:[%s153 + $0x24] sm:%s145] %v172
                %v174 = vld [vmem:[%s152 + $0x28] sm:%s145]
                %175 = vst [vmem:[%s153 + $0x28] sm:%s145] %v174
                %v176 = vld [vmem:[%s152 + $0x2c] sm:%s145]
                %177 = vst [vmem:[%s153 + $0x2c] sm:%s145] %v176
                %v178 = vld [vmem:[%s152 + $0x30] sm:%s145]
                %179 = vst [vmem:[%s153 + $0x30] sm:%s145] %v178
                %v180 = vld [vmem:[%s152 + $0x34] sm:%s145]
                %181 = vst [vmem:[%s153 + $0x34] sm:%s145] %v180
                %v182 = vld [vmem:[%s152 + $0x38] sm:%s145]
                %183 = vst [vmem:[%s153 + $0x38] sm:%s145] %v182
                %v184 = vld [vmem:[%s152 + $0x3c] sm:%s145]
                %185 = vst [vmem:[%s153 + $0x3c] sm:%s145] %v184
                %v186 = vld [vmem:[%s152 + $0x40] sm:%s145]
                %187 = vst [vmem:[%s153 + $0x40] sm:%s145] %v186
                %v188 = vld [vmem:[%s152 + $0x44] sm:%s145]
                %189 = vst [vmem:[%s153 + $0x44] sm:%s145] %v188
                %v190 = vld [vmem:[%s152 + $0x48] sm:%s145]
                %191 = vst [vmem:[%s153 + $0x48] sm:%s145] %v190
                %v192 = vld [vmem:[%s152 + $0x4c] sm:%s145]
                %193 = vst [vmem:[%s153 + $0x4c] sm:%s145] %v192
                %v194 = vld [vmem:[%s152 + $0x50] sm:%s145]
                %195 = vst [vmem:[%s153 + $0x50] sm:%s145] %v194
                %v196 = vld [vmem:[%s152 + $0x54] sm:%s145]
                %197 = vst [vmem:[%s153 + $0x54] sm:%s145] %v196
                %v198 = vld [vmem:[%s152 + $0x58] sm:%s145]
                %199 = vst [vmem:[%s153 + $0x58] sm:%s145] %v198
                %v200 = vld [vmem:[%s152 + $0x5c] sm:%s145]
                %201 = vst [vmem:[%s153 + $0x5c] sm:%s145] %v200
                %v202 = vld [vmem:[%s152 + $0x60] sm:%s145]
                %203 = vst [vmem:[%s153 + $0x60] sm:%s145] %v202
                %v204 = vld [vmem:[%s152 + $0x64] sm:%s145]
                %205 = vst [vmem:[%s153 + $0x64] sm:%s145] %v204
                %v206 = vld [vmem:[%s152 + $0x68] sm:%s145]
                %207 = vst [vmem:[%s153 + $0x68] sm:%s145] %v206
                %v208 = vld [vmem:[%s152 + $0x6c] sm:%s145]
                %209 = vst [vmem:[%s153 + $0x6c] sm:%s145] %v208
                %v210 = vld [vmem:[%s152 + $0x70] sm:%s145]
                %211 = vst [vmem:[%s153 + $0x70] sm:%s145] %v210
                %v212 = vld [vmem:[%s152 + $0x74] sm:%s145]
                %213 = vst [vmem:[%s153 + $0x74] sm:%s145] %v212
                %v214 = vld [vmem:[%s152 + $0x78] sm:%s145]
                %215 = vst [vmem:[%s153 + $0x78] sm:%s145] %v214
                %v216 = vld [vmem:[%s152 + $0x7c] sm:%s145]
                %217 = vst [vmem:[%s153 + $0x7c] sm:%s145] %v216
                %v218 = vld [vmem:[%s152 + $0x100] sm:%s145]
                %219 = vst [vmem:[%s153 + $0x80] sm:%s145] %v218
                %v220 = vld [vmem:[%s152 + $0x104] sm:%s145]
                %221 = vst [vmem:[%s153 + $0x84] sm:%s145] %v220
                %v222 = vld [vmem:[%s152 + $0x108] sm:%s145]
                %223 = vst [vmem:[%s153 + $0x88] sm:%s145] %v222
                %v224 = vld [vmem:[%s152 + $0x10c] sm:%s145]
                %225 = vst [vmem:[%s153 + $0x8c] sm:%s145] %v224
                %v226 = vld [vmem:[%s152 + $0x110] sm:%s145]
                %227 = vst [vmem:[%s153 + $0x90] sm:%s145] %v226
                %v228 = vld [vmem:[%s152 + $0x114] sm:%s145]
                %229 = vst [vmem:[%s153 + $0x94] sm:%s145] %v228
                %v230 = vld [vmem:[%s152 + $0x118] sm:%s145]
                %231 = vst [vmem:[%s153 + $0x98] sm:%s145] %v230
                %v232 = vld [vmem:[%s152 + $0x11c] sm:%s145]
                %233 = vst [vmem:[%s153 + $0x9c] sm:%s145] %v232
                %v234 = vld [vmem:[%s152 + $0x120] sm:%s145]
                %235 = vst [vmem:[%s153 + $0xa0] sm:%s145] %v234
                %v236 = vld [vmem:[%s152 + $0x124] sm:%s145]
                %237 = vst [vmem:[%s153 + $0xa4] sm:%s145] %v236
                %v238 = vld [vmem:[%s152 + $0x128] sm:%s145]
                %239 = vst [vmem:[%s153 + $0xa8] sm:%s145] %v238
                %v240 = vld [vmem:[%s152 + $0x12c] sm:%s145]
                %241 = vst [vmem:[%s153 + $0xac] sm:%s145] %v240
                %v242 = vld [vmem:[%s152 + $0x130] sm:%s145]
                %243 = vst [vmem:[%s153 + $0xb0] sm:%s145] %v242
                %v244 = vld [vmem:[%s152 + $0x134] sm:%s145]
                %245 = vst [vmem:[%s153 + $0xb4] sm:%s145] %v244
                %v246 = vld [vmem:[%s152 + $0x138] sm:%s145]
                %247 = vst [vmem:[%s153 + $0xb8] sm:%s145] %v246
                %v248 = vld [vmem:[%s152 + $0x13c] sm:%s145]
                %249 = vst [vmem:[%s153 + $0xbc] sm:%s145] %v248
                %v250 = vld [vmem:[%s152 + $0x140] sm:%s145]
                %251 = vst [vmem:[%s153 + $0xc0] sm:%s145] %v250
                %v252 = vld [vmem:[%s152 + $0x144] sm:%s145]
                %253 = vst [vmem:[%s153 + $0xc4] sm:%s145] %v252
                %v254 = vld [vmem:[%s152 + $0x148] sm:%s145]
                %255 = vst [vmem:[%s153 + $0xc8] sm:%s145] %v254
                %v256 = vld [vmem:[%s152 + $0x14c] sm:%s145]
                %257 = vst [vmem:[%s153 + $0xcc] sm:%s145] %v256
                %v258 = vld [vmem:[%s152 + $0x150] sm:%s145]
                %259 = vst [vmem:[%s153 + $0xd0] sm:%s145] %v258
                %v260 = vld [vmem:[%s152 + $0x154] sm:%s145]
                %261 = vst [vmem:[%s153 + $0xd4] sm:%s145] %v260
                %v262 = vld [vmem:[%s152 + $0x158] sm:%s145]
                %263 = vst [vmem:[%s153 + $0xd8] sm:%s145] %v262
                %v264 = vld [vmem:[%s152 + $0x15c] sm:%s145]
                %265 = vst [vmem:[%s153 + $0xdc] sm:%s145] %v264
                %v266 = vld [vmem:[%s152 + $0x160] sm:%s145]
                %267 = vst [vmem:[%s153 + $0xe0] sm:%s145] %v266
                %v268 = vld [vmem:[%s152 + $0x164] sm:%s145]
                %269 = vst [vmem:[%s153 + $0xe4] sm:%s145] %v268
                %v270 = vld [vmem:[%s152 + $0x168] sm:%s145]
                %271 = vst [vmem:[%s153 + $0xe8] sm:%s145] %v270
                %v272 = vld [vmem:[%s152 + $0x16c] sm:%s145]
                %273 = vst [vmem:[%s153 + $0xec] sm:%s145] %v272
                %v274 = vld [vmem:[%s152 + $0x170] sm:%s145]
                %275 = vst [vmem:[%s153 + $0xf0] sm:%s145] %v274
                %v276 = vld [vmem:[%s152 + $0x174] sm:%s145]
                %277 = vst [vmem:[%s153 + $0xf4] sm:%s145] %v276
                %v278 = vld [vmem:[%s152 + $0x178] sm:%s145]
                %279 = vst [vmem:[%s153 + $0xf8] sm:%s145] %v278
                %v280 = vld [vmem:[%s152 + $0x17c] sm:%s145]
                %281 = vst [vmem:[%s153 + $0xfc] sm:%s145] %v280
                %v282 = vld [vmem:[%s152 + $0x200] sm:%s145]
                %283 = vst [vmem:[%s153 + $0x100] sm:%s145] %v282
                %v284 = vld [vmem:[%s152 + $0x204] sm:%s145]
                %285 = vst [vmem:[%s153 + $0x104] sm:%s145] %v284
                %v286 = vld [vmem:[%s152 + $0x208] sm:%s145]
                %287 = vst [vmem:[%s153 + $0x108] sm:%s145] %v286
                %v288 = vld [vmem:[%s152 + $0x20c] sm:%s145]
                %289 = vst [vmem:[%s153 + $0x10c] sm:%s145] %v288
                %v290 = vld [vmem:[%s152 + $0x210] sm:%s145]
                %291 = vst [vmem:[%s153 + $0x110] sm:%s145] %v290
                %v292 = vld [vmem:[%s152 + $0x214] sm:%s145]
                %293 = vst [vmem:[%s153 + $0x114] sm:%s145] %v292
                %v294 = vld [vmem:[%s152 + $0x218] sm:%s145]
                %295 = vst [vmem:[%s153 + $0x118] sm:%s145] %v294
                %v296 = vld [vmem:[%s152 + $0x21c] sm:%s145]
                %297 = vst [vmem:[%s153 + $0x11c] sm:%s145] %v296
                %v298 = vld [vmem:[%s152 + $0x220] sm:%s145]
                %299 = vst [vmem:[%s153 + $0x120] sm:%s145] %v298
                %v300 = vld [vmem:[%s152 + $0x224] sm:%s145]
                %301 = vst [vmem:[%s153 + $0x124] sm:%s145] %v300
                %v302 = vld [vmem:[%s152 + $0x228] sm:%s145]
                %303 = vst [vmem:[%s153 + $0x128] sm:%s145] %v302
                %v304 = vld [vmem:[%s152 + $0x22c] sm:%s145]
                %305 = vst [vmem:[%s153 + $0x12c] sm:%s145] %v304
                %v306 = vld [vmem:[%s152 + $0x230] sm:%s145]
                %307 = vst [vmem:[%s153 + $0x130] sm:%s145] %v306
                %v308 = vld [vmem:[%s152 + $0x234] sm:%s145]
                %309 = vst [vmem:[%s153 + $0x134] sm:%s145] %v308
                %v310 = vld [vmem:[%s152 + $0x238] sm:%s145]
                %311 = vst [vmem:[%s153 + $0x138] sm:%s145] %v310
                %v312 = vld [vmem:[%s152 + $0x23c] sm:%s145]
                %313 = vst [vmem:[%s153 + $0x13c] sm:%s145] %v312
                %v314 = vld [vmem:[%s152 + $0x240] sm:%s145]
                %315 = vst [vmem:[%s153 + $0x140] sm:%s145] %v314
                %v316 = vld [vmem:[%s152 + $0x244] sm:%s145]
                %317 = vst [vmem:[%s153 + $0x144] sm:%s145] %v316
                %v318 = vld [vmem:[%s152 + $0x248] sm:%s145]
                %319 = vst [vmem:[%s153 + $0x148] sm:%s145] %v318
                %v320 = vld [vmem:[%s152 + $0x24c] sm:%s145]
                %321 = vst [vmem:[%s153 + $0x14c] sm:%s145] %v320
                %v322 = vld [vmem:[%s152 + $0x250] sm:%s145]
                %323 = vst [vmem:[%s153 + $0x150] sm:%s145] %v322
                %v324 = vld [vmem:[%s152 + $0x254] sm:%s145]
                %325 = vst [vmem:[%s153 + $0x154] sm:%s145] %v324
                %v326 = vld [vmem:[%s152 + $0x258] sm:%s145]
                %327 = vst [vmem:[%s153 + $0x158] sm:%s145] %v326
                %v328 = vld [vmem:[%s152 + $0x25c] sm:%s145]
                %329 = vst [vmem:[%s153 + $0x15c] sm:%s145] %v328
                %v330 = vld [vmem:[%s152 + $0x260] sm:%s145]
                %331 = vst [vmem:[%s153 + $0x160] sm:%s145] %v330
                %v332 = vld [vmem:[%s152 + $0x264] sm:%s145]
                %333 = vst [vmem:[%s153 + $0x164] sm:%s145] %v332
                %v334 = vld [vmem:[%s152 + $0x268] sm:%s145]
                %335 = vst [vmem:[%s153 + $0x168] sm:%s145] %v334
                %v336 = vld [vmem:[%s152 + $0x26c] sm:%s145]
                %337 = vst [vmem:[%s153 + $0x16c] sm:%s145] %v336
                %v338 = vld [vmem:[%s152 + $0x270] sm:%s145]
                %339 = vst [vmem:[%s153 + $0x170] sm:%s145] %v338
                %v340 = vld [vmem:[%s152 + $0x274] sm:%s145]
                %341 = vst [vmem:[%s153 + $0x174] sm:%s145] %v340
                %v342 = vld [vmem:[%s152 + $0x278] sm:%s145]
                %343 = vst [vmem:[%s153 + $0x178] sm:%s145] %v342
                %v344 = vld [vmem:[%s152 + $0x27c] sm:%s145]
                %345 = vst [vmem:[%s153 + $0x17c] sm:%s145] %v344
                %v346 = vld [vmem:[%s152 + $0x300] sm:%s145]
                %347 = vst [vmem:[%s153 + $0x180] sm:%s145] %v346
                %v348 = vld [vmem:[%s152 + $0x304] sm:%s145]
                %349 = vst [vmem:[%s153 + $0x184] sm:%s145] %v348
                %v350 = vld [vmem:[%s152 + $0x308] sm:%s145]
                %351 = vst [vmem:[%s153 + $0x188] sm:%s145] %v350
                %v352 = vld [vmem:[%s152 + $0x30c] sm:%s145]
                %353 = vst [vmem:[%s153 + $0x18c] sm:%s145] %v352
                %v354 = vld [vmem:[%s152 + $0x310] sm:%s145]
                %355 = vst [vmem:[%s153 + $0x190] sm:%s145] %v354
                %v356 = vld [vmem:[%s152 + $0x314] sm:%s145]
                %357 = vst [vmem:[%s153 + $0x194] sm:%s145] %v356
                %v358 = vld [vmem:[%s152 + $0x318] sm:%s145]
                %359 = vst [vmem:[%s153 + $0x198] sm:%s145] %v358
                %v360 = vld [vmem:[%s152 + $0x31c] sm:%s145]
                %361 = vst [vmem:[%s153 + $0x19c] sm:%s145] %v360
                %v362 = vld [vmem:[%s152 + $0x320] sm:%s145]
                %363 = vst [vmem:[%s153 + $0x1a0] sm:%s145] %v362
                %v364 = vld [vmem:[%s152 + $0x324] sm:%s145]
                %365 = vst [vmem:[%s153 + $0x1a4] sm:%s145] %v364
                %v366 = vld [vmem:[%s152 + $0x328] sm:%s145]
                %367 = vst [vmem:[%s153 + $0x1a8] sm:%s145] %v366
                %v368 = vld [vmem:[%s152 + $0x32c] sm:%s145]
                %369 = vst [vmem:[%s153 + $0x1ac] sm:%s145] %v368
                %v370 = vld [vmem:[%s152 + $0x330] sm:%s145]
                %371 = vst [vmem:[%s153 + $0x1b0] sm:%s145] %v370
                %v372 = vld [vmem:[%s152 + $0x334] sm:%s145]
                %373 = vst [vmem:[%s153 + $0x1b4] sm:%s145] %v372
                %v374 = vld [vmem:[%s152 + $0x338] sm:%s145]
                %375 = vst [vmem:[%s153 + $0x1b8] sm:%s145] %v374
                %v376 = vld [vmem:[%s152 + $0x33c] sm:%s145]
                %377 = vst [vmem:[%s153 + $0x1bc] sm:%s145] %v376
                %v378 = vld [vmem:[%s152 + $0x340] sm:%s145]
                %379 = vst [vmem:[%s153 + $0x1c0] sm:%s145] %v378
                %v380 = vld [vmem:[%s152 + $0x344] sm:%s145]
                %381 = vst [vmem:[%s153 + $0x1c4] sm:%s145] %v380
                %v382 = vld [vmem:[%s152 + $0x348] sm:%s145]
                %383 = vst [vmem:[%s153 + $0x1c8] sm:%s145] %v382
                %v384 = vld [vmem:[%s152 + $0x34c] sm:%s145]
                %385 = vst [vmem:[%s153 + $0x1cc] sm:%s145] %v384
                %v386 = vld [vmem:[%s152 + $0x350] sm:%s145]
                %387 = vst [vmem:[%s153 + $0x1d0] sm:%s145] %v386
                %v388 = vld [vmem:[%s152 + $0x354] sm:%s145]
                %389 = vst [vmem:[%s153 + $0x1d4] sm:%s145] %v388
                %v390 = vld [vmem:[%s152 + $0x358] sm:%s145]
                %391 = vst [vmem:[%s153 + $0x1d8] sm:%s145] %v390
                %v392 = vld [vmem:[%s152 + $0x35c] sm:%s145]
                %393 = vst [vmem:[%s153 + $0x1dc] sm:%s145] %v392
                %v394 = vld [vmem:[%s152 + $0x360] sm:%s145]
                %395 = vst [vmem:[%s153 + $0x1e0] sm:%s145] %v394
                %v396 = vld [vmem:[%s152 + $0x364] sm:%s145]
                %397 = vst [vmem:[%s153 + $0x1e4] sm:%s145] %v396
                %v398 = vld [vmem:[%s152 + $0x368] sm:%s145]
                %399 = vst [vmem:[%s153 + $0x1e8] sm:%s145] %v398
                %v400 = vld [vmem:[%s152 + $0x36c] sm:%s145]
                %401 = vst [vmem:[%s153 + $0x1ec] sm:%s145] %v400
                %v402 = vld [vmem:[%s152 + $0x370] sm:%s145]
                %403 = vst [vmem:[%s153 + $0x1f0] sm:%s145] %v402
                %v404 = vld [vmem:[%s152 + $0x374] sm:%s145]
                %405 = vst [vmem:[%s153 + $0x1f4] sm:%s145] %v404
                %v406 = vld [vmem:[%s152 + $0x378] sm:%s145]
                %407 = vst [vmem:[%s153 + $0x1f8] sm:%s145] %v406
                %v408 = vld [vmem:[%s152 + $0x37c] sm:%s145]
                %409 = vst [vmem:[%s153 + $0x1fc] sm:%s145] %v408
              $region45: #{tpu_custom_call.1} parent=39 // loop_footer
                %s151 = sadd.s32 1, %s147
              $region46: #{tpu_custom_call.1} parent=39 // loop_footer_branch
                %146 = sbr.rel target = $region42
              $region47: #{tpu_custom_call.1} parent=39 // loop_exit
                _
            $region40: #{tpu_custom_call.1} parent=31 // pred_fallthru
              _
          $region32: #{tpu_custom_call.1} parent=27 // pred_fallthru
            _
          %686 = vnop
        $region28: #{tpu_custom_call.1} parent=23 // pred_fallthru
          _
      $region24: #{tpu_custom_call.1} parent=5 // pred_fallthru
        _
      %p687 = scmp.le.s32.totalorder 1, %s9
      %p688 = scmp.lt.s32.totalorder %s9, 3
      %p689 = pnand %p687, %p688
      %p690 = pneg %p689
      // Predicated region
      $region66: #{tpu_custom_call.1} parent=5 // pred_check
        _
      $region67: #{tpu_custom_call.1} parent=5 // pred_check_branch
        %692 = sbr.rel (%p689) target = $region69
      $region68: #{tpu_custom_call.1} parent=5 // pred_region
        %s693 = ssub.s32 %s9, 1
        %s694 = sand.u32 %s22, 1
        %s695 = sand.u32 %s22, 1
        %s696 = smul.addr %s695, 512
        %s697 = scalar_lea.vmem [#allocation2], %s696
        // Predicated region
        $region70: #{tpu_custom_call.1} parent=68 // pred_check
          %p698 = pneg %p35
        $region71: #{tpu_custom_call.1} parent=68 // pred_check_branch
          %700 = sbr.rel (%p698) target = $region73
        $region72: #{tpu_custom_call.1} parent=68 // pred_region
          _
        $region73: #{tpu_custom_call.1} parent=68 // pred_fallthru
          _
        %s701 = sand.u32 %s22, 1
        %s702 = sand.u32 %s22, 1
        %s703 = smul.addr %s702, 512
        %s704 = scalar_lea.vmem [#allocation2], %s703
        %p705 = pneg %p35
        %p706 = pneg %p32
        %p707 = pneg %p56
        %p708 = pneg %p53
        %p709 = pneg %p77
        %p710 = pneg %p74
        %p711 = pneg %p103
        %p712 = pneg %p100
        %s713 = smul.u32 32, %s14
        %p714 = scmp.lt.s32.totalorder %s713, 63
        %s715 = scalar_select %p714, %s713, 63
        %s716 = smul.addr %s715, 4
        %s717 = scalar_lea.vmem %s3, %s716
        %s718 = smul.u32 32, %s14
        %s719 = smul.u32 32, %s14
        %p720 = scmp.lt.s32.totalorder %s719, 63
        %s721 = scalar_select %p720, %s719, 63
        %s722 = smul.addr %s721, 4
        %s723 = scalar_lea.vmem %s3, %s722
        %s724 = smul.u32 32, %s14
        %v726 = vld [vmem:[%s1] sm:$0xf]
        %v727 = vld [vmem:[%s1 + $0x4] sm:$0xf]
        %v728 = vld [vmem:[%s1 + $0x8] sm:$0xf]
        %v729 = vld [vmem:[%s1 + $0xc] sm:$0xf]
        %v730 = vld [vmem:[%s2] sm:$0x1]
        %v731 = vld [vmem:[%s697] sm:$0xf]
        %v732 = vld [vmem:[%s697 + $0x4] sm:$0xf]
        %v733 = vld [vmem:[%s697 + $0x8] sm:$0xf]
        %v734 = vld [vmem:[%s697 + $0xc] sm:$0xf]
        %v735 = vld [vmem:[%s697 + $0x10] sm:$0xf]
        %v736 = vld [vmem:[%s697 + $0x14] sm:$0xf]
        %v737 = vld [vmem:[%s697 + $0x18] sm:$0xf]
        %v738 = vld [vmem:[%s697 + $0x1c] sm:$0xf]
        %v739 = vld [vmem:[%s697 + $0x20] sm:$0xf]
        %v740 = vld [vmem:[%s697 + $0x24] sm:$0xf]
        %v741 = vld [vmem:[%s697 + $0x28] sm:$0xf]
        %v742 = vld [vmem:[%s697 + $0x2c] sm:$0xf]
        %v743 = vld [vmem:[%s697 + $0x30] sm:$0xf]
        %v744 = vld [vmem:[%s697 + $0x34] sm:$0xf]
        %v745 = vld [vmem:[%s697 + $0x38] sm:$0xf]
        %v746 = vld [vmem:[%s697 + $0x3c] sm:$0xf]
        %v747 = vld [vmem:[%s697 + $0x40] sm:$0xf]
        %v748 = vld [vmem:[%s697 + $0x44] sm:$0xf]
        %v749 = vld [vmem:[%s697 + $0x48] sm:$0xf]
        %v750 = vld [vmem:[%s697 + $0x4c] sm:$0xf]
        %v751 = vld [vmem:[%s697 + $0x50] sm:$0xf]
        %v752 = vld [vmem:[%s697 + $0x54] sm:$0xf]
        %v753 = vld [vmem:[%s697 + $0x58] sm:$0xf]
        %v754 = vld [vmem:[%s697 + $0x5c] sm:$0xf]
        %v755 = vld [vmem:[%s697 + $0x60] sm:$0xf]
        %v756 = vld [vmem:[%s697 + $0x64] sm:$0xf]
        %v757 = vld [vmem:[%s697 + $0x68] sm:$0xf]
        %v758 = vld [vmem:[%s697 + $0x6c] sm:$0xf]
        %v759 = vld [vmem:[%s697 + $0x70] sm:$0xf]
        %v760 = vld [vmem:[%s697 + $0x74] sm:$0xf]
        %v761 = vld [vmem:[%s697 + $0x78] sm:$0xf]
        %v762 = vld [vmem:[%s697 + $0x7c] sm:$0xf]
        %v795 = vunpack.c.l.b16 %v731
        %v796 = vunpack.c.l.b16 %v732
        %v797 = vunpack.c.l.b16 %v733
        %v798 = vunpack.c.l.b16 %v734
        %v799 = vunpack.c.l.b16 %v735
        %v800 = vunpack.c.l.b16 %v736
        %v801 = vunpack.c.l.b16 %v737
        %v802 = vunpack.c.l.b16 %v738
        %v803 = vunpack.c.l.b16 %v739
        %v804 = vunpack.c.l.b16 %v740
        %v805 = vunpack.c.l.b16 %v741
        %v806 = vunpack.c.l.b16 %v742
        %v807 = vunpack.c.l.b16 %v743
        %v808 = vunpack.c.l.b16 %v744
        %v809 = vunpack.c.l.b16 %v745
        %v810 = vunpack.c.l.b16 %v746
        %v811 = vunpack.c.l.b16 %v747
        %v812 = vunpack.c.l.b16 %v748
        %v813 = vunpack.c.l.b16 %v749
        %v814 = vunpack.c.l.b16 %v750
        %v815 = vunpack.c.l.b16 %v751
        %v816 = vunpack.c.l.b16 %v752
        %v817 = vunpack.c.l.b16 %v753
        %v818 = vunpack.c.l.b16 %v754
        %v819 = vunpack.c.l.b16 %v755
        %v820 = vunpack.c.l.b16 %v756
        %v821 = vunpack.c.l.b16 %v757
        %v822 = vunpack.c.l.b16 %v758
        %v823 = vunpack.c.l.b16 %v759
        %v824 = vunpack.c.l.b16 %v760
        %v825 = vunpack.c.l.b16 %v761
        %v826 = vunpack.c.l.b16 %v762
        %v827 = vpack.c.b16 %v796, %v795
        %v828 = vpack.c.b16 %v798, %v797
        %v829 = vpack.c.b16 %v800, %v799
        %v830 = vpack.c.b16 %v802, %v801
        %v831 = vpack.c.b16 %v804, %v803
        %v832 = vpack.c.b16 %v806, %v805
        %v833 = vpack.c.b16 %v808, %v807
        %v834 = vpack.c.b16 %v810, %v809
        %v835 = vpack.c.b16 %v812, %v811
        %v836 = vpack.c.b16 %v814, %v813
        %v837 = vpack.c.b16 %v816, %v815
        %v838 = vpack.c.b16 %v818, %v817
        %v839 = vpack.c.b16 %v820, %v819
        %v840 = vpack.c.b16 %v822, %v821
        %v841 = vpack.c.b16 %v824, %v823
        %v842 = vpack.c.b16 %v826, %v825
        %v847 = vunpack.c.l.b16 %v726
        %v848 = vunpack.c.l.b16 %v727
        %v849 = vunpack.c.l.b16 %v728
        %v850 = vunpack.c.l.b16 %v729
        %v851 = vpack.c.b16 %v848, %v847
        %v852 = vpack.c.b16 %v850, %v849
        %vm855 = vcmask 261120
        %v857 = vsel %vm855, %v827, 0
        %v860 = vsel %vm855, %v828, 0
        %v863 = vsel %vm855, %v829, 0
        %v866 = vsel %vm855, %v830, 0
        %v869 = vsel %vm855, %v831, 0
        %v872 = vsel %vm855, %v832, 0
        %v875 = vsel %vm855, %v833, 0
        %v878 = vsel %vm855, %v834, 0
        %v881 = vsel %vm855, %v835, 0
        %v884 = vsel %vm855, %v836, 0
        %v887 = vsel %vm855, %v837, 0
        %v890 = vsel %vm855, %v838, 0
        %v893 = vsel %vm855, %v839, 0
        %v896 = vsel %vm855, %v840, 0
        %v899 = vsel %vm855, %v841, 0
        %v902 = vsel %vm855, %v842, 0
        %904 = vmatprep.subr.bf16.mxu0 0
        %905 = vmatpush1.bf16.msra.mxu0 0
        %906 = vmatprep.subr.bf16.mxu0 0
        %907 = vmatpush1.bf16.msra.mxu0 0
        %908 = vmatprep.subr.bf16.mxu0 0
        %909 = vmatpush1.bf16.msra.mxu0 0
        %910 = vmatprep.subr.bf16.mxu0 0
        %911 = vmatpush1.bf16.msra.mxu0 0
        %912 = vmatprep.subr.bf16.mxu0 0
        %913 = vmatpush1.bf16.msra.mxu0 0
        %914 = vmatprep.subr.bf16.mxu0 0
        %915 = vmatpush1.bf16.msra.mxu0 0
        %916 = vmatprep.subr.bf16.mxu0 0
        %917 = vmatpush1.bf16.msra.mxu0 %v852
        %918 = vmatprep.subr.bf16.mxu0 0
        %919 = vmatpush1.bf16.msra.mxu0 %v851
        %920 = vmatprep.subr.bf16.mxu0 0
        %921 = vmatpush2.bf16.msra.mxu0 0
        %922 = vmatprep.subr.bf16.mxu0 0
        %923 = vmatpush2.bf16.msra.mxu0 0
        %924 = vmatprep.subr.bf16.mxu0 0
        %925 = vmatpush2.bf16.msra.mxu0 0
        %926 = vmatprep.subr.bf16.mxu0 0
        %927 = vmatpush2.bf16.msra.mxu0 0
        %928 = vmatprep.subr.bf16.mxu0 0
        %929 = vmatpush2.bf16.msra.mxu0 0
        %930 = vmatprep.subr.bf16.mxu0 0
        %931 = vmatpush2.bf16.msra.mxu0 0
        %932 = vmatprep.subr.bf16.mxu0 0
        %933 = vmatpush2.bf16.msra.mxu0 0
        %934 = vmatprep.subr.bf16.mxu0 0
        %935 = vmatpush2.bf16.msra.mxu0 0
        %936 = vmatprep.mubr.bf16.mxu0 0
        %937 = vmatmul.mubr.bf16.gmra.mxu0 %v857
        %v938 = vpop.f32.mrf.mxu0
        %v939 = vadd.f32 0.0, %v938
        %v940 = vpop.f32.mrf.mxu0
        %v941 = vpop.f32.mrf.mxu0
        %v942 = vadd.f32 0.0, %v941
        %v943 = vpop.f32.mrf.mxu0
        %944 = vmatprep.mubr.bf16.mxu0 0
        %945 = vmatmul.mubr.bf16.gmra.mxu0 %v860
        %v946 = vpop.f32.mrf.mxu0
        %v947 = vadd.f32 0.0, %v946
        %v948 = vpop.f32.mrf.mxu0
        %v949 = vpop.f32.mrf.mxu0
        %v950 = vadd.f32 0.0, %v949
        %v951 = vpop.f32.mrf.mxu0
        %952 = vmatprep.mubr.bf16.mxu0 0
        %953 = vmatmul.mubr.bf16.gmra.mxu0 %v863
        %v954 = vpop.f32.mrf.mxu0
        %v955 = vadd.f32 0.0, %v954
        %v956 = vpop.f32.mrf.mxu0
        %v957 = vpop.f32.mrf.mxu0
        %v958 = vadd.f32 0.0, %v957
        %v959 = vpop.f32.mrf.mxu0
        %960 = vmatprep.mubr.bf16.mxu0 0
        %961 = vmatmul.mubr.bf16.gmra.mxu0 %v866
        %v962 = vpop.f32.mrf.mxu0
        %v963 = vadd.f32 0.0, %v962
        %v964 = vpop.f32.mrf.mxu0
        %v965 = vpop.f32.mrf.mxu0
        %v966 = vadd.f32 0.0, %v965
        %v967 = vpop.f32.mrf.mxu0
        %968 = vmatprep.mubr.bf16.mxu0 0
        %969 = vmatmul.mubr.bf16.gmra.mxu0 %v869
        %v970 = vpop.f32.mrf.mxu0
        %v971 = vadd.f32 0.0, %v970
        %v972 = vpop.f32.mrf.mxu0
        %v973 = vpop.f32.mrf.mxu0
        %v974 = vadd.f32 0.0, %v973
        %v975 = vpop.f32.mrf.mxu0
        %976 = vmatprep.mubr.bf16.mxu0 0
        %977 = vmatmul.mubr.bf16.gmra.mxu0 %v872
        %v978 = vpop.f32.mrf.mxu0
        %v979 = vadd.f32 0.0, %v978
        %v980 = vpop.f32.mrf.mxu0
        %v981 = vpop.f32.mrf.mxu0
        %v982 = vadd.f32 0.0, %v981
        %v983 = vpop.f32.mrf.mxu0
        %984 = vmatprep.mubr.bf16.mxu0 0
        %985 = vmatmul.mubr.bf16.gmra.mxu0 %v875
        %v986 = vpop.f32.mrf.mxu0
        %v987 = vadd.f32 0.0, %v986
        %v988 = vpop.f32.mrf.mxu0
        %v989 = vpop.f32.mrf.mxu0
        %v990 = vadd.f32 0.0, %v989
        %v991 = vpop.f32.mrf.mxu0
        %992 = vmatprep.mubr.bf16.mxu0 0
        %993 = vmatmul.mubr.bf16.gmra.mxu0 %v878
        %v994 = vpop.f32.mrf.mxu0
        %v995 = vadd.f32 0.0, %v994
        %v996 = vpop.f32.mrf.mxu0
        %v997 = vpop.f32.mrf.mxu0
        %v998 = vadd.f32 0.0, %v997
        %v999 = vpop.f32.mrf.mxu0
        %1000 = vmatprep.mubr.bf16.mxu0 0
        %1001 = vmatmul.mubr.bf16.gmra.mxu0 %v881
        %v1002 = vpop.f32.mrf.mxu0
        %v1003 = vadd.f32 0.0, %v1002
        %v1004 = vpop.f32.mrf.mxu0
        %v1005 = vpop.f32.mrf.mxu0
        %v1006 = vadd.f32 0.0, %v1005
        %v1007 = vpop.f32.mrf.mxu0
        %1008 = vmatprep.mubr.bf16.mxu0 0
        %1009 = vmatmul.mubr.bf16.gmra.mxu0 %v884
        %v1010 = vpop.f32.mrf.mxu0
        %v1011 = vadd.f32 0.0, %v1010
        %v1012 = vpop.f32.mrf.mxu0
        %v1013 = vpop.f32.mrf.mxu0
        %v1014 = vadd.f32 0.0, %v1013
        %v1015 = vpop.f32.mrf.mxu0
        %1016 = vmatprep.mubr.bf16.mxu0 0
        %1017 = vmatmul.mubr.bf16.gmra.mxu0 %v887
        %v1018 = vpop.f32.mrf.mxu0
        %v1019 = vadd.f32 0.0, %v1018
        %v1020 = vpop.f32.mrf.mxu0
        %v1021 = vpop.f32.mrf.mxu0
        %v1022 = vadd.f32 0.0, %v1021
        %v1023 = vpop.f32.mrf.mxu0
        %1024 = vmatprep.mubr.bf16.mxu0 0
        %1025 = vmatmul.mubr.bf16.gmra.mxu0 %v890
        %v1026 = vpop.f32.mrf.mxu0
        %v1027 = vadd.f32 0.0, %v1026
        %v1028 = vpop.f32.mrf.mxu0
        %v1029 = vpop.f32.mrf.mxu0
        %v1030 = vadd.f32 0.0, %v1029
        %v1031 = vpop.f32.mrf.mxu0
        %1032 = vmatprep.mubr.bf16.mxu0 0
        %1033 = vmatmul.mubr.bf16.gmra.mxu0 %v893
        %v1034 = vpop.f32.mrf.mxu0
        %v1035 = vadd.f32 0.0, %v1034
        %v1036 = vpop.f32.mrf.mxu0
        %v1037 = vpop.f32.mrf.mxu0
        %v1038 = vadd.f32 0.0, %v1037
        %v1039 = vpop.f32.mrf.mxu0
        %1040 = vmatprep.mubr.bf16.mxu0 0
        %1041 = vmatmul.mubr.bf16.gmra.mxu0 %v896
        %v1042 = vpop.f32.mrf.mxu0
        %v1043 = vadd.f32 0.0, %v1042
        %v1044 = vpop.f32.mrf.mxu0
        %v1045 = vpop.f32.mrf.mxu0
        %v1046 = vadd.f32 0.0, %v1045
        %v1047 = vpop.f32.mrf.mxu0
        %1048 = vmatprep.mubr.bf16.mxu0 0
        %1049 = vmatmul.mubr.bf16.gmra.mxu0 %v899
        %v1050 = vpop.f32.mrf.mxu0
        %v1051 = vadd.f32 0.0, %v1050
        %v1052 = vpop.f32.mrf.mxu0
        %v1053 = vpop.f32.mrf.mxu0
        %v1054 = vadd.f32 0.0, %v1053
        %v1055 = vpop.f32.mrf.mxu0
        %1056 = vmatprep.mubr.bf16.mxu0 0
        %1057 = vmatmul.mubr.bf16.gmra.mxu0 %v902
        %v1058 = vpop.f32.mrf.mxu0
        %v1059 = vadd.f32 0.0, %v1058
        %v1060 = vpop.f32.mrf.mxu0
        %v1061 = vpop.f32.mrf.mxu0
        %v1062 = vadd.f32 0.0, %v1061
        %v1063 = vpop.f32.mrf.mxu0
        %1064 = vdwg.mxu0
        %vm1065 = vcmp.gt.f32.partialorder %v939, 0.0
        %vm1066 = vcmp.gt.f32.partialorder %v942, 0.0
        %vm1067 = vcmp.gt.f32.partialorder %v947, 0.0
        %vm1068 = vcmp.gt.f32.partialorder %v950, 0.0
        %vm1069 = vcmp.gt.f32.partialorder %v955, 0.0
        %vm1070 = vcmp.gt.f32.partialorder %v958, 0.0
        %vm1071 = vcmp.gt.f32.partialorder %v963, 0.0
        %vm1072 = vcmp.gt.f32.partialorder %v966, 0.0
        %vm1073 = vcmp.gt.f32.partialorder %v971, 0.0
        %vm1074 = vcmp.gt.f32.partialorder %v974, 0.0
        %vm1075 = vcmp.gt.f32.partialorder %v979, 0.0
        %vm1076 = vcmp.gt.f32.partialorder %v982, 0.0
        %vm1077 = vcmp.gt.f32.partialorder %v987, 0.0
        %vm1078 = vcmp.gt.f32.partialorder %v990, 0.0
        %vm1079 = vcmp.gt.f32.partialorder %v995, 0.0
        %vm1080 = vcmp.gt.f32.partialorder %v998, 0.0
        %vm1081 = vcmp.gt.f32.partialorder %v1003, 0.0
        %vm1082 = vcmp.gt.f32.partialorder %v1006, 0.0
        %vm1083 = vcmp.gt.f32.partialorder %v1011, 0.0
        %vm1084 = vcmp.gt.f32.partialorder %v1014, 0.0
        %vm1085 = vcmp.gt.f32.partialorder %v1019, 0.0
        %vm1086 = vcmp.gt.f32.partialorder %v1022, 0.0
        %vm1087 = vcmp.gt.f32.partialorder %v1027, 0.0
        %vm1088 = vcmp.gt.f32.partialorder %v1030, 0.0
        %vm1089 = vcmp.gt.f32.partialorder %v1035, 0.0
        %vm1090 = vcmp.gt.f32.partialorder %v1038, 0.0
        %vm1091 = vcmp.gt.f32.partialorder %v1043, 0.0
        %vm1092 = vcmp.gt.f32.partialorder %v1046, 0.0
        %vm1093 = vcmp.gt.f32.partialorder %v1051, 0.0
        %vm1094 = vcmp.gt.f32.partialorder %v1054, 0.0
        %vm1095 = vcmp.gt.f32.partialorder %v1059, 0.0
        %vm1096 = vcmp.gt.f32.partialorder %v1062, 0.0
        %v1097 = vmul.f32 %v939, 0.01
        %v1098 = vmul.f32 %v942, 0.01
        %v1099 = vmul.f32 %v947, 0.01
        %v1100 = vmul.f32 %v950, 0.01
        %v1101 = vmul.f32 %v955, 0.01
        %v1102 = vmul.f32 %v958, 0.01
        %v1103 = vmul.f32 %v963, 0.01
        %v1104 = vmul.f32 %v966, 0.01
        %v1105 = vmul.f32 %v971, 0.01
        %v1106 = vmul.f32 %v974, 0.01
        %v1107 = vmul.f32 %v979, 0.01
        %v1108 = vmul.f32 %v982, 0.01
        %v1109 = vmul.f32 %v987, 0.01
        %v1110 = vmul.f32 %v990, 0.01
        %v1111 = vmul.f32 %v995, 0.01
        %v1112 = vmul.f32 %v998, 0.01
        %v1113 = vmul.f32 %v1003, 0.01
        %v1114 = vmul.f32 %v1006, 0.01
        %v1115 = vmul.f32 %v1011, 0.01
        %v1116 = vmul.f32 %v1014, 0.01
        %v1117 = vmul.f32 %v1019, 0.01
        %v1118 = vmul.f32 %v1022, 0.01
        %v1119 = vmul.f32 %v1027, 0.01
        %v1120 = vmul.f32 %v1030, 0.01
        %v1121 = vmul.f32 %v1035, 0.01
        %v1122 = vmul.f32 %v1038, 0.01
        %v1123 = vmul.f32 %v1043, 0.01
        %v1124 = vmul.f32 %v1046, 0.01
        %v1125 = vmul.f32 %v1051, 0.01
        %v1126 = vmul.f32 %v1054, 0.01
        %v1127 = vmul.f32 %v1059, 0.01
        %v1128 = vmul.f32 %v1062, 0.01
        %v1129 = vsel %vm1065, %v939, %v1097
        %v1130 = vsel %vm1066, %v942, %v1098
        %v1131 = vsel %vm1067, %v947, %v1099
        %v1132 = vsel %vm1068, %v950, %v1100
        %v1133 = vsel %vm1069, %v955, %v1101
        %v1134 = vsel %vm1070, %v958, %v1102
        %v1135 = vsel %vm1071, %v963, %v1103
        %v1136 = vsel %vm1072, %v966, %v1104
        %v1137 = vsel %vm1073, %v971, %v1105
        %v1138 = vsel %vm1074, %v974, %v1106
        %v1139 = vsel %vm1075, %v979, %v1107
        %v1140 = vsel %vm1076, %v982, %v1108
        %v1141 = vsel %vm1077, %v987, %v1109
        %v1142 = vsel %vm1078, %v990, %v1110
        %v1143 = vsel %vm1079, %v995, %v1111
        %v1144 = vsel %vm1080, %v998, %v1112
        %v1145 = vsel %vm1081, %v1003, %v1113
        %v1146 = vsel %vm1082, %v1006, %v1114
        %v1147 = vsel %vm1083, %v1011, %v1115
        %v1148 = vsel %vm1084, %v1014, %v1116
        %v1149 = vsel %vm1085, %v1019, %v1117
        %v1150 = vsel %vm1086, %v1022, %v1118
        %v1151 = vsel %vm1087, %v1027, %v1119
        %v1152 = vsel %vm1088, %v1030, %v1120
        %v1153 = vsel %vm1089, %v1035, %v1121
        %v1154 = vsel %vm1090, %v1038, %v1122
        %v1155 = vsel %vm1091, %v1043, %v1123
        %v1156 = vsel %vm1092, %v1046, %v1124
        %v1157 = vsel %vm1093, %v1051, %v1125
        %v1158 = vsel %vm1094, %v1054, %v1126
        %v1159 = vsel %vm1095, %v1059, %v1127
        %v1160 = vsel %vm1096, %v1062, %v1128
        %v1162 = vlaneseq
        %v1163 = vshrl.u32 %v1162, 7
        %v1164 = vsub.s32 0, %v1163
        %v1165 = vrot.slane %v730, %v1164
        %v1167 = vmul.f32 %v1129, %v1165
        %v1168 = vmul.f32 %v1130, %v1165
        %v1169 = vmul.f32 %v1131, %v1165
        %v1170 = vmul.f32 %v1132, %v1165
        %v1171 = vmul.f32 %v1133, %v1165
        %v1172 = vmul.f32 %v1134, %v1165
        %v1173 = vmul.f32 %v1135, %v1165
        %v1174 = vmul.f32 %v1136, %v1165
        %v1175 = vmul.f32 %v1137, %v1165
        %v1176 = vmul.f32 %v1138, %v1165
        %v1177 = vmul.f32 %v1139, %v1165
        %v1178 = vmul.f32 %v1140, %v1165
        %v1179 = vmul.f32 %v1141, %v1165
        %v1180 = vmul.f32 %v1142, %v1165
        %v1181 = vmul.f32 %v1143, %v1165
        %v1182 = vmul.f32 %v1144, %v1165
        %v1183 = vmul.f32 %v1145, %v1165
        %v1184 = vmul.f32 %v1146, %v1165
        %v1185 = vmul.f32 %v1147, %v1165
        %v1186 = vmul.f32 %v1148, %v1165
        %v1187 = vmul.f32 %v1149, %v1165
        %v1188 = vmul.f32 %v1150, %v1165
        %v1189 = vmul.f32 %v1151, %v1165
        %v1190 = vmul.f32 %v1152, %v1165
        %v1191 = vmul.f32 %v1153, %v1165
        %v1192 = vmul.f32 %v1154, %v1165
        %v1193 = vmul.f32 %v1155, %v1165
        %v1194 = vmul.f32 %v1156, %v1165
        %v1195 = vmul.f32 %v1157, %v1165
        %v1196 = vmul.f32 %v1158, %v1165
        %v1197 = vmul.f32 %v1159, %v1165
        %v1198 = vmul.f32 %v1160, %v1165
        %v1199 = vsel %vm855, %v1167, 0.0
        %1200 = vadd.xlane.f32.xlu0 %v1199
        %v1201 = vpop.xlane.xlu0 %1200
        %v1202 = vsel %vm855, %v1168, 0.0
        %1203 = vadd.xlane.f32.xlu0 %v1202
        %v1204 = vpop.xlane.xlu0 %1203
        %v1205 = vsel %vm855, %v1169, 0.0
        %1206 = vadd.xlane.f32.xlu0 %v1205
        %v1207 = vpop.xlane.xlu0 %1206
        %v1208 = vsel %vm855, %v1170, 0.0
        %1209 = vadd.xlane.f32.xlu0 %v1208
        %v1210 = vpop.xlane.xlu0 %1209
        %v1211 = vsel %vm855, %v1171, 0.0
        %1212 = vadd.xlane.f32.xlu0 %v1211
        %v1213 = vpop.xlane.xlu0 %1212
        %v1214 = vsel %vm855, %v1172, 0.0
        %1215 = vadd.xlane.f32.xlu0 %v1214
        %v1216 = vpop.xlane.xlu0 %1215
        %v1217 = vsel %vm855, %v1173, 0.0
        %1218 = vadd.xlane.f32.xlu0 %v1217
        %v1219 = vpop.xlane.xlu0 %1218
        %v1220 = vsel %vm855, %v1174, 0.0
        %1221 = vadd.xlane.f32.xlu0 %v1220
        %v1222 = vpop.xlane.xlu0 %1221
        %v1223 = vsel %vm855, %v1175, 0.0
        %1224 = vadd.xlane.f32.xlu0 %v1223
        %v1225 = vpop.xlane.xlu0 %1224
        %v1226 = vsel %vm855, %v1176, 0.0
        %1227 = vadd.xlane.f32.xlu0 %v1226
        %v1228 = vpop.xlane.xlu0 %1227
        %v1229 = vsel %vm855, %v1177, 0.0
        %1230 = vadd.xlane.f32.xlu0 %v1229
        %v1231 = vpop.xlane.xlu0 %1230
        %v1232 = vsel %vm855, %v1178, 0.0
        %1233 = vadd.xlane.f32.xlu0 %v1232
        %v1234 = vpop.xlane.xlu0 %1233
        %v1235 = vsel %vm855, %v1179, 0.0
        %1236 = vadd.xlane.f32.xlu0 %v1235
        %v1237 = vpop.xlane.xlu0 %1236
        %v1238 = vsel %vm855, %v1180, 0.0
        %1239 = vadd.xlane.f32.xlu0 %v1238
        %v1240 = vpop.xlane.xlu0 %1239
        %v1241 = vsel %vm855, %v1181, 0.0
        %1242 = vadd.xlane.f32.xlu0 %v1241
        %v1243 = vpop.xlane.xlu0 %1242
        %v1244 = vsel %vm855, %v1182, 0.0
        %1245 = vadd.xlane.f32.xlu0 %v1244
        %v1246 = vpop.xlane.xlu0 %1245
        %v1247 = vsel %vm855, %v1183, 0.0
        %1248 = vadd.xlane.f32.xlu0 %v1247
        %v1249 = vpop.xlane.xlu0 %1248
        %v1250 = vsel %vm855, %v1184, 0.0
        %1251 = vadd.xlane.f32.xlu0 %v1250
        %v1252 = vpop.xlane.xlu0 %1251
        %v1253 = vsel %vm855, %v1185, 0.0
        %1254 = vadd.xlane.f32.xlu0 %v1253
        %v1255 = vpop.xlane.xlu0 %1254
        %v1256 = vsel %vm855, %v1186, 0.0
        %1257 = vadd.xlane.f32.xlu0 %v1256
        %v1258 = vpop.xlane.xlu0 %1257
        %v1259 = vsel %vm855, %v1187, 0.0
        %1260 = vadd.xlane.f32.xlu0 %v1259
        %v1261 = vpop.xlane.xlu0 %1260
        %v1262 = vsel %vm855, %v1188, 0.0
        %1263 = vadd.xlane.f32.xlu0 %v1262
        %v1264 = vpop.xlane.xlu0 %1263
        %v1265 = vsel %vm855, %v1189, 0.0
        %1266 = vadd.xlane.f32.xlu0 %v1265
        %v1267 = vpop.xlane.xlu0 %1266
        %v1268 = vsel %vm855, %v1190, 0.0
        %1269 = vadd.xlane.f32.xlu0 %v1268
        %v1270 = vpop.xlane.xlu0 %1269
        %v1271 = vsel %vm855, %v1191, 0.0
        %1272 = vadd.xlane.f32.xlu0 %v1271
        %v1273 = vpop.xlane.xlu0 %1272
        %v1274 = vsel %vm855, %v1192, 0.0
        %1275 = vadd.xlane.f32.xlu0 %v1274
        %v1276 = vpop.xlane.xlu0 %1275
        %v1277 = vsel %vm855, %v1193, 0.0
        %1278 = vadd.xlane.f32.xlu0 %v1277
        %v1279 = vpop.xlane.xlu0 %1278
        %v1280 = vsel %vm855, %v1194, 0.0
        %1281 = vadd.xlane.f32.xlu0 %v1280
        %v1282 = vpop.xlane.xlu0 %1281
        %v1283 = vsel %vm855, %v1195, 0.0
        %1284 = vadd.xlane.f32.xlu0 %v1283
        %v1285 = vpop.xlane.xlu0 %1284
        %v1286 = vsel %vm855, %v1196, 0.0
        %1287 = vadd.xlane.f32.xlu0 %v1286
        %v1288 = vpop.xlane.xlu0 %1287
        %v1289 = vsel %vm855, %v1197, 0.0
        %1290 = vadd.xlane.f32.xlu0 %v1289
        %v1291 = vpop.xlane.xlu0 %1290
        %v1292 = vsel %vm855, %v1198, 0.0
        %1293 = vadd.xlane.f32.xlu0 %v1292
        %v1294 = vpop.xlane.xlu0 %1293
        %s1295 = scalar_lea.vmem %s697, 128 [#allocation2]
        %v1296 = vld [vmem:[%s1295] sm:$0xf]
        %v1297 = vld [vmem:[%s1295 + $0x4] sm:$0xf]
        %v1298 = vld [vmem:[%s1295 + $0x8] sm:$0xf]
        %v1299 = vld [vmem:[%s1295 + $0xc] sm:$0xf]
        %v1300 = vld [vmem:[%s1295 + $0x10] sm:$0xf]
        %v1301 = vld [vmem:[%s1295 + $0x14] sm:$0xf]
        %v1302 = vld [vmem:[%s1295 + $0x18] sm:$0xf]
        %v1303 = vld [vmem:[%s1295 + $0x1c] sm:$0xf]
        %v1304 = vld [vmem:[%s1295 + $0x20] sm:$0xf]
        %v1305 = vld [vmem:[%s1295 + $0x24] sm:$0xf]
        %v1306 = vld [vmem:[%s1295 + $0x28] sm:$0xf]
        %v1307 = vld [vmem:[%s1295 + $0x2c] sm:$0xf]
        %v1308 = vld [vmem:[%s1295 + $0x30] sm:$0xf]
        %v1309 = vld [vmem:[%s1295 + $0x34] sm:$0xf]
        %v1310 = vld [vmem:[%s1295 + $0x38] sm:$0xf]
        %v1311 = vld [vmem:[%s1295 + $0x3c] sm:$0xf]
        %v1312 = vld [vmem:[%s1295 + $0x40] sm:$0xf]
        %v1313 = vld [vmem:[%s1295 + $0x44] sm:$0xf]
        %v1314 = vld [vmem:[%s1295 + $0x48] sm:$0xf]
        %v1315 = vld [vmem:[%s1295 + $0x4c] sm:$0xf]
        %v1316 = vld [vmem:[%s1295 + $0x50] sm:$0xf]
        %v1317 = vld [vmem:[%s1295 + $0x54] sm:$0xf]
        %v1318 = vld [vmem:[%s1295 + $0x58] sm:$0xf]
        %v1319 = vld [vmem:[%s1295 + $0x5c] sm:$0xf]
        %v1320 = vld [vmem:[%s1295 + $0x60] sm:$0xf]
        %v1321 = vld [vmem:[%s1295 + $0x64] sm:$0xf]
        %v1322 = vld [vmem:[%s1295 + $0x68] sm:$0xf]
        %v1323 = vld [vmem:[%s1295 + $0x6c] sm:$0xf]
        %v1324 = vld [vmem:[%s1295 + $0x70] sm:$0xf]
        %v1325 = vld [vmem:[%s1295 + $0x74] sm:$0xf]
        %v1326 = vld [vmem:[%s1295 + $0x78] sm:$0xf]
        %v1327 = vld [vmem:[%s1295 + $0x7c] sm:$0xf]
        %v1360 = vunpack.c.l.b16 %v1296
        %v1361 = vunpack.c.l.b16 %v1297
        %v1362 = vunpack.c.l.b16 %v1298
        %v1363 = vunpack.c.l.b16 %v1299
        %v1364 = vunpack.c.l.b16 %v1300
        %v1365 = vunpack.c.l.b16 %v1301
        %v1366 = vunpack.c.l.b16 %v1302
        %v1367 = vunpack.c.l.b16 %v1303
        %v1368 = vunpack.c.l.b16 %v1304
        %v1369 = vunpack.c.l.b16 %v1305
        %v1370 = vunpack.c.l.b16 %v1306
        %v1371 = vunpack.c.l.b16 %v1307
        %v1372 = vunpack.c.l.b16 %v1308
        %v1373 = vunpack.c.l.b16 %v1309
        %v1374 = vunpack.c.l.b16 %v1310
        %v1375 = vunpack.c.l.b16 %v1311
        %v1376 = vunpack.c.l.b16 %v1312
        %v1377 = vunpack.c.l.b16 %v1313
        %v1378 = vunpack.c.l.b16 %v1314
        %v1379 = vunpack.c.l.b16 %v1315
        %v1380 = vunpack.c.l.b16 %v1316
        %v1381 = vunpack.c.l.b16 %v1317
        %v1382 = vunpack.c.l.b16 %v1318
        %v1383 = vunpack.c.l.b16 %v1319
        %v1384 = vunpack.c.l.b16 %v1320
        %v1385 = vunpack.c.l.b16 %v1321
        %v1386 = vunpack.c.l.b16 %v1322
        %v1387 = vunpack.c.l.b16 %v1323
        %v1388 = vunpack.c.l.b16 %v1324
        %v1389 = vunpack.c.l.b16 %v1325
        %v1390 = vunpack.c.l.b16 %v1326
        %v1391 = vunpack.c.l.b16 %v1327
        %v1392 = vpack.c.b16 %v1361, %v1360
        %v1393 = vpack.c.b16 %v1363, %v1362
        %v1394 = vpack.c.b16 %v1365, %v1364
        %v1395 = vpack.c.b16 %v1367, %v1366
        %v1396 = vpack.c.b16 %v1369, %v1368
        %v1397 = vpack.c.b16 %v1371, %v1370
        %v1398 = vpack.c.b16 %v1373, %v1372
        %v1399 = vpack.c.b16 %v1375, %v1374
        %v1400 = vpack.c.b16 %v1377, %v1376
        %v1401 = vpack.c.b16 %v1379, %v1378
        %v1402 = vpack.c.b16 %v1381, %v1380
        %v1403 = vpack.c.b16 %v1383, %v1382
        %v1404 = vpack.c.b16 %v1385, %v1384
        %v1405 = vpack.c.b16 %v1387, %v1386
        %v1406 = vpack.c.b16 %v1389, %v1388
        %v1407 = vpack.c.b16 %v1391, %v1390
        %v1409 = vsel %vm855, %v1392, 0
        %v1412 = vsel %vm855, %v1393, 0
        %v1415 = vsel %vm855, %v1394, 0
        %v1418 = vsel %vm855, %v1395, 0
        %v1421 = vsel %vm855, %v1396, 0
        %v1424 = vsel %vm855, %v1397, 0
        %v1427 = vsel %vm855, %v1398, 0
        %v1430 = vsel %vm855, %v1399, 0
        %v1433 = vsel %vm855, %v1400, 0
        %v1436 = vsel %vm855, %v1401, 0
        %v1439 = vsel %vm855, %v1402, 0
        %v1442 = vsel %vm855, %v1403, 0
        %v1445 = vsel %vm855, %v1404, 0
        %v1448 = vsel %vm855, %v1405, 0
        %v1451 = vsel %vm855, %v1406, 0
        %v1454 = vsel %vm855, %v1407, 0
        %1456 = vmatprep.subr.bf16.mxu0 0
        %1457 = vmatpush1.bf16.msra.mxu0 0
        %1458 = vmatprep.subr.bf16.mxu0 0
        %1459 = vmatpush1.bf16.msra.mxu0 0
        %1460 = vmatprep.subr.bf16.mxu0 0
        %1461 = vmatpush1.bf16.msra.mxu0 0
        %1462 = vmatprep.subr.bf16.mxu0 0
        %1463 = vmatpush1.bf16.msra.mxu0 0
        %1464 = vmatprep.subr.bf16.mxu0 0
        %1465 = vmatpush1.bf16.msra.mxu0 0
        %1466 = vmatprep.subr.bf16.mxu0 0
        %1467 = vmatpush1.bf16.msra.mxu0 0
        %1468 = vmatprep.subr.bf16.mxu0 0
        %1469 = vmatpush1.bf16.msra.mxu0 %v852
        %1470 = vmatprep.subr.bf16.mxu0 0
        %1471 = vmatpush1.bf16.msra.mxu0 %v851
        %1472 = vmatprep.subr.bf16.mxu0 0
        %1473 = vmatpush2.bf16.msra.mxu0 0
        %1474 = vmatprep.subr.bf16.mxu0 0
        %1475 = vmatpush2.bf16.msra.mxu0 0
        %1476 = vmatprep.subr.bf16.mxu0 0
        %1477 = vmatpush2.bf16.msra.mxu0 0
        %1478 = vmatprep.subr.bf16.mxu0 0
        %1479 = vmatpush2.bf16.msra.mxu0 0
        %1480 = vmatprep.subr.bf16.mxu0 0
        %1481 = vmatpush2.bf16.msra.mxu0 0
        %1482 = vmatprep.subr.bf16.mxu0 0
        %1483 = vmatpush2.bf16.msra.mxu0 0
        %1484 = vmatprep.subr.bf16.mxu0 0
        %1485 = vmatpush2.bf16.msra.mxu0 0
        %1486 = vmatprep.subr.bf16.mxu0 0
        %1487 = vmatpush2.bf16.msra.mxu0 0
        %1488 = vmatprep.mubr.bf16.mxu0 0
        %1489 = vmatmul.mubr.bf16.gmra.mxu0 %v1409
        %v1490 = vpop.f32.mrf.mxu0
        %v1491 = vadd.f32 0.0, %v1490
        %v1492 = vpop.f32.mrf.mxu0
        %v1493 = vpop.f32.mrf.mxu0
        %v1494 = vadd.f32 0.0, %v1493
        %v1495 = vpop.f32.mrf.mxu0
        %1496 = vmatprep.mubr.bf16.mxu0 0
        %1497 = vmatmul.mubr.bf16.gmra.mxu0 %v1412
        %v1498 = vpop.f32.mrf.mxu0
        %v1499 = vadd.f32 0.0, %v1498
        %v1500 = vpop.f32.mrf.mxu0
        %v1501 = vpop.f32.mrf.mxu0
        %v1502 = vadd.f32 0.0, %v1501
        %v1503 = vpop.f32.mrf.mxu0
        %1504 = vmatprep.mubr.bf16.mxu0 0
        %1505 = vmatmul.mubr.bf16.gmra.mxu0 %v1415
        %v1506 = vpop.f32.mrf.mxu0
        %v1507 = vadd.f32 0.0, %v1506
        %v1508 = vpop.f32.mrf.mxu0
        %v1509 = vpop.f32.mrf.mxu0
        %v1510 = vadd.f32 0.0, %v1509
        %v1511 = vpop.f32.mrf.mxu0
        %1512 = vmatprep.mubr.bf16.mxu0 0
        %1513 = vmatmul.mubr.bf16.gmra.mxu0 %v1418
        %v1514 = vpop.f32.mrf.mxu0
        %v1515 = vadd.f32 0.0, %v1514
        %v1516 = vpop.f32.mrf.mxu0
        %v1517 = vpop.f32.mrf.mxu0
        %v1518 = vadd.f32 0.0, %v1517
        %v1519 = vpop.f32.mrf.mxu0
        %1520 = vmatprep.mubr.bf16.mxu0 0
        %1521 = vmatmul.mubr.bf16.gmra.mxu0 %v1421
        %v1522 = vpop.f32.mrf.mxu0
        %v1523 = vadd.f32 0.0, %v1522
        %v1524 = vpop.f32.mrf.mxu0
        %v1525 = vpop.f32.mrf.mxu0
        %v1526 = vadd.f32 0.0, %v1525
        %v1527 = vpop.f32.mrf.mxu0
        %1528 = vmatprep.mubr.bf16.mxu0 0
        %1529 = vmatmul.mubr.bf16.gmra.mxu0 %v1424
        %v1530 = vpop.f32.mrf.mxu0
        %v1531 = vadd.f32 0.0, %v1530
        %v1532 = vpop.f32.mrf.mxu0
        %v1533 = vpop.f32.mrf.mxu0
        %v1534 = vadd.f32 0.0, %v1533
        %v1535 = vpop.f32.mrf.mxu0
        %1536 = vmatprep.mubr.bf16.mxu0 0
        %1537 = vmatmul.mubr.bf16.gmra.mxu0 %v1427
        %v1538 = vpop.f32.mrf.mxu0
        %v1539 = vadd.f32 0.0, %v1538
        %v1540 = vpop.f32.mrf.mxu0
        %v1541 = vpop.f32.mrf.mxu0
        %v1542 = vadd.f32 0.0, %v1541
        %v1543 = vpop.f32.mrf.mxu0
        %1544 = vmatprep.mubr.bf16.mxu0 0
        %1545 = vmatmul.mubr.bf16.gmra.mxu0 %v1430
        %v1546 = vpop.f32.mrf.mxu0
        %v1547 = vadd.f32 0.0, %v1546
        %v1548 = vpop.f32.mrf.mxu0
        %v1549 = vpop.f32.mrf.mxu0
        %v1550 = vadd.f32 0.0, %v1549
        %v1551 = vpop.f32.mrf.mxu0
        %1552 = vmatprep.mubr.bf16.mxu0 0
        %1553 = vmatmul.mubr.bf16.gmra.mxu0 %v1433
        %v1554 = vpop.f32.mrf.mxu0
        %v1555 = vadd.f32 0.0, %v1554
        %v1556 = vpop.f32.mrf.mxu0
        %v1557 = vpop.f32.mrf.mxu0
        %v1558 = vadd.f32 0.0, %v1557
        %v1559 = vpop.f32.mrf.mxu0
        %1560 = vmatprep.mubr.bf16.mxu0 0
        %1561 = vmatmul.mubr.bf16.gmra.mxu0 %v1436
        %v1562 = vpop.f32.mrf.mxu0
        %v1563 = vadd.f32 0.0, %v1562
        %v1564 = vpop.f32.mrf.mxu0
        %v1565 = vpop.f32.mrf.mxu0
        %v1566 = vadd.f32 0.0, %v1565
        %v1567 = vpop.f32.mrf.mxu0
        %1568 = vmatprep.mubr.bf16.mxu0 0
        %1569 = vmatmul.mubr.bf16.gmra.mxu0 %v1439
        %v1570 = vpop.f32.mrf.mxu0
        %v1571 = vadd.f32 0.0, %v1570
        %v1572 = vpop.f32.mrf.mxu0
        %v1573 = vpop.f32.mrf.mxu0
        %v1574 = vadd.f32 0.0, %v1573
        %v1575 = vpop.f32.mrf.mxu0
        %1576 = vmatprep.mubr.bf16.mxu0 0
        %1577 = vmatmul.mubr.bf16.gmra.mxu0 %v1442
        %v1578 = vpop.f32.mrf.mxu0
        %v1579 = vadd.f32 0.0, %v1578
        %v1580 = vpop.f32.mrf.mxu0
        %v1581 = vpop.f32.mrf.mxu0
        %v1582 = vadd.f32 0.0, %v1581
        %v1583 = vpop.f32.mrf.mxu0
        %1584 = vmatprep.mubr.bf16.mxu0 0
        %1585 = vmatmul.mubr.bf16.gmra.mxu0 %v1445
        %v1586 = vpop.f32.mrf.mxu0
        %v1587 = vadd.f32 0.0, %v1586
        %v1588 = vpop.f32.mrf.mxu0
        %v1589 = vpop.f32.mrf.mxu0
        %v1590 = vadd.f32 0.0, %v1589
        %v1591 = vpop.f32.mrf.mxu0
        %1592 = vmatprep.mubr.bf16.mxu0 0
        %1593 = vmatmul.mubr.bf16.gmra.mxu0 %v1448
        %v1594 = vpop.f32.mrf.mxu0
        %v1595 = vadd.f32 0.0, %v1594
        %v1596 = vpop.f32.mrf.mxu0
        %v1597 = vpop.f32.mrf.mxu0
        %v1598 = vadd.f32 0.0, %v1597
        %v1599 = vpop.f32.mrf.mxu0
        %1600 = vmatprep.mubr.bf16.mxu0 0
        %1601 = vmatmul.mubr.bf16.gmra.mxu0 %v1451
        %v1602 = vpop.f32.mrf.mxu0
        %v1603 = vadd.f32 0.0, %v1602
        %v1604 = vpop.f32.mrf.mxu0
        %v1605 = vpop.f32.mrf.mxu0
        %v1606 = vadd.f32 0.0, %v1605
        %v1607 = vpop.f32.mrf.mxu0
        %1608 = vmatprep.mubr.bf16.mxu0 0
        %1609 = vmatmul.mubr.bf16.gmra.mxu0 %v1454
        %v1610 = vpop.f32.mrf.mxu0
        %v1611 = vadd.f32 0.0, %v1610
        %v1612 = vpop.f32.mrf.mxu0
        %v1613 = vpop.f32.mrf.mxu0
        %v1614 = vadd.f32 0.0, %v1613
        %v1615 = vpop.f32.mrf.mxu0
        %1616 = vdwg.mxu0
        %vm1617 = vcmp.gt.f32.partialorder %v1491, 0.0
        %vm1618 = vcmp.gt.f32.partialorder %v1494, 0.0
        %vm1619 = vcmp.gt.f32.partialorder %v1499, 0.0
        %vm1620 = vcmp.gt.f32.partialorder %v1502, 0.0
        %vm1621 = vcmp.gt.f32.partialorder %v1507, 0.0
        %vm1622 = vcmp.gt.f32.partialorder %v1510, 0.0
        %vm1623 = vcmp.gt.f32.partialorder %v1515, 0.0
        %vm1624 = vcmp.gt.f32.partialorder %v1518, 0.0
        %vm1625 = vcmp.gt.f32.partialorder %v1523, 0.0
        %vm1626 = vcmp.gt.f32.partialorder %v1526, 0.0
        %vm1627 = vcmp.gt.f32.partialorder %v1531, 0.0
        %vm1628 = vcmp.gt.f32.partialorder %v1534, 0.0
        %vm1629 = vcmp.gt.f32.partialorder %v1539, 0.0
        %vm1630 = vcmp.gt.f32.partialorder %v1542, 0.0
        %vm1631 = vcmp.gt.f32.partialorder %v1547, 0.0
        %vm1632 = vcmp.gt.f32.partialorder %v1550, 0.0
        %vm1633 = vcmp.gt.f32.partialorder %v1555, 0.0
        %vm1634 = vcmp.gt.f32.partialorder %v1558, 0.0
        %vm1635 = vcmp.gt.f32.partialorder %v1563, 0.0
        %vm1636 = vcmp.gt.f32.partialorder %v1566, 0.0
        %vm1637 = vcmp.gt.f32.partialorder %v1571, 0.0
        %vm1638 = vcmp.gt.f32.partialorder %v1574, 0.0
        %vm1639 = vcmp.gt.f32.partialorder %v1579, 0.0
        %vm1640 = vcmp.gt.f32.partialorder %v1582, 0.0
        %vm1641 = vcmp.gt.f32.partialorder %v1587, 0.0
        %vm1642 = vcmp.gt.f32.partialorder %v1590, 0.0
        %vm1643 = vcmp.gt.f32.partialorder %v1595, 0.0
        %vm1644 = vcmp.gt.f32.partialorder %v1598, 0.0
        %vm1645 = vcmp.gt.f32.partialorder %v1603, 0.0
        %vm1646 = vcmp.gt.f32.partialorder %v1606, 0.0
        %vm1647 = vcmp.gt.f32.partialorder %v1611, 0.0
        %vm1648 = vcmp.gt.f32.partialorder %v1614, 0.0
        %v1649 = vmul.f32 %v1491, 0.01
        %v1650 = vmul.f32 %v1494, 0.01
        %v1651 = vmul.f32 %v1499, 0.01
        %v1652 = vmul.f32 %v1502, 0.01
        %v1653 = vmul.f32 %v1507, 0.01
        %v1654 = vmul.f32 %v1510, 0.01
        %v1655 = vmul.f32 %v1515, 0.01
        %v1656 = vmul.f32 %v1518, 0.01
        %v1657 = vmul.f32 %v1523, 0.01
        %v1658 = vmul.f32 %v1526, 0.01
        %v1659 = vmul.f32 %v1531, 0.01
        %v1660 = vmul.f32 %v1534, 0.01
        %v1661 = vmul.f32 %v1539, 0.01
        %v1662 = vmul.f32 %v1542, 0.01
        %v1663 = vmul.f32 %v1547, 0.01
        %v1664 = vmul.f32 %v1550, 0.01
        %v1665 = vmul.f32 %v1555, 0.01
        %v1666 = vmul.f32 %v1558, 0.01
        %v1667 = vmul.f32 %v1563, 0.01
        %v1668 = vmul.f32 %v1566, 0.01
        %v1669 = vmul.f32 %v1571, 0.01
        %v1670 = vmul.f32 %v1574, 0.01
        %v1671 = vmul.f32 %v1579, 0.01
        %v1672 = vmul.f32 %v1582, 0.01
        %v1673 = vmul.f32 %v1587, 0.01
        %v1674 = vmul.f32 %v1590, 0.01
        %v1675 = vmul.f32 %v1595, 0.01
        %v1676 = vmul.f32 %v1598, 0.01
        %v1677 = vmul.f32 %v1603, 0.01
        %v1678 = vmul.f32 %v1606, 0.01
        %v1679 = vmul.f32 %v1611, 0.01
        %v1680 = vmul.f32 %v1614, 0.01
        %v1681 = vsel %vm1617, %v1491, %v1649
        %v1682 = vsel %vm1618, %v1494, %v1650
        %v1683 = vsel %vm1619, %v1499, %v1651
        %v1684 = vsel %vm1620, %v1502, %v1652
        %v1685 = vsel %vm1621, %v1507, %v1653
        %v1686 = vsel %vm1622, %v1510, %v1654
        %v1687 = vsel %vm1623, %v1515, %v1655
        %v1688 = vsel %vm1624, %v1518, %v1656
        %v1689 = vsel %vm1625, %v1523, %v1657
        %v1690 = vsel %vm1626, %v1526, %v1658
        %v1691 = vsel %vm1627, %v1531, %v1659
        %v1692 = vsel %vm1628, %v1534, %v1660
        %v1693 = vsel %vm1629, %v1539, %v1661
        %v1694 = vsel %vm1630, %v1542, %v1662
        %v1695 = vsel %vm1631, %v1547, %v1663
        %v1696 = vsel %vm1632, %v1550, %v1664
        %v1697 = vsel %vm1633, %v1555, %v1665
        %v1698 = vsel %vm1634, %v1558, %v1666
        %v1699 = vsel %vm1635, %v1563, %v1667
        %v1700 = vsel %vm1636, %v1566, %v1668
        %v1701 = vsel %vm1637, %v1571, %v1669
        %v1702 = vsel %vm1638, %v1574, %v1670
        %v1703 = vsel %vm1639, %v1579, %v1671
        %v1704 = vsel %vm1640, %v1582, %v1672
        %v1705 = vsel %vm1641, %v1587, %v1673
        %v1706 = vsel %vm1642, %v1590, %v1674
        %v1707 = vsel %vm1643, %v1595, %v1675
        %v1708 = vsel %vm1644, %v1598, %v1676
        %v1709 = vsel %vm1645, %v1603, %v1677
        %v1710 = vsel %vm1646, %v1606, %v1678
        %v1711 = vsel %vm1647, %v1611, %v1679
        %v1712 = vsel %vm1648, %v1614, %v1680
        %v1713 = vmul.f32 %v1681, %v1165
        %v1714 = vmul.f32 %v1682, %v1165
        %v1715 = vmul.f32 %v1683, %v1165
        %v1716 = vmul.f32 %v1684, %v1165
        %v1717 = vmul.f32 %v1685, %v1165
        %v1718 = vmul.f32 %v1686, %v1165
        %v1719 = vmul.f32 %v1687, %v1165
        %v1720 = vmul.f32 %v1688, %v1165
        %v1721 = vmul.f32 %v1689, %v1165
        %v1722 = vmul.f32 %v1690, %v1165
        %v1723 = vmul.f32 %v1691, %v1165
        %v1724 = vmul.f32 %v1692, %v1165
        %v1725 = vmul.f32 %v1693, %v1165
        %v1726 = vmul.f32 %v1694, %v1165
        %v1727 = vmul.f32 %v1695, %v1165
        %v1728 = vmul.f32 %v1696, %v1165
        %v1729 = vmul.f32 %v1697, %v1165
        %v1730 = vmul.f32 %v1698, %v1165
        %v1731 = vmul.f32 %v1699, %v1165
        %v1732 = vmul.f32 %v1700, %v1165
        %v1733 = vmul.f32 %v1701, %v1165
        %v1734 = vmul.f32 %v1702, %v1165
        %v1735 = vmul.f32 %v1703, %v1165
        %v1736 = vmul.f32 %v1704, %v1165
        %v1737 = vmul.f32 %v1705, %v1165
        %v1738 = vmul.f32 %v1706, %v1165
        %v1739 = vmul.f32 %v1707, %v1165
        %v1740 = vmul.f32 %v1708, %v1165
        %v1741 = vmul.f32 %v1709, %v1165
        %v1742 = vmul.f32 %v1710, %v1165
        %v1743 = vmul.f32 %v1711, %v1165
        %v1744 = vmul.f32 %v1712, %v1165
        %v1745 = vsel %vm855, %v1713, 0.0
        %1746 = vadd.xlane.f32.xlu0 %v1745
        %v1747 = vpop.xlane.xlu0 %1746
        %v1748 = vsel %vm855, %v1714, 0.0
        %1749 = vadd.xlane.f32.xlu0 %v1748
        %v1750 = vpop.xlane.xlu0 %1749
        %v1751 = vsel %vm855, %v1715, 0.0
        %1752 = vadd.xlane.f32.xlu0 %v1751
        %v1753 = vpop.xlane.xlu0 %1752
        %v1754 = vsel %vm855, %v1716, 0.0
        %1755 = vadd.xlane.f32.xlu0 %v1754
        %v1756 = vpop.xlane.xlu0 %1755
        %v1757 = vsel %vm855, %v1717, 0.0
        %1758 = vadd.xlane.f32.xlu0 %v1757
        %v1759 = vpop.xlane.xlu0 %1758
        %v1760 = vsel %vm855, %v1718, 0.0
        %1761 = vadd.xlane.f32.xlu0 %v1760
        %v1762 = vpop.xlane.xlu0 %1761
        %v1763 = vsel %vm855, %v1719, 0.0
        %1764 = vadd.xlane.f32.xlu0 %v1763
        %v1765 = vpop.xlane.xlu0 %1764
        %v1766 = vsel %vm855, %v1720, 0.0
        %1767 = vadd.xlane.f32.xlu0 %v1766
        %v1768 = vpop.xlane.xlu0 %1767
        %v1769 = vsel %vm855, %v1721, 0.0
        %1770 = vadd.xlane.f32.xlu0 %v1769
        %v1771 = vpop.xlane.xlu0 %1770
        %v1772 = vsel %vm855, %v1722, 0.0
        %1773 = vadd.xlane.f32.xlu0 %v1772
        %v1774 = vpop.xlane.xlu0 %1773
        %v1775 = vsel %vm855, %v1723, 0.0
        %1776 = vadd.xlane.f32.xlu0 %v1775
        %v1777 = vpop.xlane.xlu0 %1776
        %v1778 = vsel %vm855, %v1724, 0.0
        %1779 = vadd.xlane.f32.xlu0 %v1778
        %v1780 = vpop.xlane.xlu0 %1779
        %v1781 = vsel %vm855, %v1725, 0.0
        %1782 = vadd.xlane.f32.xlu0 %v1781
        %v1783 = vpop.xlane.xlu0 %1782
        %v1784 = vsel %vm855, %v1726, 0.0
        %1785 = vadd.xlane.f32.xlu0 %v1784
        %v1786 = vpop.xlane.xlu0 %1785
        %v1787 = vsel %vm855, %v1727, 0.0
        %1788 = vadd.xlane.f32.xlu0 %v1787
        %v1789 = vpop.xlane.xlu0 %1788
        %v1790 = vsel %vm855, %v1728, 0.0
        %1791 = vadd.xlane.f32.xlu0 %v1790
        %v1792 = vpop.xlane.xlu0 %1791
        %v1793 = vsel %vm855, %v1729, 0.0
        %1794 = vadd.xlane.f32.xlu0 %v1793
        %v1795 = vpop.xlane.xlu0 %1794
        %v1796 = vsel %vm855, %v1730, 0.0
        %1797 = vadd.xlane.f32.xlu0 %v1796
        %v1798 = vpop.xlane.xlu0 %1797
        %v1799 = vsel %vm855, %v1731, 0.0
        %1800 = vadd.xlane.f32.xlu0 %v1799
        %v1801 = vpop.xlane.xlu0 %1800
        %v1802 = vsel %vm855, %v1732, 0.0
        %1803 = vadd.xlane.f32.xlu0 %v1802
        %v1804 = vpop.xlane.xlu0 %1803
        %v1805 = vsel %vm855, %v1733, 0.0
        %1806 = vadd.xlane.f32.xlu0 %v1805
        %v1807 = vpop.xlane.xlu0 %1806
        %v1808 = vsel %vm855, %v1734, 0.0
        %1809 = vadd.xlane.f32.xlu0 %v1808
        %v1810 = vpop.xlane.xlu0 %1809
        %v1811 = vsel %vm855, %v1735, 0.0
        %1812 = vadd.xlane.f32.xlu0 %v1811
        %v1813 = vpop.xlane.xlu0 %1812
        %v1814 = vsel %vm855, %v1736, 0.0
        %1815 = vadd.xlane.f32.xlu0 %v1814
        %v1816 = vpop.xlane.xlu0 %1815
        %v1817 = vsel %vm855, %v1737, 0.0
        %1818 = vadd.xlane.f32.xlu0 %v1817
        %v1819 = vpop.xlane.xlu0 %1818
        %v1820 = vsel %vm855, %v1738, 0.0
        %1821 = vadd.xlane.f32.xlu0 %v1820
        %v1822 = vpop.xlane.xlu0 %1821
        %v1823 = vsel %vm855, %v1739, 0.0
        %1824 = vadd.xlane.f32.xlu0 %v1823
        %v1825 = vpop.xlane.xlu0 %1824
        %v1826 = vsel %vm855, %v1740, 0.0
        %1827 = vadd.xlane.f32.xlu0 %v1826
        %v1828 = vpop.xlane.xlu0 %1827
        %v1829 = vsel %vm855, %v1741, 0.0
        %1830 = vadd.xlane.f32.xlu0 %v1829
        %v1831 = vpop.xlane.xlu0 %1830
        %v1832 = vsel %vm855, %v1742, 0.0
        %1833 = vadd.xlane.f32.xlu0 %v1832
        %v1834 = vpop.xlane.xlu0 %1833
        %v1835 = vsel %vm855, %v1743, 0.0
        %1836 = vadd.xlane.f32.xlu0 %v1835
        %v1837 = vpop.xlane.xlu0 %1836
        %v1838 = vsel %vm855, %v1744, 0.0
        %1839 = vadd.xlane.f32.xlu0 %v1838
        %v1840 = vpop.xlane.xlu0 %1839
        %s1841 = scalar_lea.vmem %s697, 256 [#allocation2]
        %v1842 = vld [vmem:[%s1841] sm:$0xf]
        %v1843 = vld [vmem:[%s1841 + $0x4] sm:$0xf]
        %v1844 = vld [vmem:[%s1841 + $0x8] sm:$0xf]
        %v1845 = vld [vmem:[%s1841 + $0xc] sm:$0xf]
        %v1846 = vld [vmem:[%s1841 + $0x10] sm:$0xf]
        %v1847 = vld [vmem:[%s1841 + $0x14] sm:$0xf]
        %v1848 = vld [vmem:[%s1841 + $0x18] sm:$0xf]
        %v1849 = vld [vmem:[%s1841 + $0x1c] sm:$0xf]
        %v1850 = vld [vmem:[%s1841 + $0x20] sm:$0xf]
        %v1851 = vld [vmem:[%s1841 + $0x24] sm:$0xf]
        %v1852 = vld [vmem:[%s1841 + $0x28] sm:$0xf]
        %v1853 = vld [vmem:[%s1841 + $0x2c] sm:$0xf]
        %v1854 = vld [vmem:[%s1841 + $0x30] sm:$0xf]
        %v1855 = vld [vmem:[%s1841 + $0x34] sm:$0xf]
        %v1856 = vld [vmem:[%s1841 + $0x38] sm:$0xf]
        %v1857 = vld [vmem:[%s1841 + $0x3c] sm:$0xf]
        %v1858 = vld [vmem:[%s1841 + $0x40] sm:$0xf]
        %v1859 = vld [vmem:[%s1841 + $0x44] sm:$0xf]
        %v1860 = vld [vmem:[%s1841 + $0x48] sm:$0xf]
        %v1861 = vld [vmem:[%s1841 + $0x4c] sm:$0xf]
        %v1862 = vld [vmem:[%s1841 + $0x50] sm:$0xf]
        %v1863 = vld [vmem:[%s1841 + $0x54] sm:$0xf]
        %v1864 = vld [vmem:[%s1841 + $0x58] sm:$0xf]
        %v1865 = vld [vmem:[%s1841 + $0x5c] sm:$0xf]
        %v1866 = vld [vmem:[%s1841 + $0x60] sm:$0xf]
        %v1867 = vld [vmem:[%s1841 + $0x64] sm:$0xf]
        %v1868 = vld [vmem:[%s1841 + $0x68] sm:$0xf]
        %v1869 = vld [vmem:[%s1841 + $0x6c] sm:$0xf]
        %v1870 = vld [vmem:[%s1841 + $0x70] sm:$0xf]
        %v1871 = vld [vmem:[%s1841 + $0x74] sm:$0xf]
        %v1872 = vld [vmem:[%s1841 + $0x78] sm:$0xf]
        %v1873 = vld [vmem:[%s1841 + $0x7c] sm:$0xf]
        %v1906 = vunpack.c.l.b16 %v1842
        %v1907 = vunpack.c.l.b16 %v1843
        %v1908 = vunpack.c.l.b16 %v1844
        %v1909 = vunpack.c.l.b16 %v1845
        %v1910 = vunpack.c.l.b16 %v1846
        %v1911 = vunpack.c.l.b16 %v1847
        %v1912 = vunpack.c.l.b16 %v1848
        %v1913 = vunpack.c.l.b16 %v1849
        %v1914 = vunpack.c.l.b16 %v1850
        %v1915 = vunpack.c.l.b16 %v1851
        %v1916 = vunpack.c.l.b16 %v1852
        %v1917 = vunpack.c.l.b16 %v1853
        %v1918 = vunpack.c.l.b16 %v1854
        %v1919 = vunpack.c.l.b16 %v1855
        %v1920 = vunpack.c.l.b16 %v1856
        %v1921 = vunpack.c.l.b16 %v1857
        %v1922 = vunpack.c.l.b16 %v1858
        %v1923 = vunpack.c.l.b16 %v1859
        %v1924 = vunpack.c.l.b16 %v1860
        %v1925 = vunpack.c.l.b16 %v1861
        %v1926 = vunpack.c.l.b16 %v1862
        %v1927 = vunpack.c.l.b16 %v1863
        %v1928 = vunpack.c.l.b16 %v1864
        %v1929 = vunpack.c.l.b16 %v1865
        %v1930 = vunpack.c.l.b16 %v1866
        %v1931 = vunpack.c.l.b16 %v1867
        %v1932 = vunpack.c.l.b16 %v1868
        %v1933 = vunpack.c.l.b16 %v1869
        %v1934 = vunpack.c.l.b16 %v1870
        %v1935 = vunpack.c.l.b16 %v1871
        %v1936 = vunpack.c.l.b16 %v1872
        %v1937 = vunpack.c.l.b16 %v1873
        %v1938 = vpack.c.b16 %v1907, %v1906
        %v1939 = vpack.c.b16 %v1909, %v1908
        %v1940 = vpack.c.b16 %v1911, %v1910
        %v1941 = vpack.c.b16 %v1913, %v1912
        %v1942 = vpack.c.b16 %v1915, %v1914
        %v1943 = vpack.c.b16 %v1917, %v1916
        %v1944 = vpack.c.b16 %v1919, %v1918
        %v1945 = vpack.c.b16 %v1921, %v1920
        %v1946 = vpack.c.b16 %v1923, %v1922
        %v1947 = vpack.c.b16 %v1925, %v1924
        %v1948 = vpack.c.b16 %v1927, %v1926
        %v1949 = vpack.c.b16 %v1929, %v1928
        %v1950 = vpack.c.b16 %v1931, %v1930
        %v1951 = vpack.c.b16 %v1933, %v1932
        %v1952 = vpack.c.b16 %v1935, %v1934
        %v1953 = vpack.c.b16 %v1937, %v1936
        %v1955 = vsel %vm855, %v1938, 0
        %v1958 = vsel %vm855, %v1939, 0
        %v1961 = vsel %vm855, %v1940, 0
        %v1964 = vsel %vm855, %v1941, 0
        %v1967 = vsel %vm855, %v1942, 0
        %v1970 = vsel %vm855, %v1943, 0
        %v1973 = vsel %vm855, %v1944, 0
        %v1976 = vsel %vm855, %v1945, 0
        %v1979 = vsel %vm855, %v1946, 0
        %v1982 = vsel %vm855, %v1947, 0
        %v1985 = vsel %vm855, %v1948, 0
        %v1988 = vsel %vm855, %v1949, 0
        %v1991 = vsel %vm855, %v1950, 0
        %v1994 = vsel %vm855, %v1951, 0
        %v1997 = vsel %vm855, %v1952, 0
        %v2000 = vsel %vm855, %v1953, 0
        %2002 = vmatprep.subr.bf16.mxu0 0
        %2003 = vmatpush1.bf16.msra.mxu0 0
        %2004 = vmatprep.subr.bf16.mxu0 0
        %2005 = vmatpush1.bf16.msra.mxu0 0
        %2006 = vmatprep.subr.bf16.mxu0 0
        %2007 = vmatpush1.bf16.msra.mxu0 0
        %2008 = vmatprep.subr.bf16.mxu0 0
        %2009 = vmatpush1.bf16.msra.mxu0 0
        %2010 = vmatprep.subr.bf16.mxu0 0
        %2011 = vmatpush1.bf16.msra.mxu0 0
        %2012 = vmatprep.subr.bf16.mxu0 0
        %2013 = vmatpush1.bf16.msra.mxu0 0
        %2014 = vmatprep.subr.bf16.mxu0 0
        %2015 = vmatpush1.bf16.msra.mxu0 %v852
        %2016 = vmatprep.subr.bf16.mxu0 0
        %2017 = vmatpush1.bf16.msra.mxu0 %v851
        %2018 = vmatprep.subr.bf16.mxu0 0
        %2019 = vmatpush2.bf16.msra.mxu0 0
        %2020 = vmatprep.subr.bf16.mxu0 0
        %2021 = vmatpush2.bf16.msra.mxu0 0
        %2022 = vmatprep.subr.bf16.mxu0 0
        %2023 = vmatpush2.bf16.msra.mxu0 0
        %2024 = vmatprep.subr.bf16.mxu0 0
        %2025 = vmatpush2.bf16.msra.mxu0 0
        %2026 = vmatprep.subr.bf16.mxu0 0
        %2027 = vmatpush2.bf16.msra.mxu0 0
        %2028 = vmatprep.subr.bf16.mxu0 0
        %2029 = vmatpush2.bf16.msra.mxu0 0
        %2030 = vmatprep.subr.bf16.mxu0 0
        %2031 = vmatpush2.bf16.msra.mxu0 0
        %2032 = vmatprep.subr.bf16.mxu0 0
        %2033 = vmatpush2.bf16.msra.mxu0 0
        %2034 = vmatprep.mubr.bf16.mxu0 0
        %2035 = vmatmul.mubr.bf16.gmra.mxu0 %v1955
        %v2036 = vpop.f32.mrf.mxu0
        %v2037 = vadd.f32 0.0, %v2036
        %v2038 = vpop.f32.mrf.mxu0
        %v2039 = vpop.f32.mrf.mxu0
        %v2040 = vadd.f32 0.0, %v2039
        %v2041 = vpop.f32.mrf.mxu0
        %2042 = vmatprep.mubr.bf16.mxu0 0
        %2043 = vmatmul.mubr.bf16.gmra.mxu0 %v1958
        %v2044 = vpop.f32.mrf.mxu0
        %v2045 = vadd.f32 0.0, %v2044
        %v2046 = vpop.f32.mrf.mxu0
        %v2047 = vpop.f32.mrf.mxu0
        %v2048 = vadd.f32 0.0, %v2047
        %v2049 = vpop.f32.mrf.mxu0
        %2050 = vmatprep.mubr.bf16.mxu0 0
        %2051 = vmatmul.mubr.bf16.gmra.mxu0 %v1961
        %v2052 = vpop.f32.mrf.mxu0
        %v2053 = vadd.f32 0.0, %v2052
        %v2054 = vpop.f32.mrf.mxu0
        %v2055 = vpop.f32.mrf.mxu0
        %v2056 = vadd.f32 0.0, %v2055
        %v2057 = vpop.f32.mrf.mxu0
        %2058 = vmatprep.mubr.bf16.mxu0 0
        %2059 = vmatmul.mubr.bf16.gmra.mxu0 %v1964
        %v2060 = vpop.f32.mrf.mxu0
        %v2061 = vadd.f32 0.0, %v2060
        %v2062 = vpop.f32.mrf.mxu0
        %v2063 = vpop.f32.mrf.mxu0
        %v2064 = vadd.f32 0.0, %v2063
        %v2065 = vpop.f32.mrf.mxu0
        %2066 = vmatprep.mubr.bf16.mxu0 0
        %2067 = vmatmul.mubr.bf16.gmra.mxu0 %v1967
        %v2068 = vpop.f32.mrf.mxu0
        %v2069 = vadd.f32 0.0, %v2068
        %v2070 = vpop.f32.mrf.mxu0
        %v2071 = vpop.f32.mrf.mxu0
        %v2072 = vadd.f32 0.0, %v2071
        %v2073 = vpop.f32.mrf.mxu0
        %2074 = vmatprep.mubr.bf16.mxu0 0
        %2075 = vmatmul.mubr.bf16.gmra.mxu0 %v1970
        %v2076 = vpop.f32.mrf.mxu0
        %v2077 = vadd.f32 0.0, %v2076
        %v2078 = vpop.f32.mrf.mxu0
        %v2079 = vpop.f32.mrf.mxu0
        %v2080 = vadd.f32 0.0, %v2079
        %v2081 = vpop.f32.mrf.mxu0
        %2082 = vmatprep.mubr.bf16.mxu0 0
        %2083 = vmatmul.mubr.bf16.gmra.mxu0 %v1973
        %v2084 = vpop.f32.mrf.mxu0
        %v2085 = vadd.f32 0.0, %v2084
        %v2086 = vpop.f32.mrf.mxu0
        %v2087 = vpop.f32.mrf.mxu0
        %v2088 = vadd.f32 0.0, %v2087
        %v2089 = vpop.f32.mrf.mxu0
        %2090 = vmatprep.mubr.bf16.mxu0 0
        %2091 = vmatmul.mubr.bf16.gmra.mxu0 %v1976
        %v2092 = vpop.f32.mrf.mxu0
        %v2093 = vadd.f32 0.0, %v2092
        %v2094 = vpop.f32.mrf.mxu0
        %v2095 = vpop.f32.mrf.mxu0
        %v2096 = vadd.f32 0.0, %v2095
        %v2097 = vpop.f32.mrf.mxu0
        %2098 = vmatprep.mubr.bf16.mxu0 0
        %2099 = vmatmul.mubr.bf16.gmra.mxu0 %v1979
        %v2100 = vpop.f32.mrf.mxu0
        %v2101 = vadd.f32 0.0, %v2100
        %v2102 = vpop.f32.mrf.mxu0
        %v2103 = vpop.f32.mrf.mxu0
        %v2104 = vadd.f32 0.0, %v2103
        %v2105 = vpop.f32.mrf.mxu0
        %2106 = vmatprep.mubr.bf16.mxu0 0
        %2107 = vmatmul.mubr.bf16.gmra.mxu0 %v1982
        %v2108 = vpop.f32.mrf.mxu0
        %v2109 = vadd.f32 0.0, %v2108
        %v2110 = vpop.f32.mrf.mxu0
        %v2111 = vpop.f32.mrf.mxu0
        %v2112 = vadd.f32 0.0, %v2111
        %v2113 = vpop.f32.mrf.mxu0
        %2114 = vmatprep.mubr.bf16.mxu0 0
        %2115 = vmatmul.mubr.bf16.gmra.mxu0 %v1985
        %v2116 = vpop.f32.mrf.mxu0
        %v2117 = vadd.f32 0.0, %v2116
        %v2118 = vpop.f32.mrf.mxu0
        %v2119 = vpop.f32.mrf.mxu0
        %v2120 = vadd.f32 0.0, %v2119
        %v2121 = vpop.f32.mrf.mxu0
        %2122 = vmatprep.mubr.bf16.mxu0 0
        %2123 = vmatmul.mubr.bf16.gmra.mxu0 %v1988
        %v2124 = vpop.f32.mrf.mxu0
        %v2125 = vadd.f32 0.0, %v2124
        %v2126 = vpop.f32.mrf.mxu0
        %v2127 = vpop.f32.mrf.mxu0
        %v2128 = vadd.f32 0.0, %v2127
        %v2129 = vpop.f32.mrf.mxu0
        %2130 = vmatprep.mubr.bf16.mxu0 0
        %2131 = vmatmul.mubr.bf16.gmra.mxu0 %v1991
        %v2132 = vpop.f32.mrf.mxu0
        %v2133 = vadd.f32 0.0, %v2132
        %v2134 = vpop.f32.mrf.mxu0
        %v2135 = vpop.f32.mrf.mxu0
        %v2136 = vadd.f32 0.0, %v2135
        %v2137 = vpop.f32.mrf.mxu0
        %2138 = vmatprep.mubr.bf16.mxu0 0
        %2139 = vmatmul.mubr.bf16.gmra.mxu0 %v1994
        %v2140 = vpop.f32.mrf.mxu0
        %v2141 = vadd.f32 0.0, %v2140
        %v2142 = vpop.f32.mrf.mxu0
        %v2143 = vpop.f32.mrf.mxu0
        %v2144 = vadd.f32 0.0, %v2143
        %v2145 = vpop.f32.mrf.mxu0
        %2146 = vmatprep.mubr.bf16.mxu0 0
        %2147 = vmatmul.mubr.bf16.gmra.mxu0 %v1997
        %v2148 = vpop.f32.mrf.mxu0
        %v2149 = vadd.f32 0.0, %v2148
        %v2150 = vpop.f32.mrf.mxu0
        %v2151 = vpop.f32.mrf.mxu0
        %v2152 = vadd.f32 0.0, %v2151
        %v2153 = vpop.f32.mrf.mxu0
        %2154 = vmatprep.mubr.bf16.mxu0 0
        %2155 = vmatmul.mubr.bf16.gmra.mxu0 %v2000
        %v2156 = vpop.f32.mrf.mxu0
        %v2157 = vadd.f32 0.0, %v2156
        %v2158 = vpop.f32.mrf.mxu0
        %v2159 = vpop.f32.mrf.mxu0
        %v2160 = vadd.f32 0.0, %v2159
        %v2161 = vpop.f32.mrf.mxu0
        %2162 = vdwg.mxu0
        %vm2163 = vcmp.gt.f32.partialorder %v2037, 0.0
        %vm2164 = vcmp.gt.f32.partialorder %v2040, 0.0
        %vm2165 = vcmp.gt.f32.partialorder %v2045, 0.0
        %vm2166 = vcmp.gt.f32.partialorder %v2048, 0.0
        %vm2167 = vcmp.gt.f32.partialorder %v2053, 0.0
        %vm2168 = vcmp.gt.f32.partialorder %v2056, 0.0
        %vm2169 = vcmp.gt.f32.partialorder %v2061, 0.0
        %vm2170 = vcmp.gt.f32.partialorder %v2064, 0.0
        %vm2171 = vcmp.gt.f32.partialorder %v2069, 0.0
        %vm2172 = vcmp.gt.f32.partialorder %v2072, 0.0
        %vm2173 = vcmp.gt.f32.partialorder %v2077, 0.0
        %vm2174 = vcmp.gt.f32.partialorder %v2080, 0.0
        %vm2175 = vcmp.gt.f32.partialorder %v2085, 0.0
        %vm2176 = vcmp.gt.f32.partialorder %v2088, 0.0
        %vm2177 = vcmp.gt.f32.partialorder %v2093, 0.0
        %vm2178 = vcmp.gt.f32.partialorder %v2096, 0.0
        %vm2179 = vcmp.gt.f32.partialorder %v2101, 0.0
        %vm2180 = vcmp.gt.f32.partialorder %v2104, 0.0
        %vm2181 = vcmp.gt.f32.partialorder %v2109, 0.0
        %vm2182 = vcmp.gt.f32.partialorder %v2112, 0.0
        %vm2183 = vcmp.gt.f32.partialorder %v2117, 0.0
        %vm2184 = vcmp.gt.f32.partialorder %v2120, 0.0
        %vm2185 = vcmp.gt.f32.partialorder %v2125, 0.0
        %vm2186 = vcmp.gt.f32.partialorder %v2128, 0.0
        %vm2187 = vcmp.gt.f32.partialorder %v2133, 0.0
        %vm2188 = vcmp.gt.f32.partialorder %v2136, 0.0
        %vm2189 = vcmp.gt.f32.partialorder %v2141, 0.0
        %vm2190 = vcmp.gt.f32.partialorder %v2144, 0.0
        %vm2191 = vcmp.gt.f32.partialorder %v2149, 0.0
        %vm2192 = vcmp.gt.f32.partialorder %v2152, 0.0
        %vm2193 = vcmp.gt.f32.partialorder %v2157, 0.0
        %vm2194 = vcmp.gt.f32.partialorder %v2160, 0.0
        %v2195 = vmul.f32 %v2037, 0.01
        %v2196 = vmul.f32 %v2040, 0.01
        %v2197 = vmul.f32 %v2045, 0.01
        %v2198 = vmul.f32 %v2048, 0.01
        %v2199 = vmul.f32 %v2053, 0.01
        %v2200 = vmul.f32 %v2056, 0.01
        %v2201 = vmul.f32 %v2061, 0.01
        %v2202 = vmul.f32 %v2064, 0.01
        %v2203 = vmul.f32 %v2069, 0.01
        %v2204 = vmul.f32 %v2072, 0.01
        %v2205 = vmul.f32 %v2077, 0.01
        %v2206 = vmul.f32 %v2080, 0.01
        %v2207 = vmul.f32 %v2085, 0.01
        %v2208 = vmul.f32 %v2088, 0.01
        %v2209 = vmul.f32 %v2093, 0.01
        %v2210 = vmul.f32 %v2096, 0.01
        %v2211 = vmul.f32 %v2101, 0.01
        %v2212 = vmul.f32 %v2104, 0.01
        %v2213 = vmul.f32 %v2109, 0.01
        %v2214 = vmul.f32 %v2112, 0.01
        %v2215 = vmul.f32 %v2117, 0.01
        %v2216 = vmul.f32 %v2120, 0.01
        %v2217 = vmul.f32 %v2125, 0.01
        %v2218 = vmul.f32 %v2128, 0.01
        %v2219 = vmul.f32 %v2133, 0.01
        %v2220 = vmul.f32 %v2136, 0.01
        %v2221 = vmul.f32 %v2141, 0.01
        %v2222 = vmul.f32 %v2144, 0.01
        %v2223 = vmul.f32 %v2149, 0.01
        %v2224 = vmul.f32 %v2152, 0.01
        %v2225 = vmul.f32 %v2157, 0.01
        %v2226 = vmul.f32 %v2160, 0.01
        %v2227 = vsel %vm2163, %v2037, %v2195
        %v2228 = vsel %vm2164, %v2040, %v2196
        %v2229 = vsel %vm2165, %v2045, %v2197
        %v2230 = vsel %vm2166, %v2048, %v2198
        %v2231 = vsel %vm2167, %v2053, %v2199
        %v2232 = vsel %vm2168, %v2056, %v2200
        %v2233 = vsel %vm2169, %v2061, %v2201
        %v2234 = vsel %vm2170, %v2064, %v2202
        %v2235 = vsel %vm2171, %v2069, %v2203
        %v2236 = vsel %vm2172, %v2072, %v2204
        %v2237 = vsel %vm2173, %v2077, %v2205
        %v2238 = vsel %vm2174, %v2080, %v2206
        %v2239 = vsel %vm2175, %v2085, %v2207
        %v2240 = vsel %vm2176, %v2088, %v2208
        %v2241 = vsel %vm2177, %v2093, %v2209
        %v2242 = vsel %vm2178, %v2096, %v2210
        %v2243 = vsel %vm2179, %v2101, %v2211
        %v2244 = vsel %vm2180, %v2104, %v2212
        %v2245 = vsel %vm2181, %v2109, %v2213
        %v2246 = vsel %vm2182, %v2112, %v2214
        %v2247 = vsel %vm2183, %v2117, %v2215
        %v2248 = vsel %vm2184, %v2120, %v2216
        %v2249 = vsel %vm2185, %v2125, %v2217
        %v2250 = vsel %vm2186, %v2128, %v2218
        %v2251 = vsel %vm2187, %v2133, %v2219
        %v2252 = vsel %vm2188, %v2136, %v2220
        %v2253 = vsel %vm2189, %v2141, %v2221
        %v2254 = vsel %vm2190, %v2144, %v2222
        %v2255 = vsel %vm2191, %v2149, %v2223
        %v2256 = vsel %vm2192, %v2152, %v2224
        %v2257 = vsel %vm2193, %v2157, %v2225
        %v2258 = vsel %vm2194, %v2160, %v2226
        %v2259 = vmul.f32 %v2227, %v1165
        %v2260 = vmul.f32 %v2228, %v1165
        %v2261 = vmul.f32 %v2229, %v1165
        %v2262 = vmul.f32 %v2230, %v1165
        %v2263 = vmul.f32 %v2231, %v1165
        %v2264 = vmul.f32 %v2232, %v1165
        %v2265 = vmul.f32 %v2233, %v1165
        %v2266 = vmul.f32 %v2234, %v1165
        %v2267 = vmul.f32 %v2235, %v1165
        %v2268 = vmul.f32 %v2236, %v1165
        %v2269 = vmul.f32 %v2237, %v1165
        %v2270 = vmul.f32 %v2238, %v1165
        %v2271 = vmul.f32 %v2239, %v1165
        %v2272 = vmul.f32 %v2240, %v1165
        %v2273 = vmul.f32 %v2241, %v1165
        %v2274 = vmul.f32 %v2242, %v1165
        %v2275 = vmul.f32 %v2243, %v1165
        %v2276 = vmul.f32 %v2244, %v1165
        %v2277 = vmul.f32 %v2245, %v1165
        %v2278 = vmul.f32 %v2246, %v1165
        %v2279 = vmul.f32 %v2247, %v1165
        %v2280 = vmul.f32 %v2248, %v1165
        %v2281 = vmul.f32 %v2249, %v1165
        %v2282 = vmul.f32 %v2250, %v1165
        %v2283 = vmul.f32 %v2251, %v1165
        %v2284 = vmul.f32 %v2252, %v1165
        %v2285 = vmul.f32 %v2253, %v1165
        %v2286 = vmul.f32 %v2254, %v1165
        %v2287 = vmul.f32 %v2255, %v1165
        %v2288 = vmul.f32 %v2256, %v1165
        %v2289 = vmul.f32 %v2257, %v1165
        %v2290 = vmul.f32 %v2258, %v1165
        %v2291 = vsel %vm855, %v2259, 0.0
        %2292 = vadd.xlane.f32.xlu0 %v2291
        %v2293 = vpop.xlane.xlu0 %2292
        %v2294 = vsel %vm855, %v2260, 0.0
        %2295 = vadd.xlane.f32.xlu0 %v2294
        %v2296 = vpop.xlane.xlu0 %2295
        %v2297 = vsel %vm855, %v2261, 0.0
        %2298 = vadd.xlane.f32.xlu0 %v2297
        %v2299 = vpop.xlane.xlu0 %2298
        %v2300 = vsel %vm855, %v2262, 0.0
        %2301 = vadd.xlane.f32.xlu0 %v2300
        %v2302 = vpop.xlane.xlu0 %2301
        %v2303 = vsel %vm855, %v2263, 0.0
        %2304 = vadd.xlane.f32.xlu0 %v2303
        %v2305 = vpop.xlane.xlu0 %2304
        %v2306 = vsel %vm855, %v2264, 0.0
        %2307 = vadd.xlane.f32.xlu0 %v2306
        %v2308 = vpop.xlane.xlu0 %2307
        %v2309 = vsel %vm855, %v2265, 0.0
        %2310 = vadd.xlane.f32.xlu0 %v2309
        %v2311 = vpop.xlane.xlu0 %2310
        %v2312 = vsel %vm855, %v2266, 0.0
        %2313 = vadd.xlane.f32.xlu0 %v2312
        %v2314 = vpop.xlane.xlu0 %2313
        %v2315 = vsel %vm855, %v2267, 0.0
        %2316 = vadd.xlane.f32.xlu0 %v2315
        %v2317 = vpop.xlane.xlu0 %2316
        %v2318 = vsel %vm855, %v2268, 0.0
        %2319 = vadd.xlane.f32.xlu0 %v2318
        %v2320 = vpop.xlane.xlu0 %2319
        %v2321 = vsel %vm855, %v2269, 0.0
        %2322 = vadd.xlane.f32.xlu0 %v2321
        %v2323 = vpop.xlane.xlu0 %2322
        %v2324 = vsel %vm855, %v2270, 0.0
        %2325 = vadd.xlane.f32.xlu0 %v2324
        %v2326 = vpop.xlane.xlu0 %2325
        %v2327 = vsel %vm855, %v2271, 0.0
        %2328 = vadd.xlane.f32.xlu0 %v2327
        %v2329 = vpop.xlane.xlu0 %2328
        %v2330 = vsel %vm855, %v2272, 0.0
        %2331 = vadd.xlane.f32.xlu0 %v2330
        %v2332 = vpop.xlane.xlu0 %2331
        %v2333 = vsel %vm855, %v2273, 0.0
        %2334 = vadd.xlane.f32.xlu0 %v2333
        %v2335 = vpop.xlane.xlu0 %2334
        %v2336 = vsel %vm855, %v2274, 0.0
        %2337 = vadd.xlane.f32.xlu0 %v2336
        %v2338 = vpop.xlane.xlu0 %2337
        %v2339 = vsel %vm855, %v2275, 0.0
        %2340 = vadd.xlane.f32.xlu0 %v2339
        %v2341 = vpop.xlane.xlu0 %2340
        %v2342 = vsel %vm855, %v2276, 0.0
        %2343 = vadd.xlane.f32.xlu0 %v2342
        %v2344 = vpop.xlane.xlu0 %2343
        %v2345 = vsel %vm855, %v2277, 0.0
        %2346 = vadd.xlane.f32.xlu0 %v2345
        %v2347 = vpop.xlane.xlu0 %2346
        %v2348 = vsel %vm855, %v2278, 0.0
        %2349 = vadd.xlane.f32.xlu0 %v2348
        %v2350 = vpop.xlane.xlu0 %2349
        %v2351 = vsel %vm855, %v2279, 0.0
        %2352 = vadd.xlane.f32.xlu0 %v2351
        %v2353 = vpop.xlane.xlu0 %2352
        %v2354 = vsel %vm855, %v2280, 0.0
        %2355 = vadd.xlane.f32.xlu0 %v2354
        %v2356 = vpop.xlane.xlu0 %2355
        %v2357 = vsel %vm855, %v2281, 0.0
        %2358 = vadd.xlane.f32.xlu0 %v2357
        %v2359 = vpop.xlane.xlu0 %2358
        %v2360 = vsel %vm855, %v2282, 0.0
        %2361 = vadd.xlane.f32.xlu0 %v2360
        %v2362 = vpop.xlane.xlu0 %2361
        %v2363 = vsel %vm855, %v2283, 0.0
        %2364 = vadd.xlane.f32.xlu0 %v2363
        %v2365 = vpop.xlane.xlu0 %2364
        %v2366 = vsel %vm855, %v2284, 0.0
        %2367 = vadd.xlane.f32.xlu0 %v2366
        %v2368 = vpop.xlane.xlu0 %2367
        %v2369 = vsel %vm855, %v2285, 0.0
        %2370 = vadd.xlane.f32.xlu0 %v2369
        %v2371 = vpop.xlane.xlu0 %2370
        %v2372 = vsel %vm855, %v2286, 0.0
        %2373 = vadd.xlane.f32.xlu0 %v2372
        %v2374 = vpop.xlane.xlu0 %2373
        %v2375 = vsel %vm855, %v2287, 0.0
        %2376 = vadd.xlane.f32.xlu0 %v2375
        %v2377 = vpop.xlane.xlu0 %2376
        %v2378 = vsel %vm855, %v2288, 0.0
        %2379 = vadd.xlane.f32.xlu0 %v2378
        %v2380 = vpop.xlane.xlu0 %2379
        %v2381 = vsel %vm855, %v2289, 0.0
        %2382 = vadd.xlane.f32.xlu0 %v2381
        %v2383 = vpop.xlane.xlu0 %2382
        %v2384 = vsel %vm855, %v2290, 0.0
        %2385 = vadd.xlane.f32.xlu0 %v2384
        %v2386 = vpop.xlane.xlu0 %2385
        %s2387 = scalar_lea.vmem %s697, 384 [#allocation2]
        %v2388 = vld [vmem:[%s2387] sm:$0xf]
        %v2389 = vld [vmem:[%s2387 + $0x4] sm:$0xf]
        %v2390 = vld [vmem:[%s2387 + $0x8] sm:$0xf]
        %v2391 = vld [vmem:[%s2387 + $0xc] sm:$0xf]
        %v2392 = vld [vmem:[%s2387 + $0x10] sm:$0xf]
        %v2393 = vld [vmem:[%s2387 + $0x14] sm:$0xf]
        %v2394 = vld [vmem:[%s2387 + $0x18] sm:$0xf]
        %v2395 = vld [vmem:[%s2387 + $0x1c] sm:$0xf]
        %v2396 = vld [vmem:[%s2387 + $0x20] sm:$0xf]
        %v2397 = vld [vmem:[%s2387 + $0x24] sm:$0xf]
        %v2398 = vld [vmem:[%s2387 + $0x28] sm:$0xf]
        %v2399 = vld [vmem:[%s2387 + $0x2c] sm:$0xf]
        %v2400 = vld [vmem:[%s2387 + $0x30] sm:$0xf]
        %v2401 = vld [vmem:[%s2387 + $0x34] sm:$0xf]
        %v2402 = vld [vmem:[%s2387 + $0x38] sm:$0xf]
        %v2403 = vld [vmem:[%s2387 + $0x3c] sm:$0xf]
        %v2404 = vld [vmem:[%s2387 + $0x40] sm:$0xf]
        %v2405 = vld [vmem:[%s2387 + $0x44] sm:$0xf]
        %v2406 = vld [vmem:[%s2387 + $0x48] sm:$0xf]
        %v2407 = vld [vmem:[%s2387 + $0x4c] sm:$0xf]
        %v2408 = vld [vmem:[%s2387 + $0x50] sm:$0xf]
        %v2409 = vld [vmem:[%s2387 + $0x54] sm:$0xf]
        %v2410 = vld [vmem:[%s2387 + $0x58] sm:$0xf]
        %v2411 = vld [vmem:[%s2387 + $0x5c] sm:$0xf]
        %v2412 = vld [vmem:[%s2387 + $0x60] sm:$0xf]
        %v2413 = vld [vmem:[%s2387 + $0x64] sm:$0xf]
        %v2414 = vld [vmem:[%s2387 + $0x68] sm:$0xf]
        %v2415 = vld [vmem:[%s2387 + $0x6c] sm:$0xf]
        %v2416 = vld [vmem:[%s2387 + $0x70] sm:$0xf]
        %v2417 = vld [vmem:[%s2387 + $0x74] sm:$0xf]
        %v2418 = vld [vmem:[%s2387 + $0x78] sm:$0xf]
        %v2419 = vld [vmem:[%s2387 + $0x7c] sm:$0xf]
        %v2452 = vunpack.c.l.b16 %v2388
        %v2453 = vunpack.c.l.b16 %v2389
        %v2454 = vunpack.c.l.b16 %v2390
        %v2455 = vunpack.c.l.b16 %v2391
        %v2456 = vunpack.c.l.b16 %v2392
        %v2457 = vunpack.c.l.b16 %v2393
        %v2458 = vunpack.c.l.b16 %v2394
        %v2459 = vunpack.c.l.b16 %v2395
        %v2460 = vunpack.c.l.b16 %v2396
        %v2461 = vunpack.c.l.b16 %v2397
        %v2462 = vunpack.c.l.b16 %v2398
        %v2463 = vunpack.c.l.b16 %v2399
        %v2464 = vunpack.c.l.b16 %v2400
        %v2465 = vunpack.c.l.b16 %v2401
        %v2466 = vunpack.c.l.b16 %v2402
        %v2467 = vunpack.c.l.b16 %v2403
        %v2468 = vunpack.c.l.b16 %v2404
        %v2469 = vunpack.c.l.b16 %v2405
        %v2470 = vunpack.c.l.b16 %v2406
        %v2471 = vunpack.c.l.b16 %v2407
        %v2472 = vunpack.c.l.b16 %v2408
        %v2473 = vunpack.c.l.b16 %v2409
        %v2474 = vunpack.c.l.b16 %v2410
        %v2475 = vunpack.c.l.b16 %v2411
        %v2476 = vunpack.c.l.b16 %v2412
        %v2477 = vunpack.c.l.b16 %v2413
        %v2478 = vunpack.c.l.b16 %v2414
        %v2479 = vunpack.c.l.b16 %v2415
        %v2480 = vunpack.c.l.b16 %v2416
        %v2481 = vunpack.c.l.b16 %v2417
        %v2482 = vunpack.c.l.b16 %v2418
        %v2483 = vunpack.c.l.b16 %v2419
        %v2484 = vpack.c.b16 %v2453, %v2452
        %v2485 = vpack.c.b16 %v2455, %v2454
        %v2486 = vpack.c.b16 %v2457, %v2456
        %v2487 = vpack.c.b16 %v2459, %v2458
        %v2488 = vpack.c.b16 %v2461, %v2460
        %v2489 = vpack.c.b16 %v2463, %v2462
        %v2490 = vpack.c.b16 %v2465, %v2464
        %v2491 = vpack.c.b16 %v2467, %v2466
        %v2492 = vpack.c.b16 %v2469, %v2468
        %v2493 = vpack.c.b16 %v2471, %v2470
        %v2494 = vpack.c.b16 %v2473, %v2472
        %v2495 = vpack.c.b16 %v2475, %v2474
        %v2496 = vpack.c.b16 %v2477, %v2476
        %v2497 = vpack.c.b16 %v2479, %v2478
        %v2498 = vpack.c.b16 %v2481, %v2480
        %v2499 = vpack.c.b16 %v2483, %v2482
        %v2501 = vsel %vm855, %v2484, 0
        %v2504 = vsel %vm855, %v2485, 0
        %v2507 = vsel %vm855, %v2486, 0
        %v2510 = vsel %vm855, %v2487, 0
        %v2513 = vsel %vm855, %v2488, 0
        %v2516 = vsel %vm855, %v2489, 0
        %v2519 = vsel %vm855, %v2490, 0
        %v2522 = vsel %vm855, %v2491, 0
        %v2525 = vsel %vm855, %v2492, 0
        %v2528 = vsel %vm855, %v2493, 0
        %v2531 = vsel %vm855, %v2494, 0
        %v2534 = vsel %vm855, %v2495, 0
        %v2537 = vsel %vm855, %v2496, 0
        %v2540 = vsel %vm855, %v2497, 0
        %v2543 = vsel %vm855, %v2498, 0
        %v2546 = vsel %vm855, %v2499, 0
        %2548 = vmatprep.subr.bf16.mxu0 0
        %2549 = vmatpush1.bf16.msra.mxu0 0
        %2550 = vmatprep.subr.bf16.mxu0 0
        %2551 = vmatpush1.bf16.msra.mxu0 0
        %2552 = vmatprep.subr.bf16.mxu0 0
        %2553 = vmatpush1.bf16.msra.mxu0 0
        %2554 = vmatprep.subr.bf16.mxu0 0
        %2555 = vmatpush1.bf16.msra.mxu0 0
        %2556 = vmatprep.subr.bf16.mxu0 0
        %2557 = vmatpush1.bf16.msra.mxu0 0
        %2558 = vmatprep.subr.bf16.mxu0 0
        %2559 = vmatpush1.bf16.msra.mxu0 0
        %2560 = vmatprep.subr.bf16.mxu0 0
        %2561 = vmatpush1.bf16.msra.mxu0 %v852
        %2562 = vmatprep.subr.bf16.mxu0 0
        %2563 = vmatpush1.bf16.msra.mxu0 %v851
        %2564 = vmatprep.subr.bf16.mxu0 0
        %2565 = vmatpush2.bf16.msra.mxu0 0
        %2566 = vmatprep.subr.bf16.mxu0 0
        %2567 = vmatpush2.bf16.msra.mxu0 0
        %2568 = vmatprep.subr.bf16.mxu0 0
        %2569 = vmatpush2.bf16.msra.mxu0 0
        %2570 = vmatprep.subr.bf16.mxu0 0
        %2571 = vmatpush2.bf16.msra.mxu0 0
        %2572 = vmatprep.subr.bf16.mxu0 0
        %2573 = vmatpush2.bf16.msra.mxu0 0
        %2574 = vmatprep.subr.bf16.mxu0 0
        %2575 = vmatpush2.bf16.msra.mxu0 0
        %2576 = vmatprep.subr.bf16.mxu0 0
        %2577 = vmatpush2.bf16.msra.mxu0 0
        %2578 = vmatprep.subr.bf16.mxu0 0
        %2579 = vmatpush2.bf16.msra.mxu0 0
        %2580 = vmatprep.mubr.bf16.mxu0 0
        %2581 = vmatmul.mubr.bf16.gmra.mxu0 %v2501
        %v2582 = vpop.f32.mrf.mxu0
        %v2583 = vadd.f32 0.0, %v2582
        %v2584 = vpop.f32.mrf.mxu0
        %v2585 = vpop.f32.mrf.mxu0
        %v2586 = vadd.f32 0.0, %v2585
        %v2587 = vpop.f32.mrf.mxu0
        %2588 = vmatprep.mubr.bf16.mxu0 0
        %2589 = vmatmul.mubr.bf16.gmra.mxu0 %v2504
        %v2590 = vpop.f32.mrf.mxu0
        %v2591 = vadd.f32 0.0, %v2590
        %v2592 = vpop.f32.mrf.mxu0
        %v2593 = vpop.f32.mrf.mxu0
        %v2594 = vadd.f32 0.0, %v2593
        %v2595 = vpop.f32.mrf.mxu0
        %2596 = vmatprep.mubr.bf16.mxu0 0
        %2597 = vmatmul.mubr.bf16.gmra.mxu0 %v2507
        %v2598 = vpop.f32.mrf.mxu0
        %v2599 = vadd.f32 0.0, %v2598
        %v2600 = vpop.f32.mrf.mxu0
        %v2601 = vpop.f32.mrf.mxu0
        %v2602 = vadd.f32 0.0, %v2601
        %v2603 = vpop.f32.mrf.mxu0
        %2604 = vmatprep.mubr.bf16.mxu0 0
        %2605 = vmatmul.mubr.bf16.gmra.mxu0 %v2510
        %v2606 = vpop.f32.mrf.mxu0
        %v2607 = vadd.f32 0.0, %v2606
        %v2608 = vpop.f32.mrf.mxu0
        %v2609 = vpop.f32.mrf.mxu0
        %v2610 = vadd.f32 0.0, %v2609
        %v2611 = vpop.f32.mrf.mxu0
        %2612 = vmatprep.mubr.bf16.mxu0 0
        %2613 = vmatmul.mubr.bf16.gmra.mxu0 %v2513
        %v2614 = vpop.f32.mrf.mxu0
        %v2615 = vadd.f32 0.0, %v2614
        %v2616 = vpop.f32.mrf.mxu0
        %v2617 = vpop.f32.mrf.mxu0
        %v2618 = vadd.f32 0.0, %v2617
        %v2619 = vpop.f32.mrf.mxu0
        %2620 = vmatprep.mubr.bf16.mxu0 0
        %2621 = vmatmul.mubr.bf16.gmra.mxu0 %v2516
        %v2622 = vpop.f32.mrf.mxu0
        %v2623 = vadd.f32 0.0, %v2622
        %v2624 = vpop.f32.mrf.mxu0
        %v2625 = vpop.f32.mrf.mxu0
        %v2626 = vadd.f32 0.0, %v2625
        %v2627 = vpop.f32.mrf.mxu0
        %2628 = vmatprep.mubr.bf16.mxu0 0
        %2629 = vmatmul.mubr.bf16.gmra.mxu0 %v2519
        %v2630 = vpop.f32.mrf.mxu0
        %v2631 = vadd.f32 0.0, %v2630
        %v2632 = vpop.f32.mrf.mxu0
        %v2633 = vpop.f32.mrf.mxu0
        %v2634 = vadd.f32 0.0, %v2633
        %v2635 = vpop.f32.mrf.mxu0
        %2636 = vmatprep.mubr.bf16.mxu0 0
        %2637 = vmatmul.mubr.bf16.gmra.mxu0 %v2522
        %v2638 = vpop.f32.mrf.mxu0
        %v2639 = vadd.f32 0.0, %v2638
        %v2640 = vpop.f32.mrf.mxu0
        %v2641 = vpop.f32.mrf.mxu0
        %v2642 = vadd.f32 0.0, %v2641
        %v2643 = vpop.f32.mrf.mxu0
        %2644 = vmatprep.mubr.bf16.mxu0 0
        %2645 = vmatmul.mubr.bf16.gmra.mxu0 %v2525
        %v2646 = vpop.f32.mrf.mxu0
        %v2647 = vadd.f32 0.0, %v2646
        %v2648 = vpop.f32.mrf.mxu0
        %v2649 = vpop.f32.mrf.mxu0
        %v2650 = vadd.f32 0.0, %v2649
        %v2651 = vpop.f32.mrf.mxu0
        %2652 = vmatprep.mubr.bf16.mxu0 0
        %2653 = vmatmul.mubr.bf16.gmra.mxu0 %v2528
        %v2654 = vpop.f32.mrf.mxu0
        %v2655 = vadd.f32 0.0, %v2654
        %v2656 = vpop.f32.mrf.mxu0
        %v2657 = vpop.f32.mrf.mxu0
        %v2658 = vadd.f32 0.0, %v2657
        %v2659 = vpop.f32.mrf.mxu0
        %2660 = vmatprep.mubr.bf16.mxu0 0
        %2661 = vmatmul.mubr.bf16.gmra.mxu0 %v2531
        %v2662 = vpop.f32.mrf.mxu0
        %v2663 = vadd.f32 0.0, %v2662
        %v2664 = vpop.f32.mrf.mxu0
        %v2665 = vpop.f32.mrf.mxu0
        %v2666 = vadd.f32 0.0, %v2665
        %v2667 = vpop.f32.mrf.mxu0
        %2668 = vmatprep.mubr.bf16.mxu0 0
        %2669 = vmatmul.mubr.bf16.gmra.mxu0 %v2534
        %v2670 = vpop.f32.mrf.mxu0
        %v2671 = vadd.f32 0.0, %v2670
        %v2672 = vpop.f32.mrf.mxu0
        %v2673 = vpop.f32.mrf.mxu0
        %v2674 = vadd.f32 0.0, %v2673
        %v2675 = vpop.f32.mrf.mxu0
        %2676 = vmatprep.mubr.bf16.mxu0 0
        %2677 = vmatmul.mubr.bf16.gmra.mxu0 %v2537
        %v2678 = vpop.f32.mrf.mxu0
        %v2679 = vadd.f32 0.0, %v2678
        %v2680 = vpop.f32.mrf.mxu0
        %v2681 = vpop.f32.mrf.mxu0
        %v2682 = vadd.f32 0.0, %v2681
        %v2683 = vpop.f32.mrf.mxu0
        %2684 = vmatprep.mubr.bf16.mxu0 0
        %2685 = vmatmul.mubr.bf16.gmra.mxu0 %v2540
        %v2686 = vpop.f32.mrf.mxu0
        %v2687 = vadd.f32 0.0, %v2686
        %v2688 = vpop.f32.mrf.mxu0
        %v2689 = vpop.f32.mrf.mxu0
        %v2690 = vadd.f32 0.0, %v2689
        %v2691 = vpop.f32.mrf.mxu0
        %2692 = vmatprep.mubr.bf16.mxu0 0
        %2693 = vmatmul.mubr.bf16.gmra.mxu0 %v2543
        %v2694 = vpop.f32.mrf.mxu0
        %v2695 = vadd.f32 0.0, %v2694
        %v2696 = vpop.f32.mrf.mxu0
        %v2697 = vpop.f32.mrf.mxu0
        %v2698 = vadd.f32 0.0, %v2697
        %v2699 = vpop.f32.mrf.mxu0
        %2700 = vmatprep.mubr.bf16.mxu0 0
        %2701 = vmatmul.mubr.bf16.gmra.mxu0 %v2546
        %v2702 = vpop.f32.mrf.mxu0
        %v2703 = vadd.f32 0.0, %v2702
        %v2704 = vpop.f32.mrf.mxu0
        %v2705 = vpop.f32.mrf.mxu0
        %v2706 = vadd.f32 0.0, %v2705
        %v2707 = vpop.f32.mrf.mxu0
        %2708 = vdwg.mxu0
        %vm2709 = vcmp.gt.f32.partialorder %v2583, 0.0
        %vm2710 = vcmp.gt.f32.partialorder %v2586, 0.0
        %vm2711 = vcmp.gt.f32.partialorder %v2591, 0.0
        %vm2712 = vcmp.gt.f32.partialorder %v2594, 0.0
        %vm2713 = vcmp.gt.f32.partialorder %v2599, 0.0
        %vm2714 = vcmp.gt.f32.partialorder %v2602, 0.0
        %vm2715 = vcmp.gt.f32.partialorder %v2607, 0.0
        %vm2716 = vcmp.gt.f32.partialorder %v2610, 0.0
        %vm2717 = vcmp.gt.f32.partialorder %v2615, 0.0
        %vm2718 = vcmp.gt.f32.partialorder %v2618, 0.0
        %vm2719 = vcmp.gt.f32.partialorder %v2623, 0.0
        %vm2720 = vcmp.gt.f32.partialorder %v2626, 0.0
        %vm2721 = vcmp.gt.f32.partialorder %v2631, 0.0
        %vm2722 = vcmp.gt.f32.partialorder %v2634, 0.0
        %vm2723 = vcmp.gt.f32.partialorder %v2639, 0.0
        %vm2724 = vcmp.gt.f32.partialorder %v2642, 0.0
        %vm2725 = vcmp.gt.f32.partialorder %v2647, 0.0
        %vm2726 = vcmp.gt.f32.partialorder %v2650, 0.0
        %vm2727 = vcmp.gt.f32.partialorder %v2655, 0.0
        %vm2728 = vcmp.gt.f32.partialorder %v2658, 0.0
        %vm2729 = vcmp.gt.f32.partialorder %v2663, 0.0
        %vm2730 = vcmp.gt.f32.partialorder %v2666, 0.0
        %vm2731 = vcmp.gt.f32.partialorder %v2671, 0.0
        %vm2732 = vcmp.gt.f32.partialorder %v2674, 0.0
        %vm2733 = vcmp.gt.f32.partialorder %v2679, 0.0
        %vm2734 = vcmp.gt.f32.partialorder %v2682, 0.0
        %vm2735 = vcmp.gt.f32.partialorder %v2687, 0.0
        %vm2736 = vcmp.gt.f32.partialorder %v2690, 0.0
        %vm2737 = vcmp.gt.f32.partialorder %v2695, 0.0
        %vm2738 = vcmp.gt.f32.partialorder %v2698, 0.0
        %vm2739 = vcmp.gt.f32.partialorder %v2703, 0.0
        %vm2740 = vcmp.gt.f32.partialorder %v2706, 0.0
        %v2741 = vmul.f32 %v2583, 0.01
        %v2742 = vmul.f32 %v2586, 0.01
        %v2743 = vmul.f32 %v2591, 0.01
        %v2744 = vmul.f32 %v2594, 0.01
        %v2745 = vmul.f32 %v2599, 0.01
        %v2746 = vmul.f32 %v2602, 0.01
        %v2747 = vmul.f32 %v2607, 0.01
        %v2748 = vmul.f32 %v2610, 0.01
        %v2749 = vmul.f32 %v2615, 0.01
        %v2750 = vmul.f32 %v2618, 0.01
        %v2751 = vmul.f32 %v2623, 0.01
        %v2752 = vmul.f32 %v2626, 0.01
        %v2753 = vmul.f32 %v2631, 0.01
        %v2754 = vmul.f32 %v2634, 0.01
        %v2755 = vmul.f32 %v2639, 0.01
        %v2756 = vmul.f32 %v2642, 0.01
        %v2757 = vmul.f32 %v2647, 0.01
        %v2758 = vmul.f32 %v2650, 0.01
        %v2759 = vmul.f32 %v2655, 0.01
        %v2760 = vmul.f32 %v2658, 0.01
        %v2761 = vmul.f32 %v2663, 0.01
        %v2762 = vmul.f32 %v2666, 0.01
        %v2763 = vmul.f32 %v2671, 0.01
        %v2764 = vmul.f32 %v2674, 0.01
        %v2765 = vmul.f32 %v2679, 0.01
        %v2766 = vmul.f32 %v2682, 0.01
        %v2767 = vmul.f32 %v2687, 0.01
        %v2768 = vmul.f32 %v2690, 0.01
        %v2769 = vmul.f32 %v2695, 0.01
        %v2770 = vmul.f32 %v2698, 0.01
        %v2771 = vmul.f32 %v2703, 0.01
        %v2772 = vmul.f32 %v2706, 0.01
        %v2773 = vsel %vm2709, %v2583, %v2741
        %v2774 = vsel %vm2710, %v2586, %v2742
        %v2775 = vsel %vm2711, %v2591, %v2743
        %v2776 = vsel %vm2712, %v2594, %v2744
        %v2777 = vsel %vm2713, %v2599, %v2745
        %v2778 = vsel %vm2714, %v2602, %v2746
        %v2779 = vsel %vm2715, %v2607, %v2747
        %v2780 = vsel %vm2716, %v2610, %v2748
        %v2781 = vsel %vm2717, %v2615, %v2749
        %v2782 = vsel %vm2718, %v2618, %v2750
        %v2783 = vsel %vm2719, %v2623, %v2751
        %v2784 = vsel %vm2720, %v2626, %v2752
        %v2785 = vsel %vm2721, %v2631, %v2753
        %v2786 = vsel %vm2722, %v2634, %v2754
        %v2787 = vsel %vm2723, %v2639, %v2755
        %v2788 = vsel %vm2724, %v2642, %v2756
        %v2789 = vsel %vm2725, %v2647, %v2757
        %v2790 = vsel %vm2726, %v2650, %v2758
        %v2791 = vsel %vm2727, %v2655, %v2759
        %v2792 = vsel %vm2728, %v2658, %v2760
        %v2793 = vsel %vm2729, %v2663, %v2761
        %v2794 = vsel %vm2730, %v2666, %v2762
        %v2795 = vsel %vm2731, %v2671, %v2763
        %v2796 = vsel %vm2732, %v2674, %v2764
        %v2797 = vsel %vm2733, %v2679, %v2765
        %v2798 = vsel %vm2734, %v2682, %v2766
        %v2799 = vsel %vm2735, %v2687, %v2767
        %v2800 = vsel %vm2736, %v2690, %v2768
        %v2801 = vsel %vm2737, %v2695, %v2769
        %v2802 = vsel %vm2738, %v2698, %v2770
        %v2803 = vsel %vm2739, %v2703, %v2771
        %v2804 = vsel %vm2740, %v2706, %v2772
        %v2805 = vmul.f32 %v2773, %v1165
        %v2806 = vmul.f32 %v2774, %v1165
        %v2807 = vmul.f32 %v2775, %v1165
        %v2808 = vmul.f32 %v2776, %v1165
        %v2809 = vmul.f32 %v2777, %v1165
        %v2810 = vmul.f32 %v2778, %v1165
        %v2811 = vmul.f32 %v2779, %v1165
        %v2812 = vmul.f32 %v2780, %v1165
        %v2813 = vmul.f32 %v2781, %v1165
        %v2814 = vmul.f32 %v2782, %v1165
        %v2815 = vmul.f32 %v2783, %v1165
        %v2816 = vmul.f32 %v2784, %v1165
        %v2817 = vmul.f32 %v2785, %v1165
        %v2818 = vmul.f32 %v2786, %v1165
        %v2819 = vmul.f32 %v2787, %v1165
        %v2820 = vmul.f32 %v2788, %v1165
        %v2821 = vmul.f32 %v2789, %v1165
        %v2822 = vmul.f32 %v2790, %v1165
        %v2823 = vmul.f32 %v2791, %v1165
        %v2824 = vmul.f32 %v2792, %v1165
        %v2825 = vmul.f32 %v2793, %v1165
        %v2826 = vmul.f32 %v2794, %v1165
        %v2827 = vmul.f32 %v2795, %v1165
        %v2828 = vmul.f32 %v2796, %v1165
        %v2829 = vmul.f32 %v2797, %v1165
        %v2830 = vmul.f32 %v2798, %v1165
        %v2831 = vmul.f32 %v2799, %v1165
        %v2832 = vmul.f32 %v2800, %v1165
        %v2833 = vmul.f32 %v2801, %v1165
        %v2834 = vmul.f32 %v2802, %v1165
        %v2835 = vmul.f32 %v2803, %v1165
        %v2836 = vmul.f32 %v2804, %v1165
        %v2837 = vsel %vm855, %v2805, 0.0
        %2838 = vadd.xlane.f32.xlu0 %v2837
        %v2839 = vpop.xlane.xlu0 %2838
        %v2840 = vsel %vm855, %v2806, 0.0
        %2841 = vadd.xlane.f32.xlu0 %v2840
        %v2842 = vpop.xlane.xlu0 %2841
        %v2843 = vsel %vm855, %v2807, 0.0
        %2844 = vadd.xlane.f32.xlu0 %v2843
        %v2845 = vpop.xlane.xlu0 %2844
        %v2846 = vsel %vm855, %v2808, 0.0
        %2847 = vadd.xlane.f32.xlu0 %v2846
        %v2848 = vpop.xlane.xlu0 %2847
        %v2849 = vsel %vm855, %v2809, 0.0
        %2850 = vadd.xlane.f32.xlu0 %v2849
        %v2851 = vpop.xlane.xlu0 %2850
        %v2852 = vsel %vm855, %v2810, 0.0
        %2853 = vadd.xlane.f32.xlu0 %v2852
        %v2854 = vpop.xlane.xlu0 %2853
        %v2855 = vsel %vm855, %v2811, 0.0
        %2856 = vadd.xlane.f32.xlu0 %v2855
        %v2857 = vpop.xlane.xlu0 %2856
        %v2858 = vsel %vm855, %v2812, 0.0
        %2859 = vadd.xlane.f32.xlu0 %v2858
        %v2860 = vpop.xlane.xlu0 %2859
        %v2861 = vsel %vm855, %v2813, 0.0
        %2862 = vadd.xlane.f32.xlu0 %v2861
        %v2863 = vpop.xlane.xlu0 %2862
        %v2864 = vsel %vm855, %v2814, 0.0
        %2865 = vadd.xlane.f32.xlu0 %v2864
        %v2866 = vpop.xlane.xlu0 %2865
        %v2867 = vsel %vm855, %v2815, 0.0
        %2868 = vadd.xlane.f32.xlu0 %v2867
        %v2869 = vpop.xlane.xlu0 %2868
        %v2870 = vsel %vm855, %v2816, 0.0
        %2871 = vadd.xlane.f32.xlu0 %v2870
        %v2872 = vpop.xlane.xlu0 %2871
        %v2873 = vsel %vm855, %v2817, 0.0
        %2874 = vadd.xlane.f32.xlu0 %v2873
        %v2875 = vpop.xlane.xlu0 %2874
        %v2876 = vsel %vm855, %v2818, 0.0
        %2877 = vadd.xlane.f32.xlu0 %v2876
        %v2878 = vpop.xlane.xlu0 %2877
        %v2879 = vsel %vm855, %v2819, 0.0
        %2880 = vadd.xlane.f32.xlu0 %v2879
        %v2881 = vpop.xlane.xlu0 %2880
        %v2882 = vsel %vm855, %v2820, 0.0
        %2883 = vadd.xlane.f32.xlu0 %v2882
        %v2884 = vpop.xlane.xlu0 %2883
        %v2885 = vsel %vm855, %v2821, 0.0
        %2886 = vadd.xlane.f32.xlu0 %v2885
        %v2887 = vpop.xlane.xlu0 %2886
        %v2888 = vsel %vm855, %v2822, 0.0
        %2889 = vadd.xlane.f32.xlu0 %v2888
        %v2890 = vpop.xlane.xlu0 %2889
        %v2891 = vsel %vm855, %v2823, 0.0
        %2892 = vadd.xlane.f32.xlu0 %v2891
        %v2893 = vpop.xlane.xlu0 %2892
        %v2894 = vsel %vm855, %v2824, 0.0
        %2895 = vadd.xlane.f32.xlu0 %v2894
        %v2896 = vpop.xlane.xlu0 %2895
        %v2897 = vsel %vm855, %v2825, 0.0
        %2898 = vadd.xlane.f32.xlu0 %v2897
        %v2899 = vpop.xlane.xlu0 %2898
        %v2900 = vsel %vm855, %v2826, 0.0
        %2901 = vadd.xlane.f32.xlu0 %v2900
        %v2902 = vpop.xlane.xlu0 %2901
        %v2903 = vsel %vm855, %v2827, 0.0
        %2904 = vadd.xlane.f32.xlu0 %v2903
        %v2905 = vpop.xlane.xlu0 %2904
        %v2906 = vsel %vm855, %v2828, 0.0
        %2907 = vadd.xlane.f32.xlu0 %v2906
        %v2908 = vpop.xlane.xlu0 %2907
        %v2909 = vsel %vm855, %v2829, 0.0
        %2910 = vadd.xlane.f32.xlu0 %v2909
        %v2911 = vpop.xlane.xlu0 %2910
        %v2912 = vsel %vm855, %v2830, 0.0
        %2913 = vadd.xlane.f32.xlu0 %v2912
        %v2914 = vpop.xlane.xlu0 %2913
        %v2915 = vsel %vm855, %v2831, 0.0
        %2916 = vadd.xlane.f32.xlu0 %v2915
        %v2917 = vpop.xlane.xlu0 %2916
        %v2918 = vsel %vm855, %v2832, 0.0
        %2919 = vadd.xlane.f32.xlu0 %v2918
        %v2920 = vpop.xlane.xlu0 %2919
        %v2921 = vsel %vm855, %v2833, 0.0
        %2922 = vadd.xlane.f32.xlu0 %v2921
        %v2923 = vpop.xlane.xlu0 %2922
        %v2924 = vsel %vm855, %v2834, 0.0
        %2925 = vadd.xlane.f32.xlu0 %v2924
        %v2926 = vpop.xlane.xlu0 %2925
        %v2927 = vsel %vm855, %v2835, 0.0
        %2928 = vadd.xlane.f32.xlu0 %v2927
        %v2929 = vpop.xlane.xlu0 %2928
        %v2930 = vsel %vm855, %v2836, 0.0
        %2931 = vadd.xlane.f32.xlu0 %v2930
        %v2932 = vpop.xlane.xlu0 %2931
        %v2933 = vmax.f32 %v1201, %v1747
        %v2934 = vmax.f32 %v1204, %v1750
        %v2935 = vmax.f32 %v1207, %v1753
        %v2936 = vmax.f32 %v1210, %v1756
        %v2937 = vmax.f32 %v1213, %v1759
        %v2938 = vmax.f32 %v1216, %v1762
        %v2939 = vmax.f32 %v1219, %v1765
        %v2940 = vmax.f32 %v1222, %v1768
        %v2941 = vmax.f32 %v1225, %v1771
        %v2942 = vmax.f32 %v1228, %v1774
        %v2943 = vmax.f32 %v1231, %v1777
        %v2944 = vmax.f32 %v1234, %v1780
        %v2945 = vmax.f32 %v1237, %v1783
        %v2946 = vmax.f32 %v1240, %v1786
        %v2947 = vmax.f32 %v1243, %v1789
        %v2948 = vmax.f32 %v1246, %v1792
        %v2949 = vmax.f32 %v1249, %v1795
        %v2950 = vmax.f32 %v1252, %v1798
        %v2951 = vmax.f32 %v1255, %v1801
        %v2952 = vmax.f32 %v1258, %v1804
        %v2953 = vmax.f32 %v1261, %v1807
        %v2954 = vmax.f32 %v1264, %v1810
        %v2955 = vmax.f32 %v1267, %v1813
        %v2956 = vmax.f32 %v1270, %v1816
        %v2957 = vmax.f32 %v1273, %v1819
        %v2958 = vmax.f32 %v1276, %v1822
        %v2959 = vmax.f32 %v1279, %v1825
        %v2960 = vmax.f32 %v1282, %v1828
        %v2961 = vmax.f32 %v1285, %v1831
        %v2962 = vmax.f32 %v1288, %v1834
        %v2963 = vmax.f32 %v1291, %v1837
        %v2964 = vmax.f32 %v1294, %v1840
        %v2965 = vmax.f32 %v2933, %v2293
        %v2966 = vmax.f32 %v2934, %v2296
        %v2967 = vmax.f32 %v2935, %v2299
        %v2968 = vmax.f32 %v2936, %v2302
        %v2969 = vmax.f32 %v2937, %v2305
        %v2970 = vmax.f32 %v2938, %v2308
        %v2971 = vmax.f32 %v2939, %v2311
        %v2972 = vmax.f32 %v2940, %v2314
        %v2973 = vmax.f32 %v2941, %v2317
        %v2974 = vmax.f32 %v2942, %v2320
        %v2975 = vmax.f32 %v2943, %v2323
        %v2976 = vmax.f32 %v2944, %v2326
        %v2977 = vmax.f32 %v2945, %v2329
        %v2978 = vmax.f32 %v2946, %v2332
        %v2979 = vmax.f32 %v2947, %v2335
        %v2980 = vmax.f32 %v2948, %v2338
        %v2981 = vmax.f32 %v2949, %v2341
        %v2982 = vmax.f32 %v2950, %v2344
        %v2983 = vmax.f32 %v2951, %v2347
        %v2984 = vmax.f32 %v2952, %v2350
        %v2985 = vmax.f32 %v2953, %v2353
        %v2986 = vmax.f32 %v2954, %v2356
        %v2987 = vmax.f32 %v2955, %v2359
        %v2988 = vmax.f32 %v2956, %v2362
        %v2989 = vmax.f32 %v2957, %v2365
        %v2990 = vmax.f32 %v2958, %v2368
        %v2991 = vmax.f32 %v2959, %v2371
        %v2992 = vmax.f32 %v2960, %v2374
        %v2993 = vmax.f32 %v2961, %v2377
        %v2994 = vmax.f32 %v2962, %v2380
        %v2995 = vmax.f32 %v2963, %v2383
        %v2996 = vmax.f32 %v2964, %v2386
        %v2997 = vmax.f32 %v2965, %v2839
        %v2998 = vmax.f32 %v2966, %v2842
        %v2999 = vmax.f32 %v2967, %v2845
        %v3000 = vmax.f32 %v2968, %v2848
        %v3001 = vmax.f32 %v2969, %v2851
        %v3002 = vmax.f32 %v2970, %v2854
        %v3003 = vmax.f32 %v2971, %v2857
        %v3004 = vmax.f32 %v2972, %v2860
        %v3005 = vmax.f32 %v2973, %v2863
        %v3006 = vmax.f32 %v2974, %v2866
        %v3007 = vmax.f32 %v2975, %v2869
        %v3008 = vmax.f32 %v2976, %v2872
        %v3009 = vmax.f32 %v2977, %v2875
        %v3010 = vmax.f32 %v2978, %v2878
        %v3011 = vmax.f32 %v2979, %v2881
        %v3012 = vmax.f32 %v2980, %v2884
        %v3013 = vmax.f32 %v2981, %v2887
        %v3014 = vmax.f32 %v2982, %v2890
        %v3015 = vmax.f32 %v2983, %v2893
        %v3016 = vmax.f32 %v2984, %v2896
        %v3017 = vmax.f32 %v2985, %v2899
        %v3018 = vmax.f32 %v2986, %v2902
        %v3019 = vmax.f32 %v2987, %v2905
        %v3020 = vmax.f32 %v2988, %v2908
        %v3021 = vmax.f32 %v2989, %v2911
        %v3022 = vmax.f32 %v2990, %v2914
        %v3023 = vmax.f32 %v2991, %v2917
        %v3024 = vmax.f32 %v2992, %v2920
        %v3025 = vmax.f32 %v2993, %v2923
        %v3026 = vmax.f32 %v2994, %v2926
        %v3027 = vmax.f32 %v2995, %v2929
        %v3028 = vmax.f32 %v2996, %v2932
        %v3029 = vsub.f32 %v1201, %v2997
        %v3030 = vsub.f32 %v1204, %v2998
        %v3031 = vsub.f32 %v1207, %v2999
        %v3032 = vsub.f32 %v1210, %v3000
        %v3033 = vsub.f32 %v1213, %v3001
        %v3034 = vsub.f32 %v1216, %v3002
        %v3035 = vsub.f32 %v1219, %v3003
        %v3036 = vsub.f32 %v1222, %v3004
        %v3037 = vsub.f32 %v1225, %v3005
        %v3038 = vsub.f32 %v1228, %v3006
        %v3039 = vsub.f32 %v1231, %v3007
        %v3040 = vsub.f32 %v1234, %v3008
        %v3041 = vsub.f32 %v1237, %v3009
        %v3042 = vsub.f32 %v1240, %v3010
        %v3043 = vsub.f32 %v1243, %v3011
        %v3044 = vsub.f32 %v1246, %v3012
        %v3045 = vsub.f32 %v1249, %v3013
        %v3046 = vsub.f32 %v1252, %v3014
        %v3047 = vsub.f32 %v1255, %v3015
        %v3048 = vsub.f32 %v1258, %v3016
        %v3049 = vsub.f32 %v1261, %v3017
        %v3050 = vsub.f32 %v1264, %v3018
        %v3051 = vsub.f32 %v1267, %v3019
        %v3052 = vsub.f32 %v1270, %v3020
        %v3053 = vsub.f32 %v1273, %v3021
        %v3054 = vsub.f32 %v1276, %v3022
        %v3055 = vsub.f32 %v1279, %v3023
        %v3056 = vsub.f32 %v1282, %v3024
        %v3057 = vsub.f32 %v1285, %v3025
        %v3058 = vsub.f32 %v1288, %v3026
        %v3059 = vsub.f32 %v1291, %v3027
        %v3060 = vsub.f32 %v1294, %v3028
        %v3061 = vmul.f32 %v3029, 1.442695
        %v3062 = vpow.pop %v3061
        %v3063 = vmul.f32 %v3030, 1.442695
        %v3064 = vpow.pop %v3063
        %v3065 = vmul.f32 %v3031, 1.442695
        %v3066 = vpow.pop %v3065
        %v3067 = vmul.f32 %v3032, 1.442695
        %v3068 = vpow.pop %v3067
        %v3069 = vmul.f32 %v3033, 1.442695
        %v3070 = vpow.pop %v3069
        %v3071 = vmul.f32 %v3034, 1.442695
        %v3072 = vpow.pop %v3071
        %v3073 = vmul.f32 %v3035, 1.442695
        %v3074 = vpow.pop %v3073
        %v3075 = vmul.f32 %v3036, 1.442695
        %v3076 = vpow.pop %v3075
        %v3077 = vmul.f32 %v3037, 1.442695
        %v3078 = vpow.pop %v3077
        %v3079 = vmul.f32 %v3038, 1.442695
        %v3080 = vpow.pop %v3079
        %v3081 = vmul.f32 %v3039, 1.442695
        %v3082 = vpow.pop %v3081
        %v3083 = vmul.f32 %v3040, 1.442695
        %v3084 = vpow.pop %v3083
        %v3085 = vmul.f32 %v3041, 1.442695
        %v3086 = vpow.pop %v3085
        %v3087 = vmul.f32 %v3042, 1.442695
        %v3088 = vpow.pop %v3087
        %v3089 = vmul.f32 %v3043, 1.442695
        %v3090 = vpow.pop %v3089
        %v3091 = vmul.f32 %v3044, 1.442695
        %v3092 = vpow.pop %v3091
        %v3093 = vmul.f32 %v3045, 1.442695
        %v3094 = vpow.pop %v3093
        %v3095 = vmul.f32 %v3046, 1.442695
        %v3096 = vpow.pop %v3095
        %v3097 = vmul.f32 %v3047, 1.442695
        %v3098 = vpow.pop %v3097
        %v3099 = vmul.f32 %v3048, 1.442695
        %v3100 = vpow.pop %v3099
        %v3101 = vmul.f32 %v3049, 1.442695
        %v3102 = vpow.pop %v3101
        %v3103 = vmul.f32 %v3050, 1.442695
        %v3104 = vpow.pop %v3103
        %v3105 = vmul.f32 %v3051, 1.442695
        %v3106 = vpow.pop %v3105
        %v3107 = vmul.f32 %v3052, 1.442695
        %v3108 = vpow.pop %v3107
        %v3109 = vmul.f32 %v3053, 1.442695
        %v3110 = vpow.pop %v3109
        %v3111 = vmul.f32 %v3054, 1.442695
        %v3112 = vpow.pop %v3111
        %v3113 = vmul.f32 %v3055, 1.442695
        %v3114 = vpow.pop %v3113
        %v3115 = vmul.f32 %v3056, 1.442695
        %v3116 = vpow.pop %v3115
        %v3117 = vmul.f32 %v3057, 1.442695
        %v3118 = vpow.pop %v3117
        %v3119 = vmul.f32 %v3058, 1.442695
        %v3120 = vpow.pop %v3119
        %v3121 = vmul.f32 %v3059, 1.442695
        %v3122 = vpow.pop %v3121
        %v3123 = vmul.f32 %v3060, 1.442695
        %v3124 = vpow.pop %v3123
        %v3125 = vsub.f32 %v1747, %v2997
        %v3126 = vsub.f32 %v1750, %v2998
        %v3127 = vsub.f32 %v1753, %v2999
        %v3128 = vsub.f32 %v1756, %v3000
        %v3129 = vsub.f32 %v1759, %v3001
        %v3130 = vsub.f32 %v1762, %v3002
        %v3131 = vsub.f32 %v1765, %v3003
        %v3132 = vsub.f32 %v1768, %v3004
        %v3133 = vsub.f32 %v1771, %v3005
        %v3134 = vsub.f32 %v1774, %v3006
        %v3135 = vsub.f32 %v1777, %v3007
        %v3136 = vsub.f32 %v1780, %v3008
        %v3137 = vsub.f32 %v1783, %v3009
        %v3138 = vsub.f32 %v1786, %v3010
        %v3139 = vsub.f32 %v1789, %v3011
        %v3140 = vsub.f32 %v1792, %v3012
        %v3141 = vsub.f32 %v1795, %v3013
        %v3142 = vsub.f32 %v1798, %v3014
        %v3143 = vsub.f32 %v1801, %v3015
        %v3144 = vsub.f32 %v1804, %v3016
        %v3145 = vsub.f32 %v1807, %v3017
        %v3146 = vsub.f32 %v1810, %v3018
        %v3147 = vsub.f32 %v1813, %v3019
        %v3148 = vsub.f32 %v1816, %v3020
        %v3149 = vsub.f32 %v1819, %v3021
        %v3150 = vsub.f32 %v1822, %v3022
        %v3151 = vsub.f32 %v1825, %v3023
        %v3152 = vsub.f32 %v1828, %v3024
        %v3153 = vsub.f32 %v1831, %v3025
        %v3154 = vsub.f32 %v1834, %v3026
        %v3155 = vsub.f32 %v1837, %v3027
        %v3156 = vsub.f32 %v1840, %v3028
        %v3157 = vmul.f32 %v3125, 1.442695
        %v3158 = vpow.pop %v3157
        %v3159 = vmul.f32 %v3126, 1.442695
        %v3160 = vpow.pop %v3159
        %v3161 = vmul.f32 %v3127, 1.442695
        %v3162 = vpow.pop %v3161
        %v3163 = vmul.f32 %v3128, 1.442695
        %v3164 = vpow.pop %v3163
        %v3165 = vmul.f32 %v3129, 1.442695
        %v3166 = vpow.pop %v3165
        %v3167 = vmul.f32 %v3130, 1.442695
        %v3168 = vpow.pop %v3167
        %v3169 = vmul.f32 %v3131, 1.442695
        %v3170 = vpow.pop %v3169
        %v3171 = vmul.f32 %v3132, 1.442695
        %v3172 = vpow.pop %v3171
        %v3173 = vmul.f32 %v3133, 1.442695
        %v3174 = vpow.pop %v3173
        %v3175 = vmul.f32 %v3134, 1.442695
        %v3176 = vpow.pop %v3175
        %v3177 = vmul.f32 %v3135, 1.442695
        %v3178 = vpow.pop %v3177
        %v3179 = vmul.f32 %v3136, 1.442695
        %v3180 = vpow.pop %v3179
        %v3181 = vmul.f32 %v3137, 1.442695
        %v3182 = vpow.pop %v3181
        %v3183 = vmul.f32 %v3138, 1.442695
        %v3184 = vpow.pop %v3183
        %v3185 = vmul.f32 %v3139, 1.442695
        %v3186 = vpow.pop %v3185
        %v3187 = vmul.f32 %v3140, 1.442695
        %v3188 = vpow.pop %v3187
        %v3189 = vmul.f32 %v3141, 1.442695
        %v3190 = vpow.pop %v3189
        %v3191 = vmul.f32 %v3142, 1.442695
        %v3192 = vpow.pop %v3191
        %v3193 = vmul.f32 %v3143, 1.442695
        %v3194 = vpow.pop %v3193
        %v3195 = vmul.f32 %v3144, 1.442695
        %v3196 = vpow.pop %v3195
        %v3197 = vmul.f32 %v3145, 1.442695
        %v3198 = vpow.pop %v3197
        %v3199 = vmul.f32 %v3146, 1.442695
        %v3200 = vpow.pop %v3199
        %v3201 = vmul.f32 %v3147, 1.442695
        %v3202 = vpow.pop %v3201
        %v3203 = vmul.f32 %v3148, 1.442695
        %v3204 = vpow.pop %v3203
        %v3205 = vmul.f32 %v3149, 1.442695
        %v3206 = vpow.pop %v3205
        %v3207 = vmul.f32 %v3150, 1.442695
        %v3208 = vpow.pop %v3207
        %v3209 = vmul.f32 %v3151, 1.442695
        %v3210 = vpow.pop %v3209
        %v3211 = vmul.f32 %v3152, 1.442695
        %v3212 = vpow.pop %v3211
        %v3213 = vmul.f32 %v3153, 1.442695
        %v3214 = vpow.pop %v3213
        %v3215 = vmul.f32 %v3154, 1.442695
        %v3216 = vpow.pop %v3215
        %v3217 = vmul.f32 %v3155, 1.442695
        %v3218 = vpow.pop %v3217
        %v3219 = vmul.f32 %v3156, 1.442695
        %v3220 = vpow.pop %v3219
        %v3221 = vsub.f32 %v2293, %v2997
        %v3222 = vsub.f32 %v2296, %v2998
        %v3223 = vsub.f32 %v2299, %v2999
        %v3224 = vsub.f32 %v2302, %v3000
        %v3225 = vsub.f32 %v2305, %v3001
        %v3226 = vsub.f32 %v2308, %v3002
        %v3227 = vsub.f32 %v2311, %v3003
        %v3228 = vsub.f32 %v2314, %v3004
        %v3229 = vsub.f32 %v2317, %v3005
        %v3230 = vsub.f32 %v2320, %v3006
        %v3231 = vsub.f32 %v2323, %v3007
        %v3232 = vsub.f32 %v2326, %v3008
        %v3233 = vsub.f32 %v2329, %v3009
        %v3234 = vsub.f32 %v2332, %v3010
        %v3235 = vsub.f32 %v2335, %v3011
        %v3236 = vsub.f32 %v2338, %v3012
        %v3237 = vsub.f32 %v2341, %v3013
        %v3238 = vsub.f32 %v2344, %v3014
        %v3239 = vsub.f32 %v2347, %v3015
        %v3240 = vsub.f32 %v2350, %v3016
        %v3241 = vsub.f32 %v2353, %v3017
        %v3242 = vsub.f32 %v2356, %v3018
        %v3243 = vsub.f32 %v2359, %v3019
        %v3244 = vsub.f32 %v2362, %v3020
        %v3245 = vsub.f32 %v2365, %v3021
        %v3246 = vsub.f32 %v2368, %v3022
        %v3247 = vsub.f32 %v2371, %v3023
        %v3248 = vsub.f32 %v2374, %v3024
        %v3249 = vsub.f32 %v2377, %v3025
        %v3250 = vsub.f32 %v2380, %v3026
        %v3251 = vsub.f32 %v2383, %v3027
        %v3252 = vsub.f32 %v2386, %v3028
        %v3253 = vmul.f32 %v3221, 1.442695
        %v3254 = vpow.pop %v3253
        %v3255 = vmul.f32 %v3222, 1.442695
        %v3256 = vpow.pop %v3255
        %v3257 = vmul.f32 %v3223, 1.442695
        %v3258 = vpow.pop %v3257
        %v3259 = vmul.f32 %v3224, 1.442695
        %v3260 = vpow.pop %v3259
        %v3261 = vmul.f32 %v3225, 1.442695
        %v3262 = vpow.pop %v3261
        %v3263 = vmul.f32 %v3226, 1.442695
        %v3264 = vpow.pop %v3263
        %v3265 = vmul.f32 %v3227, 1.442695
        %v3266 = vpow.pop %v3265
        %v3267 = vmul.f32 %v3228, 1.442695
        %v3268 = vpow.pop %v3267
        %v3269 = vmul.f32 %v3229, 1.442695
        %v3270 = vpow.pop %v3269
        %v3271 = vmul.f32 %v3230, 1.442695
        %v3272 = vpow.pop %v3271
        %v3273 = vmul.f32 %v3231, 1.442695
        %v3274 = vpow.pop %v3273
        %v3275 = vmul.f32 %v3232, 1.442695
        %v3276 = vpow.pop %v3275
        %v3277 = vmul.f32 %v3233, 1.442695
        %v3278 = vpow.pop %v3277
        %v3279 = vmul.f32 %v3234, 1.442695
        %v3280 = vpow.pop %v3279
        %v3281 = vmul.f32 %v3235, 1.442695
        %v3282 = vpow.pop %v3281
        %v3283 = vmul.f32 %v3236, 1.442695
        %v3284 = vpow.pop %v3283
        %v3285 = vmul.f32 %v3237, 1.442695
        %v3286 = vpow.pop %v3285
        %v3287 = vmul.f32 %v3238, 1.442695
        %v3288 = vpow.pop %v3287
        %v3289 = vmul.f32 %v3239, 1.442695
        %v3290 = vpow.pop %v3289
        %v3291 = vmul.f32 %v3240, 1.442695
        %v3292 = vpow.pop %v3291
        %v3293 = vmul.f32 %v3241, 1.442695
        %v3294 = vpow.pop %v3293
        %v3295 = vmul.f32 %v3242, 1.442695
        %v3296 = vpow.pop %v3295
        %v3297 = vmul.f32 %v3243, 1.442695
        %v3298 = vpow.pop %v3297
        %v3299 = vmul.f32 %v3244, 1.442695
        %v3300 = vpow.pop %v3299
        %v3301 = vmul.f32 %v3245, 1.442695
        %v3302 = vpow.pop %v3301
        %v3303 = vmul.f32 %v3246, 1.442695
        %v3304 = vpow.pop %v3303
        %v3305 = vmul.f32 %v3247, 1.442695
        %v3306 = vpow.pop %v3305
        %v3307 = vmul.f32 %v3248, 1.442695
        %v3308 = vpow.pop %v3307
        %v3309 = vmul.f32 %v3249, 1.442695
        %v3310 = vpow.pop %v3309
        %v3311 = vmul.f32 %v3250, 1.442695
        %v3312 = vpow.pop %v3311
        %v3313 = vmul.f32 %v3251, 1.442695
        %v3314 = vpow.pop %v3313
        %v3315 = vmul.f32 %v3252, 1.442695
        %v3316 = vpow.pop %v3315
        %v3317 = vsub.f32 %v2839, %v2997
        %v3318 = vsub.f32 %v2842, %v2998
        %v3319 = vsub.f32 %v2845, %v2999
        %v3320 = vsub.f32 %v2848, %v3000
        %v3321 = vsub.f32 %v2851, %v3001
        %v3322 = vsub.f32 %v2854, %v3002
        %v3323 = vsub.f32 %v2857, %v3003
        %v3324 = vsub.f32 %v2860, %v3004
        %v3325 = vsub.f32 %v2863, %v3005
        %v3326 = vsub.f32 %v2866, %v3006
        %v3327 = vsub.f32 %v2869, %v3007
        %v3328 = vsub.f32 %v2872, %v3008
        %v3329 = vsub.f32 %v2875, %v3009
        %v3330 = vsub.f32 %v2878, %v3010
        %v3331 = vsub.f32 %v2881, %v3011
        %v3332 = vsub.f32 %v2884, %v3012
        %v3333 = vsub.f32 %v2887, %v3013
        %v3334 = vsub.f32 %v2890, %v3014
        %v3335 = vsub.f32 %v2893, %v3015
        %v3336 = vsub.f32 %v2896, %v3016
        %v3337 = vsub.f32 %v2899, %v3017
        %v3338 = vsub.f32 %v2902, %v3018
        %v3339 = vsub.f32 %v2905, %v3019
        %v3340 = vsub.f32 %v2908, %v3020
        %v3341 = vsub.f32 %v2911, %v3021
        %v3342 = vsub.f32 %v2914, %v3022
        %v3343 = vsub.f32 %v2917, %v3023
        %v3344 = vsub.f32 %v2920, %v3024
        %v3345 = vsub.f32 %v2923, %v3025
        %v3346 = vsub.f32 %v2926, %v3026
        %v3347 = vsub.f32 %v2929, %v3027
        %v3348 = vsub.f32 %v2932, %v3028
        %v3349 = vmul.f32 %v3317, 1.442695
        %v3350 = vpow.pop %v3349
        %v3351 = vmul.f32 %v3318, 1.442695
        %v3352 = vpow.pop %v3351
        %v3353 = vmul.f32 %v3319, 1.442695
        %v3354 = vpow.pop %v3353
        %v3355 = vmul.f32 %v3320, 1.442695
        %v3356 = vpow.pop %v3355
        %v3357 = vmul.f32 %v3321, 1.442695
        %v3358 = vpow.pop %v3357
        %v3359 = vmul.f32 %v3322, 1.442695
        %v3360 = vpow.pop %v3359
        %v3361 = vmul.f32 %v3323, 1.442695
        %v3362 = vpow.pop %v3361
        %v3363 = vmul.f32 %v3324, 1.442695
        %v3364 = vpow.pop %v3363
        %v3365 = vmul.f32 %v3325, 1.442695
        %v3366 = vpow.pop %v3365
        %v3367 = vmul.f32 %v3326, 1.442695
        %v3368 = vpow.pop %v3367
        %v3369 = vmul.f32 %v3327, 1.442695
        %v3370 = vpow.pop %v3369
        %v3371 = vmul.f32 %v3328, 1.442695
        %v3372 = vpow.pop %v3371
        %v3373 = vmul.f32 %v3329, 1.442695
        %v3374 = vpow.pop %v3373
        %v3375 = vmul.f32 %v3330, 1.442695
        %v3376 = vpow.pop %v3375
        %v3377 = vmul.f32 %v3331, 1.442695
        %v3378 = vpow.pop %v3377
        %v3379 = vmul.f32 %v3332, 1.442695
        %v3380 = vpow.pop %v3379
        %v3381 = vmul.f32 %v3333, 1.442695
        %v3382 = vpow.pop %v3381
        %v3383 = vmul.f32 %v3334, 1.442695
        %v3384 = vpow.pop %v3383
        %v3385 = vmul.f32 %v3335, 1.442695
        %v3386 = vpow.pop %v3385
        %v3387 = vmul.f32 %v3336, 1.442695
        %v3388 = vpow.pop %v3387
        %v3389 = vmul.f32 %v3337, 1.442695
        %v3390 = vpow.pop %v3389
        %v3391 = vmul.f32 %v3338, 1.442695
        %v3392 = vpow.pop %v3391
        %v3393 = vmul.f32 %v3339, 1.442695
        %v3394 = vpow.pop %v3393
        %v3395 = vmul.f32 %v3340, 1.442695
        %v3396 = vpow.pop %v3395
        %v3397 = vmul.f32 %v3341, 1.442695
        %v3398 = vpow.pop %v3397
        %v3399 = vmul.f32 %v3342, 1.442695
        %v3400 = vpow.pop %v3399
        %v3401 = vmul.f32 %v3343, 1.442695
        %v3402 = vpow.pop %v3401
        %v3403 = vmul.f32 %v3344, 1.442695
        %v3404 = vpow.pop %v3403
        %v3405 = vmul.f32 %v3345, 1.442695
        %v3406 = vpow.pop %v3405
        %v3407 = vmul.f32 %v3346, 1.442695
        %v3408 = vpow.pop %v3407
        %v3409 = vmul.f32 %v3347, 1.442695
        %v3410 = vpow.pop %v3409
        %v3411 = vmul.f32 %v3348, 1.442695
        %v3412 = vpow.pop %v3411
        %v3413 = vadd.f32 %v3062, %v3158
        %v3414 = vadd.f32 %v3064, %v3160
        %v3415 = vadd.f32 %v3066, %v3162
        %v3416 = vadd.f32 %v3068, %v3164
        %v3417 = vadd.f32 %v3070, %v3166
        %v3418 = vadd.f32 %v3072, %v3168
        %v3419 = vadd.f32 %v3074, %v3170
        %v3420 = vadd.f32 %v3076, %v3172
        %v3421 = vadd.f32 %v3078, %v3174
        %v3422 = vadd.f32 %v3080, %v3176
        %v3423 = vadd.f32 %v3082, %v3178
        %v3424 = vadd.f32 %v3084, %v3180
        %v3425 = vadd.f32 %v3086, %v3182
        %v3426 = vadd.f32 %v3088, %v3184
        %v3427 = vadd.f32 %v3090, %v3186
        %v3428 = vadd.f32 %v3092, %v3188
        %v3429 = vadd.f32 %v3094, %v3190
        %v3430 = vadd.f32 %v3096, %v3192
        %v3431 = vadd.f32 %v3098, %v3194
        %v3432 = vadd.f32 %v3100, %v3196
        %v3433 = vadd.f32 %v3102, %v3198
        %v3434 = vadd.f32 %v3104, %v3200
        %v3435 = vadd.f32 %v3106, %v3202
        %v3436 = vadd.f32 %v3108, %v3204
        %v3437 = vadd.f32 %v3110, %v3206
        %v3438 = vadd.f32 %v3112, %v3208
        %v3439 = vadd.f32 %v3114, %v3210
        %v3440 = vadd.f32 %v3116, %v3212
        %v3441 = vadd.f32 %v3118, %v3214
        %v3442 = vadd.f32 %v3120, %v3216
        %v3443 = vadd.f32 %v3122, %v3218
        %v3444 = vadd.f32 %v3124, %v3220
        %v3445 = vadd.f32 %v3413, %v3254
        %v3446 = vadd.f32 %v3414, %v3256
        %v3447 = vadd.f32 %v3415, %v3258
        %v3448 = vadd.f32 %v3416, %v3260
        %v3449 = vadd.f32 %v3417, %v3262
        %v3450 = vadd.f32 %v3418, %v3264
        %v3451 = vadd.f32 %v3419, %v3266
        %v3452 = vadd.f32 %v3420, %v3268
        %v3453 = vadd.f32 %v3421, %v3270
        %v3454 = vadd.f32 %v3422, %v3272
        %v3455 = vadd.f32 %v3423, %v3274
        %v3456 = vadd.f32 %v3424, %v3276
        %v3457 = vadd.f32 %v3425, %v3278
        %v3458 = vadd.f32 %v3426, %v3280
        %v3459 = vadd.f32 %v3427, %v3282
        %v3460 = vadd.f32 %v3428, %v3284
        %v3461 = vadd.f32 %v3429, %v3286
        %v3462 = vadd.f32 %v3430, %v3288
        %v3463 = vadd.f32 %v3431, %v3290
        %v3464 = vadd.f32 %v3432, %v3292
        %v3465 = vadd.f32 %v3433, %v3294
        %v3466 = vadd.f32 %v3434, %v3296
        %v3467 = vadd.f32 %v3435, %v3298
        %v3468 = vadd.f32 %v3436, %v3300
        %v3469 = vadd.f32 %v3437, %v3302
        %v3470 = vadd.f32 %v3438, %v3304
        %v3471 = vadd.f32 %v3439, %v3306
        %v3472 = vadd.f32 %v3440, %v3308
        %v3473 = vadd.f32 %v3441, %v3310
        %v3474 = vadd.f32 %v3442, %v3312
        %v3475 = vadd.f32 %v3443, %v3314
        %v3476 = vadd.f32 %v3444, %v3316
        %v3477 = vadd.f32 %v3445, %v3350
        %v3478 = vadd.f32 %v3446, %v3352
        %v3479 = vadd.f32 %v3447, %v3354
        %v3480 = vadd.f32 %v3448, %v3356
        %v3481 = vadd.f32 %v3449, %v3358
        %v3482 = vadd.f32 %v3450, %v3360
        %v3483 = vadd.f32 %v3451, %v3362
        %v3484 = vadd.f32 %v3452, %v3364
        %v3485 = vadd.f32 %v3453, %v3366
        %v3486 = vadd.f32 %v3454, %v3368
        %v3487 = vadd.f32 %v3455, %v3370
        %v3488 = vadd.f32 %v3456, %v3372
        %v3489 = vadd.f32 %v3457, %v3374
        %v3490 = vadd.f32 %v3458, %v3376
        %v3491 = vadd.f32 %v3459, %v3378
        %v3492 = vadd.f32 %v3460, %v3380
        %v3493 = vadd.f32 %v3461, %v3382
        %v3494 = vadd.f32 %v3462, %v3384
        %v3495 = vadd.f32 %v3463, %v3386
        %v3496 = vadd.f32 %v3464, %v3388
        %v3497 = vadd.f32 %v3465, %v3390
        %v3498 = vadd.f32 %v3466, %v3392
        %v3499 = vadd.f32 %v3467, %v3394
        %v3500 = vadd.f32 %v3468, %v3396
        %v3501 = vadd.f32 %v3469, %v3398
        %v3502 = vadd.f32 %v3470, %v3400
        %v3503 = vadd.f32 %v3471, %v3402
        %v3504 = vadd.f32 %v3472, %v3404
        %v3505 = vadd.f32 %v3473, %v3406
        %v3506 = vadd.f32 %v3474, %v3408
        %v3507 = vadd.f32 %v3475, %v3410
        %v3508 = vadd.f32 %v3476, %v3412
        %v3509 = vunpack.c.l.bf16 %v731
        %v3510 = vunpack.c.l.bf16 %v732
        %v3511 = vunpack.c.l.bf16 %v733
        %v3512 = vunpack.c.l.bf16 %v734
        %v3513 = vunpack.c.l.bf16 %v735
        %v3514 = vunpack.c.l.bf16 %v736
        %v3515 = vunpack.c.l.bf16 %v737
        %v3516 = vunpack.c.l.bf16 %v738
        %v3517 = vunpack.c.l.bf16 %v739
        %v3518 = vunpack.c.l.bf16 %v740
        %v3519 = vunpack.c.l.bf16 %v741
        %v3520 = vunpack.c.l.bf16 %v742
        %v3521 = vunpack.c.l.bf16 %v743
        %v3522 = vunpack.c.l.bf16 %v744
        %v3523 = vunpack.c.l.bf16 %v745
        %v3524 = vunpack.c.l.bf16 %v746
        %v3525 = vunpack.c.l.bf16 %v747
        %v3526 = vunpack.c.l.bf16 %v748
        %v3527 = vunpack.c.l.bf16 %v749
        %v3528 = vunpack.c.l.bf16 %v750
        %v3529 = vunpack.c.l.bf16 %v751
        %v3530 = vunpack.c.l.bf16 %v752
        %v3531 = vunpack.c.l.bf16 %v753
        %v3532 = vunpack.c.l.bf16 %v754
        %v3533 = vunpack.c.l.bf16 %v755
        %v3534 = vunpack.c.l.bf16 %v756
        %v3535 = vunpack.c.l.bf16 %v757
        %v3536 = vunpack.c.l.bf16 %v758
        %v3537 = vunpack.c.l.bf16 %v759
        %v3538 = vunpack.c.l.bf16 %v760
        %v3539 = vunpack.c.l.bf16 %v761
        %v3540 = vunpack.c.l.bf16 %v762
        %v3541 = vmul.f32 %v3062, %v3509
        %v3542 = vmul.f32 %v3064, %v3510
        %v3543 = vmul.f32 %v3066, %v3511
        %v3544 = vmul.f32 %v3068, %v3512
        %v3545 = vmul.f32 %v3070, %v3513
        %v3546 = vmul.f32 %v3072, %v3514
        %v3547 = vmul.f32 %v3074, %v3515
        %v3548 = vmul.f32 %v3076, %v3516
        %v3549 = vmul.f32 %v3078, %v3517
        %v3550 = vmul.f32 %v3080, %v3518
        %v3551 = vmul.f32 %v3082, %v3519
        %v3552 = vmul.f32 %v3084, %v3520
        %v3553 = vmul.f32 %v3086, %v3521
        %v3554 = vmul.f32 %v3088, %v3522
        %v3555 = vmul.f32 %v3090, %v3523
        %v3556 = vmul.f32 %v3092, %v3524
        %v3557 = vmul.f32 %v3094, %v3525
        %v3558 = vmul.f32 %v3096, %v3526
        %v3559 = vmul.f32 %v3098, %v3527
        %v3560 = vmul.f32 %v3100, %v3528
        %v3561 = vmul.f32 %v3102, %v3529
        %v3562 = vmul.f32 %v3104, %v3530
        %v3563 = vmul.f32 %v3106, %v3531
        %v3564 = vmul.f32 %v3108, %v3532
        %v3565 = vmul.f32 %v3110, %v3533
        %v3566 = vmul.f32 %v3112, %v3534
        %v3567 = vmul.f32 %v3114, %v3535
        %v3568 = vmul.f32 %v3116, %v3536
        %v3569 = vmul.f32 %v3118, %v3537
        %v3570 = vmul.f32 %v3120, %v3538
        %v3571 = vmul.f32 %v3122, %v3539
        %v3572 = vmul.f32 %v3124, %v3540
        %v3573 = vunpack.c.l.bf16 %v1296
        %v3574 = vunpack.c.l.bf16 %v1297
        %v3575 = vunpack.c.l.bf16 %v1298
        %v3576 = vunpack.c.l.bf16 %v1299
        %v3577 = vunpack.c.l.bf16 %v1300
        %v3578 = vunpack.c.l.bf16 %v1301
        %v3579 = vunpack.c.l.bf16 %v1302
        %v3580 = vunpack.c.l.bf16 %v1303
        %v3581 = vunpack.c.l.bf16 %v1304
        %v3582 = vunpack.c.l.bf16 %v1305
        %v3583 = vunpack.c.l.bf16 %v1306
        %v3584 = vunpack.c.l.bf16 %v1307
        %v3585 = vunpack.c.l.bf16 %v1308
        %v3586 = vunpack.c.l.bf16 %v1309
        %v3587 = vunpack.c.l.bf16 %v1310
        %v3588 = vunpack.c.l.bf16 %v1311
        %v3589 = vunpack.c.l.bf16 %v1312
        %v3590 = vunpack.c.l.bf16 %v1313
        %v3591 = vunpack.c.l.bf16 %v1314
        %v3592 = vunpack.c.l.bf16 %v1315
        %v3593 = vunpack.c.l.bf16 %v1316
        %v3594 = vunpack.c.l.bf16 %v1317
        %v3595 = vunpack.c.l.bf16 %v1318
        %v3596 = vunpack.c.l.bf16 %v1319
        %v3597 = vunpack.c.l.bf16 %v1320
        %v3598 = vunpack.c.l.bf16 %v1321
        %v3599 = vunpack.c.l.bf16 %v1322
        %v3600 = vunpack.c.l.bf16 %v1323
        %v3601 = vunpack.c.l.bf16 %v1324
        %v3602 = vunpack.c.l.bf16 %v1325
        %v3603 = vunpack.c.l.bf16 %v1326
        %v3604 = vunpack.c.l.bf16 %v1327
        %v3605 = vmul.f32 %v3158, %v3573
        %v3606 = vmul.f32 %v3160, %v3574
        %v3607 = vmul.f32 %v3162, %v3575
        %v3608 = vmul.f32 %v3164, %v3576
        %v3609 = vmul.f32 %v3166, %v3577
        %v3610 = vmul.f32 %v3168, %v3578
        %v3611 = vmul.f32 %v3170, %v3579
        %v3612 = vmul.f32 %v3172, %v3580
        %v3613 = vmul.f32 %v3174, %v3581
        %v3614 = vmul.f32 %v3176, %v3582
        %v3615 = vmul.f32 %v3178, %v3583
        %v3616 = vmul.f32 %v3180, %v3584
        %v3617 = vmul.f32 %v3182, %v3585
        %v3618 = vmul.f32 %v3184, %v3586
        %v3619 = vmul.f32 %v3186, %v3587
        %v3620 = vmul.f32 %v3188, %v3588
        %v3621 = vmul.f32 %v3190, %v3589
        %v3622 = vmul.f32 %v3192, %v3590
        %v3623 = vmul.f32 %v3194, %v3591
        %v3624 = vmul.f32 %v3196, %v3592
        %v3625 = vmul.f32 %v3198, %v3593
        %v3626 = vmul.f32 %v3200, %v3594
        %v3627 = vmul.f32 %v3202, %v3595
        %v3628 = vmul.f32 %v3204, %v3596
        %v3629 = vmul.f32 %v3206, %v3597
        %v3630 = vmul.f32 %v3208, %v3598
        %v3631 = vmul.f32 %v3210, %v3599
        %v3632 = vmul.f32 %v3212, %v3600
        %v3633 = vmul.f32 %v3214, %v3601
        %v3634 = vmul.f32 %v3216, %v3602
        %v3635 = vmul.f32 %v3218, %v3603
        %v3636 = vmul.f32 %v3220, %v3604
        %v3637 = vadd.f32 %v3541, %v3605
        %v3638 = vadd.f32 %v3542, %v3606
        %v3639 = vadd.f32 %v3543, %v3607
        %v3640 = vadd.f32 %v3544, %v3608
        %v3641 = vadd.f32 %v3545, %v3609
        %v3642 = vadd.f32 %v3546, %v3610
        %v3643 = vadd.f32 %v3547, %v3611
        %v3644 = vadd.f32 %v3548, %v3612
        %v3645 = vadd.f32 %v3549, %v3613
        %v3646 = vadd.f32 %v3550, %v3614
        %v3647 = vadd.f32 %v3551, %v3615
        %v3648 = vadd.f32 %v3552, %v3616
        %v3649 = vadd.f32 %v3553, %v3617
        %v3650 = vadd.f32 %v3554, %v3618
        %v3651 = vadd.f32 %v3555, %v3619
        %v3652 = vadd.f32 %v3556, %v3620
        %v3653 = vadd.f32 %v3557, %v3621
        %v3654 = vadd.f32 %v3558, %v3622
        %v3655 = vadd.f32 %v3559, %v3623
        %v3656 = vadd.f32 %v3560, %v3624
        %v3657 = vadd.f32 %v3561, %v3625
        %v3658 = vadd.f32 %v3562, %v3626
        %v3659 = vadd.f32 %v3563, %v3627
        %v3660 = vadd.f32 %v3564, %v3628
        %v3661 = vadd.f32 %v3565, %v3629
        %v3662 = vadd.f32 %v3566, %v3630
        %v3663 = vadd.f32 %v3567, %v3631
        %v3664 = vadd.f32 %v3568, %v3632
        %v3665 = vadd.f32 %v3569, %v3633
        %v3666 = vadd.f32 %v3570, %v3634
        %v3667 = vadd.f32 %v3571, %v3635
        %v3668 = vadd.f32 %v3572, %v3636
        %v3669 = vunpack.c.l.bf16 %v1842
        %v3670 = vunpack.c.l.bf16 %v1843
        %v3671 = vunpack.c.l.bf16 %v1844
        %v3672 = vunpack.c.l.bf16 %v1845
        %v3673 = vunpack.c.l.bf16 %v1846
        %v3674 = vunpack.c.l.bf16 %v1847
        %v3675 = vunpack.c.l.bf16 %v1848
        %v3676 = vunpack.c.l.bf16 %v1849
        %v3677 = vunpack.c.l.bf16 %v1850
        %v3678 = vunpack.c.l.bf16 %v1851
        %v3679 = vunpack.c.l.bf16 %v1852
        %v3680 = vunpack.c.l.bf16 %v1853
        %v3681 = vunpack.c.l.bf16 %v1854
        %v3682 = vunpack.c.l.bf16 %v1855
        %v3683 = vunpack.c.l.bf16 %v1856
        %v3684 = vunpack.c.l.bf16 %v1857
        %v3685 = vunpack.c.l.bf16 %v1858
        %v3686 = vunpack.c.l.bf16 %v1859
        %v3687 = vunpack.c.l.bf16 %v1860
        %v3688 = vunpack.c.l.bf16 %v1861
        %v3689 = vunpack.c.l.bf16 %v1862
        %v3690 = vunpack.c.l.bf16 %v1863
        %v3691 = vunpack.c.l.bf16 %v1864
        %v3692 = vunpack.c.l.bf16 %v1865
        %v3693 = vunpack.c.l.bf16 %v1866
        %v3694 = vunpack.c.l.bf16 %v1867
        %v3695 = vunpack.c.l.bf16 %v1868
        %v3696 = vunpack.c.l.bf16 %v1869
        %v3697 = vunpack.c.l.bf16 %v1870
        %v3698 = vunpack.c.l.bf16 %v1871
        %v3699 = vunpack.c.l.bf16 %v1872
        %v3700 = vunpack.c.l.bf16 %v1873
        %v3701 = vmul.f32 %v3254, %v3669
        %v3702 = vmul.f32 %v3256, %v3670
        %v3703 = vmul.f32 %v3258, %v3671
        %v3704 = vmul.f32 %v3260, %v3672
        %v3705 = vmul.f32 %v3262, %v3673
        %v3706 = vmul.f32 %v3264, %v3674
        %v3707 = vmul.f32 %v3266, %v3675
        %v3708 = vmul.f32 %v3268, %v3676
        %v3709 = vmul.f32 %v3270, %v3677
        %v3710 = vmul.f32 %v3272, %v3678
        %v3711 = vmul.f32 %v3274, %v3679
        %v3712 = vmul.f32 %v3276, %v3680
        %v3713 = vmul.f32 %v3278, %v3681
        %v3714 = vmul.f32 %v3280, %v3682
        %v3715 = vmul.f32 %v3282, %v3683
        %v3716 = vmul.f32 %v3284, %v3684
        %v3717 = vmul.f32 %v3286, %v3685
        %v3718 = vmul.f32 %v3288, %v3686
        %v3719 = vmul.f32 %v3290, %v3687
        %v3720 = vmul.f32 %v3292, %v3688
        %v3721 = vmul.f32 %v3294, %v3689
        %v3722 = vmul.f32 %v3296, %v3690
        %v3723 = vmul.f32 %v3298, %v3691
        %v3724 = vmul.f32 %v3300, %v3692
        %v3725 = vmul.f32 %v3302, %v3693
        %v3726 = vmul.f32 %v3304, %v3694
        %v3727 = vmul.f32 %v3306, %v3695
        %v3728 = vmul.f32 %v3308, %v3696
        %v3729 = vmul.f32 %v3310, %v3697
        %v3730 = vmul.f32 %v3312, %v3698
        %v3731 = vmul.f32 %v3314, %v3699
        %v3732 = vmul.f32 %v3316, %v3700
        %v3733 = vadd.f32 %v3637, %v3701
        %v3734 = vadd.f32 %v3638, %v3702
        %v3735 = vadd.f32 %v3639, %v3703
        %v3736 = vadd.f32 %v3640, %v3704
        %v3737 = vadd.f32 %v3641, %v3705
        %v3738 = vadd.f32 %v3642, %v3706
        %v3739 = vadd.f32 %v3643, %v3707
        %v3740 = vadd.f32 %v3644, %v3708
        %v3741 = vadd.f32 %v3645, %v3709
        %v3742 = vadd.f32 %v3646, %v3710
        %v3743 = vadd.f32 %v3647, %v3711
        %v3744 = vadd.f32 %v3648, %v3712
        %v3745 = vadd.f32 %v3649, %v3713
        %v3746 = vadd.f32 %v3650, %v3714
        %v3747 = vadd.f32 %v3651, %v3715
        %v3748 = vadd.f32 %v3652, %v3716
        %v3749 = vadd.f32 %v3653, %v3717
        %v3750 = vadd.f32 %v3654, %v3718
        %v3751 = vadd.f32 %v3655, %v3719
        %v3752 = vadd.f32 %v3656, %v3720
        %v3753 = vadd.f32 %v3657, %v3721
        %v3754 = vadd.f32 %v3658, %v3722
        %v3755 = vadd.f32 %v3659, %v3723
        %v3756 = vadd.f32 %v3660, %v3724
        %v3757 = vadd.f32 %v3661, %v3725
        %v3758 = vadd.f32 %v3662, %v3726
        %v3759 = vadd.f32 %v3663, %v3727
        %v3760 = vadd.f32 %v3664, %v3728
        %v3761 = vadd.f32 %v3665, %v3729
        %v3762 = vadd.f32 %v3666, %v3730
        %v3763 = vadd.f32 %v3667, %v3731
        %v3764 = vadd.f32 %v3668, %v3732
        %v3765 = vunpack.c.l.bf16 %v2388
        %v3766 = vunpack.c.l.bf16 %v2389
        %v3767 = vunpack.c.l.bf16 %v2390
        %v3768 = vunpack.c.l.bf16 %v2391
        %v3769 = vunpack.c.l.bf16 %v2392
        %v3770 = vunpack.c.l.bf16 %v2393
        %v3771 = vunpack.c.l.bf16 %v2394
        %v3772 = vunpack.c.l.bf16 %v2395
        %v3773 = vunpack.c.l.bf16 %v2396
        %v3774 = vunpack.c.l.bf16 %v2397
        %v3775 = vunpack.c.l.bf16 %v2398
        %v3776 = vunpack.c.l.bf16 %v2399
        %v3777 = vunpack.c.l.bf16 %v2400
        %v3778 = vunpack.c.l.bf16 %v2401
        %v3779 = vunpack.c.l.bf16 %v2402
        %v3780 = vunpack.c.l.bf16 %v2403
        %v3781 = vunpack.c.l.bf16 %v2404
        %v3782 = vunpack.c.l.bf16 %v2405
        %v3783 = vunpack.c.l.bf16 %v2406
        %v3784 = vunpack.c.l.bf16 %v2407
        %v3785 = vunpack.c.l.bf16 %v2408
        %v3786 = vunpack.c.l.bf16 %v2409
        %v3787 = vunpack.c.l.bf16 %v2410
        %v3788 = vunpack.c.l.bf16 %v2411
        %v3789 = vunpack.c.l.bf16 %v2412
        %v3790 = vunpack.c.l.bf16 %v2413
        %v3791 = vunpack.c.l.bf16 %v2414
        %v3792 = vunpack.c.l.bf16 %v2415
        %v3793 = vunpack.c.l.bf16 %v2416
        %v3794 = vunpack.c.l.bf16 %v2417
        %v3795 = vunpack.c.l.bf16 %v2418
        %v3796 = vunpack.c.l.bf16 %v2419
        %v3797 = vmul.f32 %v3350, %v3765
        %v3798 = vmul.f32 %v3352, %v3766
        %v3799 = vmul.f32 %v3354, %v3767
        %v3800 = vmul.f32 %v3356, %v3768
        %v3801 = vmul.f32 %v3358, %v3769
        %v3802 = vmul.f32 %v3360, %v3770
        %v3803 = vmul.f32 %v3362, %v3771
        %v3804 = vmul.f32 %v3364, %v3772
        %v3805 = vmul.f32 %v3366, %v3773
        %v3806 = vmul.f32 %v3368, %v3774
        %v3807 = vmul.f32 %v3370, %v3775
        %v3808 = vmul.f32 %v3372, %v3776
        %v3809 = vmul.f32 %v3374, %v3777
        %v3810 = vmul.f32 %v3376, %v3778
        %v3811 = vmul.f32 %v3378, %v3779
        %v3812 = vmul.f32 %v3380, %v3780
        %v3813 = vmul.f32 %v3382, %v3781
        %v3814 = vmul.f32 %v3384, %v3782
        %v3815 = vmul.f32 %v3386, %v3783
        %v3816 = vmul.f32 %v3388, %v3784
        %v3817 = vmul.f32 %v3390, %v3785
        %v3818 = vmul.f32 %v3392, %v3786
        %v3819 = vmul.f32 %v3394, %v3787
        %v3820 = vmul.f32 %v3396, %v3788
        %v3821 = vmul.f32 %v3398, %v3789
        %v3822 = vmul.f32 %v3400, %v3790
        %v3823 = vmul.f32 %v3402, %v3791
        %v3824 = vmul.f32 %v3404, %v3792
        %v3825 = vmul.f32 %v3406, %v3793
        %v3826 = vmul.f32 %v3408, %v3794
        %v3827 = vmul.f32 %v3410, %v3795
        %v3828 = vmul.f32 %v3412, %v3796
        %v3829 = vadd.f32 %v3733, %v3797
        %v3830 = vadd.f32 %v3734, %v3798
        %v3831 = vadd.f32 %v3735, %v3799
        %v3832 = vadd.f32 %v3736, %v3800
        %v3833 = vadd.f32 %v3737, %v3801
        %v3834 = vadd.f32 %v3738, %v3802
        %v3835 = vadd.f32 %v3739, %v3803
        %v3836 = vadd.f32 %v3740, %v3804
        %v3837 = vadd.f32 %v3741, %v3805
        %v3838 = vadd.f32 %v3742, %v3806
        %v3839 = vadd.f32 %v3743, %v3807
        %v3840 = vadd.f32 %v3744, %v3808
        %v3841 = vadd.f32 %v3745, %v3809
        %v3842 = vadd.f32 %v3746, %v3810
        %v3843 = vadd.f32 %v3747, %v3811
        %v3844 = vadd.f32 %v3748, %v3812
        %v3845 = vadd.f32 %v3749, %v3813
        %v3846 = vadd.f32 %v3750, %v3814
        %v3847 = vadd.f32 %v3751, %v3815
        %v3848 = vadd.f32 %v3752, %v3816
        %v3849 = vadd.f32 %v3753, %v3817
        %v3850 = vadd.f32 %v3754, %v3818
        %v3851 = vadd.f32 %v3755, %v3819
        %v3852 = vadd.f32 %v3756, %v3820
        %v3853 = vadd.f32 %v3757, %v3821
        %v3854 = vadd.f32 %v3758, %v3822
        %v3855 = vadd.f32 %v3759, %v3823
        %v3856 = vadd.f32 %v3760, %v3824
        %v3857 = vadd.f32 %v3761, %v3825
        %v3858 = vadd.f32 %v3762, %v3826
        %v3859 = vadd.f32 %v3763, %v3827
        %v3860 = vadd.f32 %v3764, %v3828
        %v3861 = vrcp.pop %v3477
        %v3862 = vrcp.pop %v3478
        %v3863 = vrcp.pop %v3479
        %v3864 = vrcp.pop %v3480
        %v3865 = vrcp.pop %v3481
        %v3866 = vrcp.pop %v3482
        %v3867 = vrcp.pop %v3483
        %v3868 = vrcp.pop %v3484
        %v3869 = vrcp.pop %v3485
        %v3870 = vrcp.pop %v3486
        %v3871 = vrcp.pop %v3487
        %v3872 = vrcp.pop %v3488
        %v3873 = vrcp.pop %v3489
        %v3874 = vrcp.pop %v3490
        %v3875 = vrcp.pop %v3491
        %v3876 = vrcp.pop %v3492
        %v3877 = vrcp.pop %v3493
        %v3878 = vrcp.pop %v3494
        %v3879 = vrcp.pop %v3495
        %v3880 = vrcp.pop %v3496
        %v3881 = vrcp.pop %v3497
        %v3882 = vrcp.pop %v3498
        %v3883 = vrcp.pop %v3499
        %v3884 = vrcp.pop %v3500
        %v3885 = vrcp.pop %v3501
        %v3886 = vrcp.pop %v3502
        %v3887 = vrcp.pop %v3503
        %v3888 = vrcp.pop %v3504
        %v3889 = vrcp.pop %v3505
        %v3890 = vrcp.pop %v3506
        %v3891 = vrcp.pop %v3507
        %v3892 = vrcp.pop %v3508
        %v3893 = vmul.f32 %v3829, %v3861
        %v3894 = vmul.f32 %v3830, %v3862
        %v3895 = vmul.f32 %v3831, %v3863
        %v3896 = vmul.f32 %v3832, %v3864
        %v3897 = vmul.f32 %v3833, %v3865
        %v3898 = vmul.f32 %v3834, %v3866
        %v3899 = vmul.f32 %v3835, %v3867
        %v3900 = vmul.f32 %v3836, %v3868
        %v3901 = vmul.f32 %v3837, %v3869
        %v3902 = vmul.f32 %v3838, %v3870
        %v3903 = vmul.f32 %v3839, %v3871
        %v3904 = vmul.f32 %v3840, %v3872
        %v3905 = vmul.f32 %v3841, %v3873
        %v3906 = vmul.f32 %v3842, %v3874
        %v3907 = vmul.f32 %v3843, %v3875
        %v3908 = vmul.f32 %v3844, %v3876
        %v3909 = vmul.f32 %v3845, %v3877
        %v3910 = vmul.f32 %v3846, %v3878
        %v3911 = vmul.f32 %v3847, %v3879
        %v3912 = vmul.f32 %v3848, %v3880
        %v3913 = vmul.f32 %v3849, %v3881
        %v3914 = vmul.f32 %v3850, %v3882
        %v3915 = vmul.f32 %v3851, %v3883
        %v3916 = vmul.f32 %v3852, %v3884
        %v3917 = vmul.f32 %v3853, %v3885
        %v3918 = vmul.f32 %v3854, %v3886
        %v3919 = vmul.f32 %v3855, %v3887
        %v3920 = vmul.f32 %v3856, %v3888
        %v3921 = vmul.f32 %v3857, %v3889
        %v3922 = vmul.f32 %v3858, %v3890
        %v3923 = vmul.f32 %v3859, %v3891
        %v3924 = vmul.f32 %v3860, %v3892
        %v3925 = vpack.c.bf16 %v3894, %v3893
        %v3926 = vpack.c.bf16 %v3896, %v3895
        %v3927 = vpack.c.bf16 %v3898, %v3897
        %v3928 = vpack.c.bf16 %v3900, %v3899
        %v3929 = vpack.c.bf16 %v3902, %v3901
        %v3930 = vpack.c.bf16 %v3904, %v3903
        %v3931 = vpack.c.bf16 %v3906, %v3905
        %v3932 = vpack.c.bf16 %v3908, %v3907
        %v3933 = vpack.c.bf16 %v3910, %v3909
        %v3934 = vpack.c.bf16 %v3912, %v3911
        %v3935 = vpack.c.bf16 %v3914, %v3913
        %v3936 = vpack.c.bf16 %v3916, %v3915
        %v3937 = vpack.c.bf16 %v3918, %v3917
        %v3938 = vpack.c.bf16 %v3920, %v3919
        %v3939 = vpack.c.bf16 %v3922, %v3921
        %v3940 = vpack.c.bf16 %v3924, %v3923
        %v3957 = vunpack.c.l.b16 %v3925
        %v3958 = vunpack.c.h.b16 %v3925
        %v3959 = vunpack.c.l.b16 %v3926
        %v3960 = vunpack.c.h.b16 %v3926
        %v3961 = vunpack.c.l.b16 %v3927
        %v3962 = vunpack.c.h.b16 %v3927
        %v3963 = vunpack.c.l.b16 %v3928
        %v3964 = vunpack.c.h.b16 %v3928
        %v3965 = vunpack.c.l.b16 %v3929
        %v3966 = vunpack.c.h.b16 %v3929
        %v3967 = vunpack.c.l.b16 %v3930
        %v3968 = vunpack.c.h.b16 %v3930
        %v3969 = vunpack.c.l.b16 %v3931
        %v3970 = vunpack.c.h.b16 %v3931
        %v3971 = vunpack.c.l.b16 %v3932
        %v3972 = vunpack.c.h.b16 %v3932
        %v3973 = vunpack.c.l.b16 %v3933
        %v3974 = vunpack.c.h.b16 %v3933
        %v3975 = vunpack.c.l.b16 %v3934
        %v3976 = vunpack.c.h.b16 %v3934
        %v3977 = vunpack.c.l.b16 %v3935
        %v3978 = vunpack.c.h.b16 %v3935
        %v3979 = vunpack.c.l.b16 %v3936
        %v3980 = vunpack.c.h.b16 %v3936
        %v3981 = vunpack.c.l.b16 %v3937
        %v3982 = vunpack.c.h.b16 %v3937
        %v3983 = vunpack.c.l.b16 %v3938
        %v3984 = vunpack.c.h.b16 %v3938
        %v3985 = vunpack.c.l.b16 %v3939
        %v3986 = vunpack.c.h.b16 %v3939
        %v3987 = vunpack.c.l.b16 %v3940
        %v3988 = vunpack.c.h.b16 %v3940
        %v3989 = vpack.c.b16 %v3957, %v3957
        %v3990 = vpack.c.b16 %v3958, %v3958
        %v3991 = vpack.c.b16 %v3959, %v3959
        %v3992 = vpack.c.b16 %v3960, %v3960
        %v3993 = vpack.c.b16 %v3961, %v3961
        %v3994 = vpack.c.b16 %v3962, %v3962
        %v3995 = vpack.c.b16 %v3963, %v3963
        %v3996 = vpack.c.b16 %v3964, %v3964
        %v3997 = vpack.c.b16 %v3965, %v3965
        %v3998 = vpack.c.b16 %v3966, %v3966
        %v3999 = vpack.c.b16 %v3967, %v3967
        %v4000 = vpack.c.b16 %v3968, %v3968
        %v4001 = vpack.c.b16 %v3969, %v3969
        %v4002 = vpack.c.b16 %v3970, %v3970
        %v4003 = vpack.c.b16 %v3971, %v3971
        %v4004 = vpack.c.b16 %v3972, %v3972
        %v4005 = vpack.c.b16 %v3973, %v3973
        %v4006 = vpack.c.b16 %v3974, %v3974
        %v4007 = vpack.c.b16 %v3975, %v3975
        %v4008 = vpack.c.b16 %v3976, %v3976
        %v4009 = vpack.c.b16 %v3977, %v3977
        %v4010 = vpack.c.b16 %v3978, %v3978
        %v4011 = vpack.c.b16 %v3979, %v3979
        %v4012 = vpack.c.b16 %v3980, %v3980
        %v4013 = vpack.c.b16 %v3981, %v3981
        %v4014 = vpack.c.b16 %v3982, %v3982
        %v4015 = vpack.c.b16 %v3983, %v3983
        %v4016 = vpack.c.b16 %v3984, %v3984
        %v4017 = vpack.c.b16 %v3985, %v3985
        %v4018 = vpack.c.b16 %v3986, %v3986
        %v4019 = vpack.c.b16 %v3987, %v3987
        %v4020 = vpack.c.b16 %v3988, %v3988
        %vm4053 = vcmask 257024
        %4054 = vst.msk [vmem:[%s723] sm:$0xf] %vm4053, %v3989
        %4055 = vst.msk [vmem:[%s723 + $0x4] sm:$0xf] %vm4053, %v3990
        %4056 = vst.msk [vmem:[%s723 + $0x8] sm:$0xf] %vm4053, %v3991
        %4057 = vst.msk [vmem:[%s723 + $0xc] sm:$0xf] %vm4053, %v3992
        %4058 = vst.msk [vmem:[%s723 + $0x10] sm:$0xf] %vm4053, %v3993
        %4059 = vst.msk [vmem:[%s723 + $0x14] sm:$0xf] %vm4053, %v3994
        %4060 = vst.msk [vmem:[%s723 + $0x18] sm:$0xf] %vm4053, %v3995
        %4061 = vst.msk [vmem:[%s723 + $0x1c] sm:$0xf] %vm4053, %v3996
        %4062 = vst.msk [vmem:[%s723 + $0x20] sm:$0xf] %vm4053, %v3997
        %4063 = vst.msk [vmem:[%s723 + $0x24] sm:$0xf] %vm4053, %v3998
        %4064 = vst.msk [vmem:[%s723 + $0x28] sm:$0xf] %vm4053, %v3999
        %4065 = vst.msk [vmem:[%s723 + $0x2c] sm:$0xf] %vm4053, %v4000
        %4066 = vst.msk [vmem:[%s723 + $0x30] sm:$0xf] %vm4053, %v4001
        %4067 = vst.msk [vmem:[%s723 + $0x34] sm:$0xf] %vm4053, %v4002
        %4068 = vst.msk [vmem:[%s723 + $0x38] sm:$0xf] %vm4053, %v4003
        %4069 = vst.msk [vmem:[%s723 + $0x3c] sm:$0xf] %vm4053, %v4004
        %4070 = vst.msk [vmem:[%s723 + $0x40] sm:$0xf] %vm4053, %v4005
        %4071 = vst.msk [vmem:[%s723 + $0x44] sm:$0xf] %vm4053, %v4006
        %4072 = vst.msk [vmem:[%s723 + $0x48] sm:$0xf] %vm4053, %v4007
        %4073 = vst.msk [vmem:[%s723 + $0x4c] sm:$0xf] %vm4053, %v4008
        %4074 = vst.msk [vmem:[%s723 + $0x50] sm:$0xf] %vm4053, %v4009
        %4075 = vst.msk [vmem:[%s723 + $0x54] sm:$0xf] %vm4053, %v4010
        %4076 = vst.msk [vmem:[%s723 + $0x58] sm:$0xf] %vm4053, %v4011
        %4077 = vst.msk [vmem:[%s723 + $0x5c] sm:$0xf] %vm4053, %v4012
        %4078 = vst.msk [vmem:[%s723 + $0x60] sm:$0xf] %vm4053, %v4013
        %4079 = vst.msk [vmem:[%s723 + $0x64] sm:$0xf] %vm4053, %v4014
        %4080 = vst.msk [vmem:[%s723 + $0x68] sm:$0xf] %vm4053, %v4015
        %4081 = vst.msk [vmem:[%s723 + $0x6c] sm:$0xf] %vm4053, %v4016
        %4082 = vst.msk [vmem:[%s723 + $0x70] sm:$0xf] %vm4053, %v4017
        %4083 = vst.msk [vmem:[%s723 + $0x74] sm:$0xf] %vm4053, %v4018
        %4084 = vst.msk [vmem:[%s723 + $0x78] sm:$0xf] %vm4053, %v4019
        %4085 = vst.msk [vmem:[%s723 + $0x7c] sm:$0xf] %vm4053, %v4020
        %s4086 = smul.u32 32, %s14
        %p4087 = scmp.lt.s32.totalorder %s4086, 63
        %s4088 = scalar_select %p4087, %s4086, 63
        %s4089 = smul.addr %s4088, 4
        %s4090 = scalar_lea.vmem %s3, %s4089
        // Predicated region
        $region74: #{tpu_custom_call.1} parent=68 // pred_check
          %p4091 = pneg %p100
        $region75: #{tpu_custom_call.1} parent=68 // pred_check_branch
          %4093 = sbr.rel (%p4091) target = $region77
        $region76: #{tpu_custom_call.1} parent=68 // pred_region
          %s4094 = smul.u32 32, %s14
        $region77: #{tpu_custom_call.1} parent=68 // pred_fallthru
          _
      $region69: #{tpu_custom_call.1} parent=5 // pred_fallthru
        _
      %p4095 = scmp.le.s32.totalorder 2, %s9
      // Predicated region
      $region78: #{tpu_custom_call.1} parent=5 // pred_check
        %p4096 = pneg %p4095
      $region79: #{tpu_custom_call.1} parent=5 // pred_check_branch
        %4098 = sbr.rel (%p4096) target = $region81
      $region80: #{tpu_custom_call.1} parent=5 // pred_region
        %s4099 = ssub.s32 %s9, 2
        // Predicated region
        $region82: #{tpu_custom_call.1} parent=80 // pred_check
          %p4100 = pneg %p106
        $region83: #{tpu_custom_call.1} parent=80 // pred_check_branch
          %4102 = sbr.rel (%p4100) target = $region85
        $region84: #{tpu_custom_call.1} parent=80 // pred_region
          %s4103 = smul.u32 32, %s15
          %p4104 = scmp.lt.s32.totalorder %s4103, 63
          %s4105 = scalar_select %p4104, %s4103, 63
          %s4106 = smul.addr %s4105, 4
          %s4107 = scalar_lea.vmem %s3, %s4106
        $region85: #{tpu_custom_call.1} parent=80 // pred_fallthru
          _
      $region81: #{tpu_custom_call.1} parent=5 // pred_fallthru
        _
    $region6: #{tpu_custom_call.1} parent=1 // loop_footer
      %s13 = sadd.s32 1, %s9
    $region7: #{tpu_custom_call.1} parent=1 // loop_footer_branch
      %8 = sbr.rel target = $region3
    $region8: #{tpu_custom_call.1} parent=1 // loop_exit
      _

</llo_original>
